<compile_context>
chip_gen: v7x
topology: tpu7x:2x2x1
jax: 0.10.0
libtpu: 0.0.40
codegen_flags: <defaults>
</compile_context>

<pallas_src>
import functools

import jax
import jax.numpy as jnp
from jax.experimental import pallas as pl
from jax.experimental.pallas import tpu as pltpu

SMOOTH_ALPHA = 0.1
_PRED_VMEM_BUDGET_BYTES = 8 * 1024 * 1024  # budget for the logits double-buffer


def _round_up(x, m):
    return ((x + m - 1) // m) * m


def _ce_label_smooth_kernel(pred_ref, tgt_ref, out_ref, acc_ref, *,
                            smooth_alpha, num_classes, num_rows, tm,
                            blocks_per_core):
    c = pl.program_id(0)          # parallel (core) axis
    i = pl.program_id(1)          # sequential row-tile axis

    @pl.when(i == 0)
    def _():
        acc_ref[...] = jnp.zeros_like(acc_ref)

    logits = pred_ref[...].astype(jnp.float32)            # (tm, C)
    tgt = tgt_ref[...]                                     # (tm, 1) int32

    # Single pass over the tile: shift once, reuse for the LSE, the one-hot
    # target select and the label-smoothing (sum over classes) term.  The row
    # max cancels exactly in the fused loss, so it never reappears.
    m = jnp.max(logits, axis=-1, keepdims=True)            # (tm, 1)
    shifted = logits - m                                    # (tm, C)
    log_se = jnp.log(jnp.sum(jnp.exp(shifted), axis=-1, keepdims=True))
    sum_shifted = jnp.sum(shifted, axis=-1, keepdims=True)  # (tm, 1)

    col = jax.lax.broadcasted_iota(jnp.int32, shifted.shape, 1)
    shifted_t = jnp.sum(jnp.where(col == tgt, shifted, 0.0),
                        axis=-1, keepdims=True)             # (tm, 1)

    contrib = (log_se
               - (1.0 - smooth_alpha) * shifted_t
               - (smooth_alpha / num_classes) * sum_shifted)  # (tm, 1)

    # Tail / overhang mask: rows past M (padded tile or clamped duplicate
    # block) contribute zero.
    row = jax.lax.broadcasted_iota(jnp.int32, (tm, 1), 0)
    global_row = (c * blocks_per_core + i) * tm + row
    contrib = jnp.where(global_row < num_rows, contrib, 0.0)

    # Per-row accumulator in VMEM scratch: cheap VPU add per step; the single
    # cross-lane reduction + output store happens once per core, on its last
    # tile.
    acc_ref[...] += contrib

    @pl.when(i == pl.num_programs(1) - 1)
    def _():
        total = jnp.sum(acc_ref[...])
        out_ref[...] = total + jnp.zeros_like(out_ref)


def ce_with_label_smooth(logits, target, *, smooth_alpha=SMOOTH_ALPHA,
                         tm=1024, num_cores=2):
    """logits: (M, C) float (any float dtype, no wrapper cast); target: (M,) ints."""
    M, C = logits.shape
    tgt2d = target.reshape(M, 1).astype(jnp.int32)

    # Tile sizing: as large as fits an ~8 MiB double-buffer budget for the
    # logits input (comfortable within default scoped VMEM on v5e/v6e/v7x),
    # never larger than the (8-aligned) row count.
    itemsize = jnp.dtype(logits.dtype).itemsize
    budget_tm = (_PRED_VMEM_BUDGET_BYTES // (2 * C * itemsize)) // 8 * 8
    tm = max(8, min(_round_up(tm, 8), max(budget_tm, 8), _round_up(M, 8)))

    total_blocks = pl.cdiv(M, tm)
    num_cores = max(1, min(num_cores, total_blocks))
    bpc = pl.cdiv(total_blocks, num_cores)     # row tiles per core
    last_block = total_blocks - 1

    def row_block(c, i):
        # Clamp so overhang tiles (when total_blocks % num_cores != 0) re-read
        # the last valid tile; their rows are masked out in-kernel.
        return (jnp.minimum(c * bpc + i, last_block), 0)

    kernel = functools.partial(
        _ce_label_smooth_kernel,
        smooth_alpha=float(smooth_alpha),
        num_classes=C, num_rows=M, tm=tm, blocks_per_core=bpc)

    partials = pl.pallas_call(
        kernel,
        out_shape=jax.ShapeDtypeStruct((num_cores, 8, 128), jnp.float32),
        grid_spec=pltpu.PrefetchScalarGridSpec(
            num_scalar_prefetch=0,
            grid=(num_cores, bpc),
            in_specs=[
                pl.BlockSpec((tm, C), row_block),
                pl.BlockSpec((tm, 1), row_block),
            ],
            out_specs=pl.BlockSpec((1, 8, 128), lambda c, i: (c, 0, 0)),
            scratch_shapes=[pltpu.VMEM((tm, 1), jnp.float32)],
        ),
        compiler_params=pltpu.CompilerParams(
            dimension_semantics=("parallel", "arbitrary")),
    )(logits, tgt2d)

    # Per-core partial sums -> scalar mean (plain-JAX glue).
    loss_sum = jnp.sum(partials[:, 0, 0])
    return loss_sum / jnp.float32(M)


def _reference(logits, target, smooth_alpha=SMOOTH_ALPHA):
    """Pure-JAX mirror of the PyTorch CEWithLabelSmooth.forward."""
    logits = logits.astype(jnp.float32)
    n = logits.shape[-1]
    log_pred = jax.nn.log_softmax(logits, axis=-1)
    loss = -jnp.mean(jnp.sum(log_pred, axis=-1))
    nll = jnp.mean(-jnp.take_along_axis(
        log_pred, target[:, None].astype(jnp.int32), axis=-1)[:, 0])
    return smooth_alpha * (loss / n) + (1.0 - smooth_alpha) * nll


if __name__ == "__main__":
    key = jax.random.PRNGKey(0)
    k1, k2 = jax.random.split(key)

    # Ragged row count exercises the in-kernel tail masking, the clamped
    # overhang block and both grid "cores"; C=128 keeps the lane dim dense.
    M, C = 2500, 128
    logits = jax.random.normal(k1, (M, C), dtype=jnp.float32)
    target = jax.random.randint(k2, (M,), 0, C, dtype=jnp.int32)

    out = jax.block_until_ready(ce_with_label_smooth(logits, target))
    ref = jax.block_until_ready(_reference(logits, target))

    assert jnp.allclose(out, ref, rtol=1e-4, atol=1e-4), (out, ref)
    print("KERNEL_OK")
</pallas_src>

<mosaic_0001>
module attributes {stable_mosaic.version = 11 : i64} {
  func.func @_ce_label_smooth_kernel(%arg0: i32, %arg1: i32, %arg2: memref<1024x128xf32, #tpu.memory_space<vmem>>, %arg3: memref<1024x1xi32, #tpu.memory_space<vmem>>, %arg4: memref<1x8x128xf32, #tpu.memory_space<vmem>>, %arg5: memref<1024x1xf32, #tpu.memory_space<vmem>>) attributes {dimension_semantics = [#tpu.dimension_semantics<parallel>, #tpu.dimension_semantics<arbitrary>], iteration_bounds = array<i64: 2, 2>, scalar_prefetch = 0 : i64, scratch_operands = 1 : i64, tpu.core_type = #tpu.core_type<tc>, window_params = [{transform_indices = @transform_0, window_bounds = array<i64: 1024, 128>}, {transform_indices = @transform_1, window_bounds = array<i64: 1024, 1>}, {transform_indices = @transform_2, window_bounds = array<i64: 1, 8, 128>}]} {
    %c0_i32 = arith.constant 0 : i32
    %0 = arith.cmpi eq, %arg1, %c0_i32 : i32
    %1 = arith.extui %0 : i1 to i32
    %c0_i32_0 = arith.constant 0 : i32
    %2 = arith.cmpi ne, %1, %c0_i32_0 : i32
    scf.if %2 {
      %cst_16 = arith.constant 0.000000e+00 : f32
      %44 = vector.broadcast %cst_16 : f32 to vector<1024x1xf32>
      %c0_17 = arith.constant 0 : index
      %c0_18 = arith.constant 0 : index
      %45 = vector.load %arg5[%c0_17, %c0_18] : memref<1024x1xf32, #tpu.memory_space<vmem>>, vector<1024x1xf32>
      tpu.vector_store %arg5[%c0_17, %c0_18], %44 {strides = array<i32>} : memref<1024x1xf32, #tpu.memory_space<vmem>>, vector<1024x1xf32>,
    } else {
    }
    %c0 = arith.constant 0 : index
    %c0_1 = arith.constant 0 : index
    %3 = vector.load %arg2[%c0, %c0_1] : memref<1024x128xf32, #tpu.memory_space<vmem>>, vector<1024x128xf32>
    %c0_2 = arith.constant 0 : index
    %c0_3 = arith.constant 0 : index
    %4 = vector.load %arg3[%c0_2, %c0_3] : memref<1024x1xi32, #tpu.memory_space<vmem>>, vector<1024x1xi32>
    %cst = arith.constant dense<0xFF800000> : vector<1024xf32>
    %5 = vector.multi_reduction <maximumf>, %3, %cst [1] : vector<1024x128xf32> to vector<1024xf32>
    %6 = vector.shape_cast %5 : vector<1024xf32> to vector<1024x1xf32>
    %7 = vector.broadcast %6 : vector<1024x1xf32> to vector<1024x128xf32>
    %8 = arith.subf %3, %7 : vector<1024x128xf32>
    %9 = math.exp %8 : vector<1024x128xf32>
    %cst_4 = arith.constant dense<0.000000e+00> : vector<1024xf32>
    %10 = vector.multi_reduction <add>, %9, %cst_4 [1] : vector<1024x128xf32> to vector<1024xf32>
    %11 = vector.shape_cast %10 : vector<1024xf32> to vector<1024x1xf32>
    %12 = math.log %11 : vector<1024x1xf32>
    %cst_5 = arith.constant dense<0.000000e+00> : vector<1024xf32>
    %13 = vector.multi_reduction <add>, %8, %cst_5 [1] : vector<1024x128xf32> to vector<1024xf32>
    %14 = vector.shape_cast %13 : vector<1024xf32> to vector<1024x1xf32>
    %15 = tpu.iota {dimensions = array<i32: 1>} : vector<1024x128xi32>
    %16 = vector.broadcast %4 : vector<1024x1xi32> to vector<1024x128xi32>
    %17 = arith.cmpi eq, %15, %16 : vector<1024x128xi32>
    %cst_6 = arith.constant 0.000000e+00 : f32
    %18 = vector.broadcast %cst_6 : f32 to vector<1024x128xf32>
    %19 = arith.select %17, %8, %18 : vector<1024x128xi1>, vector<1024x128xf32>
    %cst_7 = arith.constant dense<0.000000e+00> : vector<1024xf32>
    %20 = vector.multi_reduction <add>, %19, %cst_7 [1] : vector<1024x128xf32> to vector<1024xf32>
    %21 = vector.shape_cast %20 : vector<1024xf32> to vector<1024x1xf32>
    %cst_8 = arith.constant 0.899999976 : f32
    %22 = vector.broadcast %cst_8 : f32 to vector<1024x1xf32>
    %23 = arith.mulf %22, %21 : vector<1024x1xf32>
    %24 = arith.subf %12, %23 : vector<1024x1xf32>
    %cst_9 = arith.constant 7.812500e-04 : f32
    %25 = vector.broadcast %cst_9 : f32 to vector<1024x1xf32>
    %26 = arith.mulf %25, %14 : vector<1024x1xf32>
    %27 = arith.subf %24, %26 : vector<1024x1xf32>
    %28 = tpu.iota {dimensions = array<i32: 0>} : vector<1024x1xi32>
    %c2_i32 = arith.constant 2 : i32
    %29 = arith.muli %arg0, %c2_i32 : i32
    %30 = arith.addi %29, %arg1 : i32
    %c1024_i32 = arith.constant 1024 : i32
    %31 = arith.muli %30, %c1024_i32 : i32
    %32 = vector.broadcast %31 : i32 to vector<1024x1xi32>
    %33 = arith.addi %32, %28 : vector<1024x1xi32>
    %c2500_i32 = arith.constant 2500 : i32
    %34 = vector.broadcast %c2500_i32 : i32 to vector<1024x1xi32>
    %35 = arith.cmpi slt, %33, %34 : vector<1024x1xi32>
    %cst_10 = arith.constant 0.000000e+00 : f32
    %36 = vector.broadcast %cst_10 : f32 to vector<1024x1xf32>
    %37 = arith.select %35, %27, %36 : vector<1024x1xi1>, vector<1024x1xf32>
    %c0_11 = arith.constant 0 : index
    %c0_12 = arith.constant 0 : index
    %38 = vector.load %arg5[%c0_11, %c0_12] : memref<1024x1xf32, #tpu.memory_space<vmem>>, vector<1024x1xf32>
    %39 = arith.addf %38, %37 : vector<1024x1xf32>
    %c0_13 = arith.constant 0 : index
    %c0_14 = arith.constant 0 : index
    %40 = vector.load %arg5[%c0_13, %c0_14] : memref<1024x1xf32, #tpu.memory_space<vmem>>, vector<1024x1xf32>
    tpu.vector_store %arg5[%c0_13, %c0_14], %39 {strides = array<i32>} : memref<1024x1xf32, #tpu.memory_space<vmem>>, vector<1024x1xf32>,
    %c1_i32 = arith.constant 1 : i32
    %41 = arith.cmpi eq, %arg1, %c1_i32 : i32
    %42 = arith.extui %41 : i1 to i32
    %c0_i32_15 = arith.constant 0 : i32
    %43 = arith.cmpi ne, %42, %c0_i32_15 : i32
    scf.if %43 {
      %c0_16 = arith.constant 0 : index
      %c0_17 = arith.constant 0 : index
      %44 = vector.load %arg5[%c0_16, %c0_17] : memref<1024x1xf32, #tpu.memory_space<vmem>>, vector<1024x1xf32>
      %45 = vector.shape_cast %44 : vector<1024x1xf32> to vector<1x1024x1xf32>
      %cst_18 = arith.constant dense<0.000000e+00> : vector<1xf32>
      %46 = vector.multi_reduction <add>, %45, %cst_18 [1, 2] : vector<1x1024x1xf32> to vector<1xf32>
      %47 = vector.shape_cast %46 : vector<1xf32> to vector<1x1x1xf32>
      %48 = vector.extract %47[0, 0, 0] : f32 from vector<1x1x1xf32>
      %cst_19 = arith.constant 0.000000e+00 : f32
      %49 = vector.broadcast %cst_19 : f32 to vector<1x8x128xf32>
      %50 = vector.broadcast %48 : f32 to vector<1x8x128xf32>
      %51 = arith.addf %50, %49 : vector<1x8x128xf32>
      %c0_20 = arith.constant 0 : index
      %c0_21 = arith.constant 0 : index
      %c0_22 = arith.constant 0 : index
      %52 = vector.load %arg4[%c0_20, %c0_21, %c0_22] : memref<1x8x128xf32, #tpu.memory_space<vmem>>, vector<1x8x128xf32>
      tpu.vector_store %arg4[%c0_20, %c0_21, %c0_22], %51 {strides = array<i32>} : memref<1x8x128xf32, #tpu.memory_space<vmem>>, vector<1x8x128xf32>,
    } else {
    }
    return
  }
  func.func @transform_0(%arg0: i32, %arg1: i32) -> (i32, i32) {
    %c2_i32 = arith.constant 2 : i32
    %0 = arith.muli %arg0, %c2_i32 : i32
    %1 = arith.addi %0, %arg1 : i32
    %c2_i32_0 = arith.constant 2 : i32
    %2 = arith.minsi %1, %c2_i32_0 : i32
    %c0_i32 = arith.constant 0 : i32
    %c0_i32_1 = arith.constant 0 : i32
    return %2, %c0_i32 : i32, i32
  }
  func.func @transform_1(%arg0: i32, %arg1: i32) -> (i32, i32) {
    %c2_i32 = arith.constant 2 : i32
    %0 = arith.muli %arg0, %c2_i32 : i32
    %1 = arith.addi %0, %arg1 : i32
    %c2_i32_0 = arith.constant 2 : i32
    %2 = arith.minsi %1, %c2_i32_0 : i32
    %c0_i32 = arith.constant 0 : i32
    %c0_i32_1 = arith.constant 0 : i32
    return %2, %c0_i32 : i32, i32
  }
  func.func @transform_2(%arg0: i32, %arg1: i32) -> (i32, i32, i32) {
    %c0_i32 = arith.constant 0 : i32
    %c0_i32_0 = arith.constant 0 : i32
    %c0_i32_1 = arith.constant 0 : i32
    return %arg0, %c0_i32, %c0_i32_0 : i32, i32, i32
  }
}

</mosaic_0001>

<llo_original>
// kernel: tpu_custom_call.1
$region0: #{tpu_custom_call.1}
  #allocation0 [shape = 'u32[]', space=smem, size = 0x4, offset = 0x4, fixed_abs, tag = 'smem constant byte address 0x4 - core index']
  #allocation1 [shape = 'u32[144,128]{1,0:T(1,128)}', space=vmem, size = 0x12000, scoped, tag = 'internal scratch']
  #allocation2 [shape = 'f32[1024,1]{1,0:T(8,128)}', space=vmem, size = 0x80000, scoped, tag = 'scratch operand']
  %s0 = inlined_call_operand.vmem [shape: f32[2500,128], index: 0, kind: input, shape index: {}]
  %s1 = inlined_call_operand.vmem [shape: s32[2500,1], index: 1, kind: input, shape index: {}]
  %s2 = inlined_call_operand.hbm [shape: f32[2,8,128], index: 2, kind: output, shape index: {}]
  %s3 = sld [smem:[#allocation0]]
  $region49: #{tpu_custom_call.1} parent=0
    _
  %s5 = ssub.s32 1, %s3
  %s6 = scalar_select 0, %s5, %s3
  $region1: #{tpu_custom_call.1} parent=0
    #allocation3 [shape = 'u8[8192]{0}', space=vmem, size = 0x2000, scoped, tag = 'output window, operand 0']
    #allocation4 [shape = 's32[2]{0}', space=sflag, size = 0x8, scoped, tag = 'scoped memory for tpu_custom_call.1']
    %7 = vsyncpa [#allocation4], 0
    %s8 = scalar_lea.sflag [#allocation4], 1
    %9 = vsyncpa %s8, 0
    loop: start=0, step=1, limit=6
    $region2: #{tpu_custom_call.1} parent=1 // loop_pre_header
      _
    $region3: #{tpu_custom_call.1} parent=1 // loop_header
      %s11 = sphi 0, %s15
      %p12 = scmp.ge.s32.totalorder %s11, 6
      %s18 = sphi 0, %s30
      %s19 = sphi 0, %s26
      %s20 = sphi 0, %s18
      %s21 = sphi 0, %s19
      %s22 = sphi 0, %s20
      %s23 = sphi 0, %s21
      %s41 = sphi 0, %s43
      %s44 = sphi 0, %s41
      %s45 = sphi 0, %s44
      %s61 = sphi 0, %s45
      %s75 = sphi 0, %s77
      %s78 = sphi 0, %s75
      %s79 = sphi 0, %s78
      %s95 = sphi 0, %s79
      %s101 = sphi 0, %s103
      %s104 = sphi 0, %s101
      %s105 = sphi 0, %s104
      %s121 = sphi 0, %s105
    $region4: #{tpu_custom_call.1} parent=1 // loop_header_branch
      %14 = sbr.rel (%p12) target = $region8
    $region5: #{tpu_custom_call.1} parent=1 // loop_body
      %s16 = ssub.s32 %s11, 1
      %s17 = ssub.s32 %s11, 2
      %s24 = sadd.s32 1, %s19
      %p25 = scmp.ge.s32.totalorder %s24, 2
      %s26 = scalar_select %p25, 0, %s24
      %s27 = sadd.s32 1, %s18
      %s28 = scalar_select %p25, %s27, %s18
      %p29 = scmp.ge.s32.totalorder %s28, 2
      %s30 = scalar_select %p29, 0, %s28
      %s31 = smul.u32 %s18, 2
      %s32 = sadd.s32 %s31, %s19
      %p33 = scmp.lt.s32.totalorder %s32, 2
      %s34 = scalar_select %p33, %s32, 2
      %s35 = smul.u32 %s30, 2
      %s36 = sadd.s32 %s35, %s26
      %p37 = scmp.lt.s32.totalorder %s36, 2
      %s38 = scalar_select %p37, %s36, 2
      %s39 = ssub.s32 %s34, %s38
      %p40 = scmp.eq.s32.totalorder %s39, 0
      %s42 = sadd.s32 %s41, 1
      %s43 = scalar_select %p40, %s41, %s42
      %p46 = pneg %p40
      %p47 = scmp.eq.s32.totalorder %s11, 3
      %p48 = por %p46, %p47
      %p49 = scmp.ne.s32.totalorder %s41, %s44
      %p50 = scmp.eq.s32.totalorder %s11, 0
      %p51 = por %p49, %p50
      %p52 = scmp.ne.s32.totalorder %s41, %s44
      %p53 = scmp.eq.s32.totalorder %s16, 3
      %p54 = por %p52, %p53
      %p55 = scmp.ne.s32.totalorder %s44, %s45
      %p56 = scmp.eq.s32.totalorder %s16, 0
      %p57 = por %p55, %p56
      %p58 = scmp.ne.s32.totalorder %s44, %s45
      %p59 = scmp.eq.s32.totalorder %s17, 3
      %p60 = por %p58, %p59
      %p62 = scmp.ne.s32.totalorder %s45, %s61
      %p63 = scmp.eq.s32.totalorder %s17, 0
      %p64 = por %p62, %p63
      %s65 = smul.u32 %s18, 2
      %s66 = sadd.s32 %s65, %s19
      %p67 = scmp.lt.s32.totalorder %s66, 2
      %s68 = scalar_select %p67, %s66, 2
      %s69 = smul.u32 %s30, 2
      %s70 = sadd.s32 %s69, %s26
      %p71 = scmp.lt.s32.totalorder %s70, 2
      %s72 = scalar_select %p71, %s70, 2
      %s73 = ssub.s32 %s68, %s72
      %p74 = scmp.eq.s32.totalorder %s73, 0
      %s76 = sadd.s32 %s75, 1
      %s77 = scalar_select %p74, %s75, %s76
      %p80 = pneg %p74
      %p81 = scmp.eq.s32.totalorder %s11, 3
      %p82 = por %p80, %p81
      %p83 = scmp.ne.s32.totalorder %s75, %s78
      %p84 = scmp.eq.s32.totalorder %s11, 0
      %p85 = por %p83, %p84
      %p86 = scmp.ne.s32.totalorder %s75, %s78
      %p87 = scmp.eq.s32.totalorder %s16, 3
      %p88 = por %p86, %p87
      %p89 = scmp.ne.s32.totalorder %s78, %s79
      %p90 = scmp.eq.s32.totalorder %s16, 0
      %p91 = por %p89, %p90
      %p92 = scmp.ne.s32.totalorder %s78, %s79
      %p93 = scmp.eq.s32.totalorder %s17, 3
      %p94 = por %p92, %p93
      %p96 = scmp.ne.s32.totalorder %s79, %s95
      %p97 = scmp.eq.s32.totalorder %s17, 0
      %p98 = por %p96, %p97
      %s99 = ssub.s32 %s18, %s30
      %p100 = scmp.eq.s32.totalorder %s99, 0
      %s102 = sadd.s32 %s101, 1
      %s103 = scalar_select %p100, %s101, %s102
      %p106 = pneg %p100
      %p107 = scmp.eq.s32.totalorder %s11, 3
      %p108 = por %p106, %p107
      %p109 = scmp.ne.s32.totalorder %s101, %s104
      %p110 = scmp.eq.s32.totalorder %s11, 0
      %p111 = por %p109, %p110
      %p112 = scmp.ne.s32.totalorder %s101, %s104
      %p113 = scmp.eq.s32.totalorder %s16, 3
      %p114 = por %p112, %p113
      %p115 = scmp.ne.s32.totalorder %s104, %s105
      %p116 = scmp.eq.s32.totalorder %s16, 0
      %p117 = por %p115, %p116
      %p118 = scmp.ne.s32.totalorder %s104, %s105
      %p119 = scmp.eq.s32.totalorder %s17, 3
      %p120 = por %p118, %p119
      %p122 = scmp.ne.s32.totalorder %s105, %s121
      %p123 = scmp.eq.s32.totalorder %s17, 0
      %p124 = por %p122, %p123
      %p125 = scmp.le.s32.totalorder 1, %s11
      %p126 = scmp.lt.s32.totalorder %s11, 5
      %p127 = pnand %p125, %p126
      %p128 = pneg %p127
      // Predicated region
      $region9: #{tpu_custom_call.1} parent=5 // pred_check
        _
      $region10: #{tpu_custom_call.1} parent=5 // pred_check_branch
        %130 = sbr.rel (%p127) target = $region12
      $region11: #{tpu_custom_call.1} parent=5 // pred_region
        %s131 = ssub.s32 %s11, 1
      $region12: #{tpu_custom_call.1} parent=5 // pred_fallthru
        _
      %p132 = scmp.lt.s32.totalorder %s11, 4
      // Predicated region
      $region13: #{tpu_custom_call.1} parent=5 // pred_check
        %p133 = pneg %p132
      $region14: #{tpu_custom_call.1} parent=5 // pred_check_branch
        %135 = sbr.rel (%p133) target = $region16
      $region15: #{tpu_custom_call.1} parent=5 // pred_region
        // Predicated region
        $region17: #{tpu_custom_call.1} parent=15 // pred_check
          %p136 = pneg %p51
        $region18: #{tpu_custom_call.1} parent=15 // pred_check_branch
          %138 = sbr.rel (%p136) target = $region20
        $region19: #{tpu_custom_call.1} parent=15 // pred_region
          %s139 = smul.u32 %s18, 2
          %s140 = sadd.s32 %s139, %s19
          %p141 = scmp.lt.s32.totalorder %s140, 2
          %s142 = scalar_select %p141, %s140, 2
          %s143 = smul.u32 128, %s142
          %s144 = ssub.s32 313, %s143
          %p145 = scmp.lt.s32.totalorder %s144, 128
          %s146 = scalar_select %p145, %s144, 128
          %s147 = smul.u32 128, %s146
          %p148 = scmp.lt.s32.totalorder %s143, 312
          %s149 = scalar_select %p148, %s143, 312
          %s150 = smul.addr %s149, 8
          %s151 = scalar_lea.vmem %s0, %s150
          %s152 = smul.u32 %s18, 2
          %s153 = sadd.s32 %s152, %s19
          %p154 = scmp.lt.s32.totalorder %s153, 2
          %s155 = scalar_select %p154, %s153, 2
          %s156 = smul.u32 128, %s155
          %s157 = ssub.s32 313, %s156
          %p158 = scmp.lt.s32.totalorder %s157, 128
          %s159 = scalar_select %p158, %s157, 128
          %s160 = smul.u32 128, %s159
        $region20: #{tpu_custom_call.1} parent=15 // pred_fallthru
          _
        // Predicated region
        $region21: #{tpu_custom_call.1} parent=15 // pred_check
          %p161 = pneg %p85
        $region22: #{tpu_custom_call.1} parent=15 // pred_check_branch
          %163 = sbr.rel (%p161) target = $region24
        $region23: #{tpu_custom_call.1} parent=15 // pred_region
          %s164 = smul.u32 %s18, 2
          %s165 = sadd.s32 %s164, %s19
          %p166 = scmp.lt.s32.totalorder %s165, 2
          %s167 = scalar_select %p166, %s165, 2
          %s168 = smul.u32 128, %s167
          %s169 = ssub.s32 313, %s168
          %p170 = scmp.lt.s32.totalorder %s169, 128
          %s171 = scalar_select %p170, %s169, 128
          %s172 = smul.u32 128, %s171
          %p173 = scmp.lt.s32.totalorder %s168, 312
          %s174 = scalar_select %p173, %s168, 312
          %s175 = smul.addr %s174, 8
          %s176 = scalar_lea.vmem %s1, %s175
          %s177 = smul.u32 %s18, 2
          %s178 = sadd.s32 %s177, %s19
          %p179 = scmp.lt.s32.totalorder %s178, 2
          %s180 = scalar_select %p179, %s178, 2
          %s181 = smul.u32 128, %s180
          %s182 = ssub.s32 313, %s181
          %p183 = scmp.lt.s32.totalorder %s182, 128
          %s184 = scalar_select %p183, %s182, 128
          %s185 = smul.u32 128, %s184
        $region24: #{tpu_custom_call.1} parent=15 // pred_fallthru
          _
      $region16: #{tpu_custom_call.1} parent=5 // pred_fallthru
        _
      %p186 = scmp.le.s32.totalorder 1, %s11
      %p187 = scmp.lt.s32.totalorder %s11, 5
      %p188 = pnand %p186, %p187
      %p189 = pneg %p188
      // Predicated region
      $region25: #{tpu_custom_call.1} parent=5 // pred_check
        _
      $region26: #{tpu_custom_call.1} parent=5 // pred_check_branch
        %191 = sbr.rel (%p188) target = $region28
      $region27: #{tpu_custom_call.1} parent=5 // pred_region
        %s192 = ssub.s32 %s11, 1
        %s193 = smul.u32 %s20, 2
        %s194 = sadd.s32 %s193, %s21
        %p195 = scmp.lt.s32.totalorder %s194, 2
        %s196 = scalar_select %p195, %s194, 2
        %s197 = smul.u32 128, %s196
        %s198 = ssub.s32 313, %s197
        %p199 = scmp.lt.s32.totalorder %s198, 128
        %s200 = scalar_select %p199, %s198, 128
        %s201 = smul.u32 128, %s200
        %p202 = scmp.lt.s32.totalorder %s197, 312
        %s203 = scalar_select %p202, %s197, 312
        %s204 = smul.addr %s203, 8
        %s205 = scalar_lea.vmem %s0, %s204
        %p206 = pneg %p57
        %p207 = pneg %p54
        %s208 = smul.u32 %s20, 2
        %s209 = sadd.s32 %s208, %s21
        %p210 = scmp.lt.s32.totalorder %s209, 2
        %s211 = scalar_select %p210, %s209, 2
        %s212 = smul.u32 128, %s211
        %s213 = ssub.s32 313, %s212
        %p214 = scmp.lt.s32.totalorder %s213, 128
        %s215 = scalar_select %p214, %s213, 128
        %s216 = smul.u32 128, %s215
        %p217 = scmp.lt.s32.totalorder %s212, 312
        %s218 = scalar_select %p217, %s212, 312
        %s219 = smul.addr %s218, 8
        %s220 = scalar_lea.vmem %s1, %s219
        %p221 = pneg %p91
        %p222 = pneg %p88
        %p223 = pneg %p117
        %p224 = pneg %p114
        %s225 = sand.u32 %s104, 1
        %s226 = scalar_lea.sflag [#allocation4], %s225
        %s227 = sand.u32 %s104, 1
        %s228 = smul.addr %s227, 8
        %s229 = scalar_lea.vmem [#allocation3], %s228
        %s230 = smul.u32 %s20, 2
        %s231 = sadd.s32 %s230, %s21
        %p232 = scmp.lt.s32.totalorder %s231, 2
        %s233 = scalar_select %p232, %s231, 2
        %s234 = smul.u32 128, %s233
        %s235 = ssub.s32 313, %s234
        %p236 = scmp.lt.s32.totalorder %s235, 128
        %s237 = scalar_select %p236, %s235, 128
        %s238 = smul.u32 128, %s237
        %p239 = scmp.lt.s32.totalorder %s234, 312
        %s240 = scalar_select %p239, %s234, 312
        %s241 = smul.addr %s240, 8
        %s242 = scalar_lea.vmem %s0, %s241
        %s243 = smul.u32 %s20, 2
        %s244 = sadd.s32 %s243, %s21
        %p245 = scmp.lt.s32.totalorder %s244, 2
        %s246 = scalar_select %p245, %s244, 2
        %s247 = smul.u32 128, %s246
        %s248 = ssub.s32 313, %s247
        %p249 = scmp.lt.s32.totalorder %s248, 128
        %s250 = scalar_select %p249, %s248, 128
        %s251 = smul.u32 128, %s250
        %s252 = smul.u32 %s20, 2
        %s253 = sadd.s32 %s252, %s21
        %p254 = scmp.lt.s32.totalorder %s253, 2
        %s255 = scalar_select %p254, %s253, 2
        %s256 = smul.u32 128, %s255
        %s257 = ssub.s32 313, %s256
        %p258 = scmp.lt.s32.totalorder %s257, 128
        %s259 = scalar_select %p258, %s257, 128
        %s260 = smul.u32 128, %s259
        %p261 = scmp.lt.s32.totalorder %s256, 312
        %s262 = scalar_select %p261, %s256, 312
        %s263 = smul.addr %s262, 8
        %s264 = scalar_lea.vmem %s1, %s263
        %s265 = smul.u32 %s20, 2
        %s266 = sadd.s32 %s265, %s21
        %p267 = scmp.lt.s32.totalorder %s266, 2
        %s268 = scalar_select %p267, %s266, 2
        %s269 = smul.u32 128, %s268
        %s270 = ssub.s32 313, %s269
        %p271 = scmp.lt.s32.totalorder %s270, 128
        %s272 = scalar_select %p271, %s270, 128
        %s273 = smul.u32 128, %s272
        %p274 = scmp.eq.s32.totalorder %s21, 0
        // Predicated region
        $region29: #{tpu_custom_call.1} parent=27 // pred_check
          %p275 = pneg %p274
        $region30: #{tpu_custom_call.1} parent=27 // pred_check_branch
          %277 = sbr.rel (%p275) target = $region32
        $region31: #{tpu_custom_call.1} parent=27 // pred_region
          %vm278 = vcmask 7168
          %279 = vst.msk [vmem:[#allocation2] sm:$0xff] %vm278, 0.0
          %280 = vst.msk [vmem:[#allocation2 + $0x8] sm:$0xff] %vm278, 0.0
          %281 = vst.msk [vmem:[#allocation2 + $0x10] sm:$0xff] %vm278, 0.0
          %282 = vst.msk [vmem:[#allocation2 + $0x18] sm:$0xff] %vm278, 0.0
          %283 = vst.msk [vmem:[#allocation2 + $0x20] sm:$0xff] %vm278, 0.0
          %284 = vst.msk [vmem:[#allocation2 + $0x28] sm:$0xff] %vm278, 0.0
          %285 = vst.msk [vmem:[#allocation2 + $0x30] sm:$0xff] %vm278, 0.0
          %286 = vst.msk [vmem:[#allocation2 + $0x38] sm:$0xff] %vm278, 0.0
          %287 = vst.msk [vmem:[#allocation2 + $0x40] sm:$0xff] %vm278, 0.0
          %288 = vst.msk [vmem:[#allocation2 + $0x48] sm:$0xff] %vm278, 0.0
          %289 = vst.msk [vmem:[#allocation2 + $0x50] sm:$0xff] %vm278, 0.0
          %290 = vst.msk [vmem:[#allocation2 + $0x58] sm:$0xff] %vm278, 0.0
          %291 = vst.msk [vmem:[#allocation2 + $0x60] sm:$0xff] %vm278, 0.0
          %292 = vst.msk [vmem:[#allocation2 + $0x68] sm:$0xff] %vm278, 0.0
          %293 = vst.msk [vmem:[#allocation2 + $0x70] sm:$0xff] %vm278, 0.0
          %294 = vst.msk [vmem:[#allocation2 + $0x78] sm:$0xff] %vm278, 0.0
          %295 = vst.msk [vmem:[#allocation2 + $0x80] sm:$0xff] %vm278, 0.0
          %296 = vst.msk [vmem:[#allocation2 + $0x88] sm:$0xff] %vm278, 0.0
          %297 = vst.msk [vmem:[#allocation2 + $0x90] sm:$0xff] %vm278, 0.0
          %298 = vst.msk [vmem:[#allocation2 + $0x98] sm:$0xff] %vm278, 0.0
          %299 = vst.msk [vmem:[#allocation2 + $0xa0] sm:$0xff] %vm278, 0.0
          %300 = vst.msk [vmem:[#allocation2 + $0xa8] sm:$0xff] %vm278, 0.0
          %301 = vst.msk [vmem:[#allocation2 + $0xb0] sm:$0xff] %vm278, 0.0
          %302 = vst.msk [vmem:[#allocation2 + $0xb8] sm:$0xff] %vm278, 0.0
          %303 = vst.msk [vmem:[#allocation2 + $0xc0] sm:$0xff] %vm278, 0.0
          %304 = vst.msk [vmem:[#allocation2 + $0xc8] sm:$0xff] %vm278, 0.0
          %305 = vst.msk [vmem:[#allocation2 + $0xd0] sm:$0xff] %vm278, 0.0
          %306 = vst.msk [vmem:[#allocation2 + $0xd8] sm:$0xff] %vm278, 0.0
          %307 = vst.msk [vmem:[#allocation2 + $0xe0] sm:$0xff] %vm278, 0.0
          %308 = vst.msk [vmem:[#allocation2 + $0xe8] sm:$0xff] %vm278, 0.0
          %309 = vst.msk [vmem:[#allocation2 + $0xf0] sm:$0xff] %vm278, 0.0
          %310 = vst.msk [vmem:[#allocation2 + $0xf8] sm:$0xff] %vm278, 0.0
          %311 = vst.msk [vmem:[#allocation2 + $0x100] sm:$0xff] %vm278, 0.0
          %312 = vst.msk [vmem:[#allocation2 + $0x108] sm:$0xff] %vm278, 0.0
          %313 = vst.msk [vmem:[#allocation2 + $0x110] sm:$0xff] %vm278, 0.0
          %314 = vst.msk [vmem:[#allocation2 + $0x118] sm:$0xff] %vm278, 0.0
          %315 = vst.msk [vmem:[#allocation2 + $0x120] sm:$0xff] %vm278, 0.0
          %316 = vst.msk [vmem:[#allocation2 + $0x128] sm:$0xff] %vm278, 0.0
          %317 = vst.msk [vmem:[#allocation2 + $0x130] sm:$0xff] %vm278, 0.0
          %318 = vst.msk [vmem:[#allocation2 + $0x138] sm:$0xff] %vm278, 0.0
          %319 = vst.msk [vmem:[#allocation2 + $0x140] sm:$0xff] %vm278, 0.0
          %320 = vst.msk [vmem:[#allocation2 + $0x148] sm:$0xff] %vm278, 0.0
          %321 = vst.msk [vmem:[#allocation2 + $0x150] sm:$0xff] %vm278, 0.0
          %322 = vst.msk [vmem:[#allocation2 + $0x158] sm:$0xff] %vm278, 0.0
          %323 = vst.msk [vmem:[#allocation2 + $0x160] sm:$0xff] %vm278, 0.0
          %324 = vst.msk [vmem:[#allocation2 + $0x168] sm:$0xff] %vm278, 0.0
          %325 = vst.msk [vmem:[#allocation2 + $0x170] sm:$0xff] %vm278, 0.0
          %326 = vst.msk [vmem:[#allocation2 + $0x178] sm:$0xff] %vm278, 0.0
          %327 = vst.msk [vmem:[#allocation2 + $0x180] sm:$0xff] %vm278, 0.0
          %328 = vst.msk [vmem:[#allocation2 + $0x188] sm:$0xff] %vm278, 0.0
          %329 = vst.msk [vmem:[#allocation2 + $0x190] sm:$0xff] %vm278, 0.0
          %330 = vst.msk [vmem:[#allocation2 + $0x198] sm:$0xff] %vm278, 0.0
          %331 = vst.msk [vmem:[#allocation2 + $0x1a0] sm:$0xff] %vm278, 0.0
          %332 = vst.msk [vmem:[#allocation2 + $0x1a8] sm:$0xff] %vm278, 0.0
          %333 = vst.msk [vmem:[#allocation2 + $0x1b0] sm:$0xff] %vm278, 0.0
          %334 = vst.msk [vmem:[#allocation2 + $0x1b8] sm:$0xff] %vm278, 0.0
          %335 = vst.msk [vmem:[#allocation2 + $0x1c0] sm:$0xff] %vm278, 0.0
          %336 = vst.msk [vmem:[#allocation2 + $0x1c8] sm:$0xff] %vm278, 0.0
          %337 = vst.msk [vmem:[#allocation2 + $0x1d0] sm:$0xff] %vm278, 0.0
          %338 = vst.msk [vmem:[#allocation2 + $0x1d8] sm:$0xff] %vm278, 0.0
          %339 = vst.msk [vmem:[#allocation2 + $0x1e0] sm:$0xff] %vm278, 0.0
          %340 = vst.msk [vmem:[#allocation2 + $0x1e8] sm:$0xff] %vm278, 0.0
          %341 = vst.msk [vmem:[#allocation2 + $0x1f0] sm:$0xff] %vm278, 0.0
          %342 = vst.msk [vmem:[#allocation2 + $0x1f8] sm:$0xff] %vm278, 0.0
          %343 = vst.msk [vmem:[#allocation2 + $0x200] sm:$0xff] %vm278, 0.0
          %344 = vst.msk [vmem:[#allocation2 + $0x208] sm:$0xff] %vm278, 0.0
          %345 = vst.msk [vmem:[#allocation2 + $0x210] sm:$0xff] %vm278, 0.0
          %346 = vst.msk [vmem:[#allocation2 + $0x218] sm:$0xff] %vm278, 0.0
          %347 = vst.msk [vmem:[#allocation2 + $0x220] sm:$0xff] %vm278, 0.0
          %348 = vst.msk [vmem:[#allocation2 + $0x228] sm:$0xff] %vm278, 0.0
          %349 = vst.msk [vmem:[#allocation2 + $0x230] sm:$0xff] %vm278, 0.0
          %350 = vst.msk [vmem:[#allocation2 + $0x238] sm:$0xff] %vm278, 0.0
          %351 = vst.msk [vmem:[#allocation2 + $0x240] sm:$0xff] %vm278, 0.0
          %352 = vst.msk [vmem:[#allocation2 + $0x248] sm:$0xff] %vm278, 0.0
          %353 = vst.msk [vmem:[#allocation2 + $0x250] sm:$0xff] %vm278, 0.0
          %354 = vst.msk [vmem:[#allocation2 + $0x258] sm:$0xff] %vm278, 0.0
          %355 = vst.msk [vmem:[#allocation2 + $0x260] sm:$0xff] %vm278, 0.0
          %356 = vst.msk [vmem:[#allocation2 + $0x268] sm:$0xff] %vm278, 0.0
          %357 = vst.msk [vmem:[#allocation2 + $0x270] sm:$0xff] %vm278, 0.0
          %358 = vst.msk [vmem:[#allocation2 + $0x278] sm:$0xff] %vm278, 0.0
          %359 = vst.msk [vmem:[#allocation2 + $0x280] sm:$0xff] %vm278, 0.0
          %360 = vst.msk [vmem:[#allocation2 + $0x288] sm:$0xff] %vm278, 0.0
          %361 = vst.msk [vmem:[#allocation2 + $0x290] sm:$0xff] %vm278, 0.0
          %362 = vst.msk [vmem:[#allocation2 + $0x298] sm:$0xff] %vm278, 0.0
          %363 = vst.msk [vmem:[#allocation2 + $0x2a0] sm:$0xff] %vm278, 0.0
          %364 = vst.msk [vmem:[#allocation2 + $0x2a8] sm:$0xff] %vm278, 0.0
          %365 = vst.msk [vmem:[#allocation2 + $0x2b0] sm:$0xff] %vm278, 0.0
          %366 = vst.msk [vmem:[#allocation2 + $0x2b8] sm:$0xff] %vm278, 0.0
          %367 = vst.msk [vmem:[#allocation2 + $0x2c0] sm:$0xff] %vm278, 0.0
          %368 = vst.msk [vmem:[#allocation2 + $0x2c8] sm:$0xff] %vm278, 0.0
          %369 = vst.msk [vmem:[#allocation2 + $0x2d0] sm:$0xff] %vm278, 0.0
          %370 = vst.msk [vmem:[#allocation2 + $0x2d8] sm:$0xff] %vm278, 0.0
          %371 = vst.msk [vmem:[#allocation2 + $0x2e0] sm:$0xff] %vm278, 0.0
          %372 = vst.msk [vmem:[#allocation2 + $0x2e8] sm:$0xff] %vm278, 0.0
          %373 = vst.msk [vmem:[#allocation2 + $0x2f0] sm:$0xff] %vm278, 0.0
          %374 = vst.msk [vmem:[#allocation2 + $0x2f8] sm:$0xff] %vm278, 0.0
          %375 = vst.msk [vmem:[#allocation2 + $0x300] sm:$0xff] %vm278, 0.0
          %376 = vst.msk [vmem:[#allocation2 + $0x308] sm:$0xff] %vm278, 0.0
          %377 = vst.msk [vmem:[#allocation2 + $0x310] sm:$0xff] %vm278, 0.0
          %378 = vst.msk [vmem:[#allocation2 + $0x318] sm:$0xff] %vm278, 0.0
          %379 = vst.msk [vmem:[#allocation2 + $0x320] sm:$0xff] %vm278, 0.0
          %380 = vst.msk [vmem:[#allocation2 + $0x328] sm:$0xff] %vm278, 0.0
          %381 = vst.msk [vmem:[#allocation2 + $0x330] sm:$0xff] %vm278, 0.0
          %382 = vst.msk [vmem:[#allocation2 + $0x338] sm:$0xff] %vm278, 0.0
          %383 = vst.msk [vmem:[#allocation2 + $0x340] sm:$0xff] %vm278, 0.0
          %384 = vst.msk [vmem:[#allocation2 + $0x348] sm:$0xff] %vm278, 0.0
          %385 = vst.msk [vmem:[#allocation2 + $0x350] sm:$0xff] %vm278, 0.0
          %386 = vst.msk [vmem:[#allocation2 + $0x358] sm:$0xff] %vm278, 0.0
          %387 = vst.msk [vmem:[#allocation2 + $0x360] sm:$0xff] %vm278, 0.0
          %388 = vst.msk [vmem:[#allocation2 + $0x368] sm:$0xff] %vm278, 0.0
          %389 = vst.msk [vmem:[#allocation2 + $0x370] sm:$0xff] %vm278, 0.0
          %390 = vst.msk [vmem:[#allocation2 + $0x378] sm:$0xff] %vm278, 0.0
          %391 = vst.msk [vmem:[#allocation2 + $0x380] sm:$0xff] %vm278, 0.0
          %392 = vst.msk [vmem:[#allocation2 + $0x388] sm:$0xff] %vm278, 0.0
          %393 = vst.msk [vmem:[#allocation2 + $0x390] sm:$0xff] %vm278, 0.0
          %394 = vst.msk [vmem:[#allocation2 + $0x398] sm:$0xff] %vm278, 0.0
          %395 = vst.msk [vmem:[#allocation2 + $0x3a0] sm:$0xff] %vm278, 0.0
          %396 = vst.msk [vmem:[#allocation2 + $0x3a8] sm:$0xff] %vm278, 0.0
          %397 = vst.msk [vmem:[#allocation2 + $0x3b0] sm:$0xff] %vm278, 0.0
          %398 = vst.msk [vmem:[#allocation2 + $0x3b8] sm:$0xff] %vm278, 0.0
          %399 = vst.msk [vmem:[#allocation2 + $0x3c0] sm:$0xff] %vm278, 0.0
          %400 = vst.msk [vmem:[#allocation2 + $0x3c8] sm:$0xff] %vm278, 0.0
          %401 = vst.msk [vmem:[#allocation2 + $0x3d0] sm:$0xff] %vm278, 0.0
          %402 = vst.msk [vmem:[#allocation2 + $0x3d8] sm:$0xff] %vm278, 0.0
          %403 = vst.msk [vmem:[#allocation2 + $0x3e0] sm:$0xff] %vm278, 0.0
          %404 = vst.msk [vmem:[#allocation2 + $0x3e8] sm:$0xff] %vm278, 0.0
          %405 = vst.msk [vmem:[#allocation2 + $0x3f0] sm:$0xff] %vm278, 0.0
          %406 = vst.msk [vmem:[#allocation2 + $0x3f8] sm:$0xff] %vm278, 0.0
        $region32: #{tpu_custom_call.1} parent=27 // pred_fallthru
          _
        %v407 = vld [vmem:[%s242] sm:$0xff]
        %v408 = vld [vmem:[%s242 + $0x8] sm:$0xff]
        %v409 = vld [vmem:[%s242 + $0x10] sm:$0xff]
        %v410 = vld [vmem:[%s242 + $0x18] sm:$0xff]
        %v411 = vld [vmem:[%s242 + $0x20] sm:$0xff]
        %v412 = vld [vmem:[%s242 + $0x28] sm:$0xff]
        %v413 = vld [vmem:[%s242 + $0x30] sm:$0xff]
        %v414 = vld [vmem:[%s242 + $0x38] sm:$0xff]
        %v415 = vld [vmem:[%s242 + $0x40] sm:$0xff]
        %v416 = vld [vmem:[%s242 + $0x48] sm:$0xff]
        %v417 = vld [vmem:[%s242 + $0x50] sm:$0xff]
        %v418 = vld [vmem:[%s242 + $0x58] sm:$0xff]
        %v419 = vld [vmem:[%s242 + $0x60] sm:$0xff]
        %v420 = vld [vmem:[%s242 + $0x68] sm:$0xff]
        %v421 = vld [vmem:[%s242 + $0x70] sm:$0xff]
        %v422 = vld [vmem:[%s242 + $0x78] sm:$0xff]
        %v423 = vld [vmem:[%s242 + $0x80] sm:$0xff]
        %v424 = vld [vmem:[%s242 + $0x88] sm:$0xff]
        %v425 = vld [vmem:[%s242 + $0x90] sm:$0xff]
        %v426 = vld [vmem:[%s242 + $0x98] sm:$0xff]
        %v427 = vld [vmem:[%s242 + $0xa0] sm:$0xff]
        %v428 = vld [vmem:[%s242 + $0xa8] sm:$0xff]
        %v429 = vld [vmem:[%s242 + $0xb0] sm:$0xff]
        %v430 = vld [vmem:[%s242 + $0xb8] sm:$0xff]
        %v431 = vld [vmem:[%s242 + $0xc0] sm:$0xff]
        %v432 = vld [vmem:[%s242 + $0xc8] sm:$0xff]
        %v433 = vld [vmem:[%s242 + $0xd0] sm:$0xff]
        %v434 = vld [vmem:[%s242 + $0xd8] sm:$0xff]
        %v435 = vld [vmem:[%s242 + $0xe0] sm:$0xff]
        %v436 = vld [vmem:[%s242 + $0xe8] sm:$0xff]
        %v437 = vld [vmem:[%s242 + $0xf0] sm:$0xff]
        %v438 = vld [vmem:[%s242 + $0xf8] sm:$0xff]
        %v439 = vld [vmem:[%s242 + $0x100] sm:$0xff]
        %v440 = vld [vmem:[%s242 + $0x108] sm:$0xff]
        %v441 = vld [vmem:[%s242 + $0x110] sm:$0xff]
        %v442 = vld [vmem:[%s242 + $0x118] sm:$0xff]
        %v443 = vld [vmem:[%s242 + $0x120] sm:$0xff]
        %v444 = vld [vmem:[%s242 + $0x128] sm:$0xff]
        %v445 = vld [vmem:[%s242 + $0x130] sm:$0xff]
        %v446 = vld [vmem:[%s242 + $0x138] sm:$0xff]
        %v447 = vld [vmem:[%s242 + $0x140] sm:$0xff]
        %v448 = vld [vmem:[%s242 + $0x148] sm:$0xff]
        %v449 = vld [vmem:[%s242 + $0x150] sm:$0xff]
        %v450 = vld [vmem:[%s242 + $0x158] sm:$0xff]
        %v451 = vld [vmem:[%s242 + $0x160] sm:$0xff]
        %v452 = vld [vmem:[%s242 + $0x168] sm:$0xff]
        %v453 = vld [vmem:[%s242 + $0x170] sm:$0xff]
        %v454 = vld [vmem:[%s242 + $0x178] sm:$0xff]
        %v455 = vld [vmem:[%s242 + $0x180] sm:$0xff]
        %v456 = vld [vmem:[%s242 + $0x188] sm:$0xff]
        %v457 = vld [vmem:[%s242 + $0x190] sm:$0xff]
        %v458 = vld [vmem:[%s242 + $0x198] sm:$0xff]
        %v459 = vld [vmem:[%s242 + $0x1a0] sm:$0xff]
        %v460 = vld [vmem:[%s242 + $0x1a8] sm:$0xff]
        %v461 = vld [vmem:[%s242 + $0x1b0] sm:$0xff]
        %v462 = vld [vmem:[%s242 + $0x1b8] sm:$0xff]
        %v463 = vld [vmem:[%s242 + $0x1c0] sm:$0xff]
        %v464 = vld [vmem:[%s242 + $0x1c8] sm:$0xff]
        %v465 = vld [vmem:[%s242 + $0x1d0] sm:$0xff]
        %v466 = vld [vmem:[%s242 + $0x1d8] sm:$0xff]
        %v467 = vld [vmem:[%s242 + $0x1e0] sm:$0xff]
        %v468 = vld [vmem:[%s242 + $0x1e8] sm:$0xff]
        %v469 = vld [vmem:[%s242 + $0x1f0] sm:$0xff]
        %v470 = vld [vmem:[%s242 + $0x1f8] sm:$0xff]
        %v471 = vld [vmem:[%s242 + $0x200] sm:$0xff]
        %v472 = vld [vmem:[%s242 + $0x208] sm:$0xff]
        %v473 = vld [vmem:[%s242 + $0x210] sm:$0xff]
        %v474 = vld [vmem:[%s242 + $0x218] sm:$0xff]
        %v475 = vld [vmem:[%s242 + $0x220] sm:$0xff]
        %v476 = vld [vmem:[%s242 + $0x228] sm:$0xff]
        %v477 = vld [vmem:[%s242 + $0x230] sm:$0xff]
        %v478 = vld [vmem:[%s242 + $0x238] sm:$0xff]
        %v479 = vld [vmem:[%s242 + $0x240] sm:$0xff]
        %v480 = vld [vmem:[%s242 + $0x248] sm:$0xff]
        %v481 = vld [vmem:[%s242 + $0x250] sm:$0xff]
        %v482 = vld [vmem:[%s242 + $0x258] sm:$0xff]
        %v483 = vld [vmem:[%s242 + $0x260] sm:$0xff]
        %v484 = vld [vmem:[%s242 + $0x268] sm:$0xff]
        %v485 = vld [vmem:[%s242 + $0x270] sm:$0xff]
        %v486 = vld [vmem:[%s242 + $0x278] sm:$0xff]
        %v487 = vld [vmem:[%s242 + $0x280] sm:$0xff]
        %v488 = vld [vmem:[%s242 + $0x288] sm:$0xff]
        %v489 = vld [vmem:[%s242 + $0x290] sm:$0xff]
        %v490 = vld [vmem:[%s242 + $0x298] sm:$0xff]
        %v491 = vld [vmem:[%s242 + $0x2a0] sm:$0xff]
        %v492 = vld [vmem:[%s242 + $0x2a8] sm:$0xff]
        %v493 = vld [vmem:[%s242 + $0x2b0] sm:$0xff]
        %v494 = vld [vmem:[%s242 + $0x2b8] sm:$0xff]
        %v495 = vld [vmem:[%s242 + $0x2c0] sm:$0xff]
        %v496 = vld [vmem:[%s242 + $0x2c8] sm:$0xff]
        %v497 = vld [vmem:[%s242 + $0x2d0] sm:$0xff]
        %v498 = vld [vmem:[%s242 + $0x2d8] sm:$0xff]
        %v499 = vld [vmem:[%s242 + $0x2e0] sm:$0xff]
        %v500 = vld [vmem:[%s242 + $0x2e8] sm:$0xff]
        %v501 = vld [vmem:[%s242 + $0x2f0] sm:$0xff]
        %v502 = vld [vmem:[%s242 + $0x2f8] sm:$0xff]
        %v503 = vld [vmem:[%s242 + $0x300] sm:$0xff]
        %v504 = vld [vmem:[%s242 + $0x308] sm:$0xff]
        %v505 = vld [vmem:[%s242 + $0x310] sm:$0xff]
        %v506 = vld [vmem:[%s242 + $0x318] sm:$0xff]
        %v507 = vld [vmem:[%s242 + $0x320] sm:$0xff]
        %v508 = vld [vmem:[%s242 + $0x328] sm:$0xff]
        %v509 = vld [vmem:[%s242 + $0x330] sm:$0xff]
        %v510 = vld [vmem:[%s242 + $0x338] sm:$0xff]
        %v511 = vld [vmem:[%s242 + $0x340] sm:$0xff]
        %v512 = vld [vmem:[%s242 + $0x348] sm:$0xff]
        %v513 = vld [vmem:[%s242 + $0x350] sm:$0xff]
        %v514 = vld [vmem:[%s242 + $0x358] sm:$0xff]
        %v515 = vld [vmem:[%s242 + $0x360] sm:$0xff]
        %v516 = vld [vmem:[%s242 + $0x368] sm:$0xff]
        %v517 = vld [vmem:[%s242 + $0x370] sm:$0xff]
        %v518 = vld [vmem:[%s242 + $0x378] sm:$0xff]
        %v519 = vld [vmem:[%s242 + $0x380] sm:$0xff]
        %v520 = vld [vmem:[%s242 + $0x388] sm:$0xff]
        %v521 = vld [vmem:[%s242 + $0x390] sm:$0xff]
        %v522 = vld [vmem:[%s242 + $0x398] sm:$0xff]
        %v523 = vld [vmem:[%s242 + $0x3a0] sm:$0xff]
        %v524 = vld [vmem:[%s242 + $0x3a8] sm:$0xff]
        %v525 = vld [vmem:[%s242 + $0x3b0] sm:$0xff]
        %v526 = vld [vmem:[%s242 + $0x3b8] sm:$0xff]
        %v527 = vld [vmem:[%s242 + $0x3c0] sm:$0xff]
        %v528 = vld [vmem:[%s242 + $0x3c8] sm:$0xff]
        %v529 = vld [vmem:[%s242 + $0x3d0] sm:$0xff]
        %v530 = vld [vmem:[%s242 + $0x3d8] sm:$0xff]
        %v531 = vld [vmem:[%s242 + $0x3e0] sm:$0xff]
        %v532 = vld [vmem:[%s242 + $0x3e8] sm:$0xff]
        %v533 = vld [vmem:[%s242 + $0x3f0] sm:$0xff]
        %v534 = vld [vmem:[%s242 + $0x3f8] sm:$0xff]
        %v535 = vld [vmem:[%s264] sm:$0xff]
        %v536 = vld [vmem:[%s264 + $0x8] sm:$0xff]
        %v537 = vld [vmem:[%s264 + $0x10] sm:$0xff]
        %v538 = vld [vmem:[%s264 + $0x18] sm:$0xff]
        %v539 = vld [vmem:[%s264 + $0x20] sm:$0xff]
        %v540 = vld [vmem:[%s264 + $0x28] sm:$0xff]
        %v541 = vld [vmem:[%s264 + $0x30] sm:$0xff]
        %v542 = vld [vmem:[%s264 + $0x38] sm:$0xff]
        %v543 = vld [vmem:[%s264 + $0x40] sm:$0xff]
        %v544 = vld [vmem:[%s264 + $0x48] sm:$0xff]
        %v545 = vld [vmem:[%s264 + $0x50] sm:$0xff]
        %v546 = vld [vmem:[%s264 + $0x58] sm:$0xff]
        %v547 = vld [vmem:[%s264 + $0x60] sm:$0xff]
        %v548 = vld [vmem:[%s264 + $0x68] sm:$0xff]
        %v549 = vld [vmem:[%s264 + $0x70] sm:$0xff]
        %v550 = vld [vmem:[%s264 + $0x78] sm:$0xff]
        %v551 = vld [vmem:[%s264 + $0x80] sm:$0xff]
        %v552 = vld [vmem:[%s264 + $0x88] sm:$0xff]
        %v553 = vld [vmem:[%s264 + $0x90] sm:$0xff]
        %v554 = vld [vmem:[%s264 + $0x98] sm:$0xff]
        %v555 = vld [vmem:[%s264 + $0xa0] sm:$0xff]
        %v556 = vld [vmem:[%s264 + $0xa8] sm:$0xff]
        %v557 = vld [vmem:[%s264 + $0xb0] sm:$0xff]
        %v558 = vld [vmem:[%s264 + $0xb8] sm:$0xff]
        %v559 = vld [vmem:[%s264 + $0xc0] sm:$0xff]
        %v560 = vld [vmem:[%s264 + $0xc8] sm:$0xff]
        %v561 = vld [vmem:[%s264 + $0xd0] sm:$0xff]
        %v562 = vld [vmem:[%s264 + $0xd8] sm:$0xff]
        %v563 = vld [vmem:[%s264 + $0xe0] sm:$0xff]
        %v564 = vld [vmem:[%s264 + $0xe8] sm:$0xff]
        %v565 = vld [vmem:[%s264 + $0xf0] sm:$0xff]
        %v566 = vld [vmem:[%s264 + $0xf8] sm:$0xff]
        %v567 = vld [vmem:[%s264 + $0x100] sm:$0xff]
        %v568 = vld [vmem:[%s264 + $0x108] sm:$0xff]
        %v569 = vld [vmem:[%s264 + $0x110] sm:$0xff]
        %v570 = vld [vmem:[%s264 + $0x118] sm:$0xff]
        %v571 = vld [vmem:[%s264 + $0x120] sm:$0xff]
        %v572 = vld [vmem:[%s264 + $0x128] sm:$0xff]
        %v573 = vld [vmem:[%s264 + $0x130] sm:$0xff]
        %v574 = vld [vmem:[%s264 + $0x138] sm:$0xff]
        %v575 = vld [vmem:[%s264 + $0x140] sm:$0xff]
        %v576 = vld [vmem:[%s264 + $0x148] sm:$0xff]
        %v577 = vld [vmem:[%s264 + $0x150] sm:$0xff]
        %v578 = vld [vmem:[%s264 + $0x158] sm:$0xff]
        %v579 = vld [vmem:[%s264 + $0x160] sm:$0xff]
        %v580 = vld [vmem:[%s264 + $0x168] sm:$0xff]
        %v581 = vld [vmem:[%s264 + $0x170] sm:$0xff]
        %v582 = vld [vmem:[%s264 + $0x178] sm:$0xff]
        %v583 = vld [vmem:[%s264 + $0x180] sm:$0xff]
        %v584 = vld [vmem:[%s264 + $0x188] sm:$0xff]
        %v585 = vld [vmem:[%s264 + $0x190] sm:$0xff]
        %v586 = vld [vmem:[%s264 + $0x198] sm:$0xff]
        %v587 = vld [vmem:[%s264 + $0x1a0] sm:$0xff]
        %v588 = vld [vmem:[%s264 + $0x1a8] sm:$0xff]
        %v589 = vld [vmem:[%s264 + $0x1b0] sm:$0xff]
        %v590 = vld [vmem:[%s264 + $0x1b8] sm:$0xff]
        %v591 = vld [vmem:[%s264 + $0x1c0] sm:$0xff]
        %v592 = vld [vmem:[%s264 + $0x1c8] sm:$0xff]
        %v593 = vld [vmem:[%s264 + $0x1d0] sm:$0xff]
        %v594 = vld [vmem:[%s264 + $0x1d8] sm:$0xff]
        %v595 = vld [vmem:[%s264 + $0x1e0] sm:$0xff]
        %v596 = vld [vmem:[%s264 + $0x1e8] sm:$0xff]
        %v597 = vld [vmem:[%s264 + $0x1f0] sm:$0xff]
        %v598 = vld [vmem:[%s264 + $0x1f8] sm:$0xff]
        %v599 = vld [vmem:[%s264 + $0x200] sm:$0xff]
        %v600 = vld [vmem:[%s264 + $0x208] sm:$0xff]
        %v601 = vld [vmem:[%s264 + $0x210] sm:$0xff]
        %v602 = vld [vmem:[%s264 + $0x218] sm:$0xff]
        %v603 = vld [vmem:[%s264 + $0x220] sm:$0xff]
        %v604 = vld [vmem:[%s264 + $0x228] sm:$0xff]
        %v605 = vld [vmem:[%s264 + $0x230] sm:$0xff]
        %v606 = vld [vmem:[%s264 + $0x238] sm:$0xff]
        %v607 = vld [vmem:[%s264 + $0x240] sm:$0xff]
        %v608 = vld [vmem:[%s264 + $0x248] sm:$0xff]
        %v609 = vld [vmem:[%s264 + $0x250] sm:$0xff]
        %v610 = vld [vmem:[%s264 + $0x258] sm:$0xff]
        %v611 = vld [vmem:[%s264 + $0x260] sm:$0xff]
        %v612 = vld [vmem:[%s264 + $0x268] sm:$0xff]
        %v613 = vld [vmem:[%s264 + $0x270] sm:$0xff]
        %v614 = vld [vmem:[%s264 + $0x278] sm:$0xff]
        %v615 = vld [vmem:[%s264 + $0x280] sm:$0xff]
        %v616 = vld [vmem:[%s264 + $0x288] sm:$0xff]
        %v617 = vld [vmem:[%s264 + $0x290] sm:$0xff]
        %v618 = vld [vmem:[%s264 + $0x298] sm:$0xff]
        %v619 = vld [vmem:[%s264 + $0x2a0] sm:$0xff]
        %v620 = vld [vmem:[%s264 + $0x2a8] sm:$0xff]
        %v621 = vld [vmem:[%s264 + $0x2b0] sm:$0xff]
        %v622 = vld [vmem:[%s264 + $0x2b8] sm:$0xff]
        %v623 = vld [vmem:[%s264 + $0x2c0] sm:$0xff]
        %v624 = vld [vmem:[%s264 + $0x2c8] sm:$0xff]
        %v625 = vld [vmem:[%s264 + $0x2d0] sm:$0xff]
        %v626 = vld [vmem:[%s264 + $0x2d8] sm:$0xff]
        %v627 = vld [vmem:[%s264 + $0x2e0] sm:$0xff]
        %v628 = vld [vmem:[%s264 + $0x2e8] sm:$0xff]
        %v629 = vld [vmem:[%s264 + $0x2f0] sm:$0xff]
        %v630 = vld [vmem:[%s264 + $0x2f8] sm:$0xff]
        %v631 = vld [vmem:[%s264 + $0x300] sm:$0xff]
        %v632 = vld [vmem:[%s264 + $0x308] sm:$0xff]
        %v633 = vld [vmem:[%s264 + $0x310] sm:$0xff]
        %v634 = vld [vmem:[%s264 + $0x318] sm:$0xff]
        %v635 = vld [vmem:[%s264 + $0x320] sm:$0xff]
        %v636 = vld [vmem:[%s264 + $0x328] sm:$0xff]
        %v637 = vld [vmem:[%s264 + $0x330] sm:$0xff]
        %v638 = vld [vmem:[%s264 + $0x338] sm:$0xff]
        %v639 = vld [vmem:[%s264 + $0x340] sm:$0xff]
        %v640 = vld [vmem:[%s264 + $0x348] sm:$0xff]
        %v641 = vld [vmem:[%s264 + $0x350] sm:$0xff]
        %v642 = vld [vmem:[%s264 + $0x358] sm:$0xff]
        %v643 = vld [vmem:[%s264 + $0x360] sm:$0xff]
        %v644 = vld [vmem:[%s264 + $0x368] sm:$0xff]
        %v645 = vld [vmem:[%s264 + $0x370] sm:$0xff]
        %v646 = vld [vmem:[%s264 + $0x378] sm:$0xff]
        %v647 = vld [vmem:[%s264 + $0x380] sm:$0xff]
        %v648 = vld [vmem:[%s264 + $0x388] sm:$0xff]
        %v649 = vld [vmem:[%s264 + $0x390] sm:$0xff]
        %v650 = vld [vmem:[%s264 + $0x398] sm:$0xff]
        %v651 = vld [vmem:[%s264 + $0x3a0] sm:$0xff]
        %v652 = vld [vmem:[%s264 + $0x3a8] sm:$0xff]
        %v653 = vld [vmem:[%s264 + $0x3b0] sm:$0xff]
        %v654 = vld [vmem:[%s264 + $0x3b8] sm:$0xff]
        %v655 = vld [vmem:[%s264 + $0x3c0] sm:$0xff]
        %v656 = vld [vmem:[%s264 + $0x3c8] sm:$0xff]
        %v657 = vld [vmem:[%s264 + $0x3d0] sm:$0xff]
        %v658 = vld [vmem:[%s264 + $0x3d8] sm:$0xff]
        %v659 = vld [vmem:[%s264 + $0x3e0] sm:$0xff]
        %v660 = vld [vmem:[%s264 + $0x3e8] sm:$0xff]
        %v661 = vld [vmem:[%s264 + $0x3f0] sm:$0xff]
        %v662 = vld [vmem:[%s264 + $0x3f8] sm:$0xff]
        %663 = vmax.xlane.f32.xlu0 %v407
        %v664 = vpop.xlane.xlu0 %663
        %665 = vmax.xlane.f32.xlu0 %v408
        %v666 = vpop.xlane.xlu0 %665
        %667 = vmax.xlane.f32.xlu0 %v409
        %v668 = vpop.xlane.xlu0 %667
        %669 = vmax.xlane.f32.xlu0 %v410
        %v670 = vpop.xlane.xlu0 %669
        %671 = vmax.xlane.f32.xlu0 %v411
        %v672 = vpop.xlane.xlu0 %671
        %673 = vmax.xlane.f32.xlu0 %v412
        %v674 = vpop.xlane.xlu0 %673
        %675 = vmax.xlane.f32.xlu0 %v413
        %v676 = vpop.xlane.xlu0 %675
        %677 = vmax.xlane.f32.xlu0 %v414
        %v678 = vpop.xlane.xlu0 %677
        %679 = vmax.xlane.f32.xlu0 %v415
        %v680 = vpop.xlane.xlu0 %679
        %681 = vmax.xlane.f32.xlu0 %v416
        %v682 = vpop.xlane.xlu0 %681
        %683 = vmax.xlane.f32.xlu0 %v417
        %v684 = vpop.xlane.xlu0 %683
        %685 = vmax.xlane.f32.xlu0 %v418
        %v686 = vpop.xlane.xlu0 %685
        %687 = vmax.xlane.f32.xlu0 %v419
        %v688 = vpop.xlane.xlu0 %687
        %689 = vmax.xlane.f32.xlu0 %v420
        %v690 = vpop.xlane.xlu0 %689
        %691 = vmax.xlane.f32.xlu0 %v421
        %v692 = vpop.xlane.xlu0 %691
        %693 = vmax.xlane.f32.xlu0 %v422
        %v694 = vpop.xlane.xlu0 %693
        %695 = vmax.xlane.f32.xlu0 %v423
        %v696 = vpop.xlane.xlu0 %695
        %697 = vmax.xlane.f32.xlu0 %v424
        %v698 = vpop.xlane.xlu0 %697
        %699 = vmax.xlane.f32.xlu0 %v425
        %v700 = vpop.xlane.xlu0 %699
        %701 = vmax.xlane.f32.xlu0 %v426
        %v702 = vpop.xlane.xlu0 %701
        %703 = vmax.xlane.f32.xlu0 %v427
        %v704 = vpop.xlane.xlu0 %703
        %705 = vmax.xlane.f32.xlu0 %v428
        %v706 = vpop.xlane.xlu0 %705
        %707 = vmax.xlane.f32.xlu0 %v429
        %v708 = vpop.xlane.xlu0 %707
        %709 = vmax.xlane.f32.xlu0 %v430
        %v710 = vpop.xlane.xlu0 %709
        %711 = vmax.xlane.f32.xlu0 %v431
        %v712 = vpop.xlane.xlu0 %711
        %713 = vmax.xlane.f32.xlu0 %v432
        %v714 = vpop.xlane.xlu0 %713
        %715 = vmax.xlane.f32.xlu0 %v433
        %v716 = vpop.xlane.xlu0 %715
        %717 = vmax.xlane.f32.xlu0 %v434
        %v718 = vpop.xlane.xlu0 %717
        %719 = vmax.xlane.f32.xlu0 %v435
        %v720 = vpop.xlane.xlu0 %719
        %721 = vmax.xlane.f32.xlu0 %v436
        %v722 = vpop.xlane.xlu0 %721
        %723 = vmax.xlane.f32.xlu0 %v437
        %v724 = vpop.xlane.xlu0 %723
        %725 = vmax.xlane.f32.xlu0 %v438
        %v726 = vpop.xlane.xlu0 %725
        %727 = vmax.xlane.f32.xlu0 %v439
        %v728 = vpop.xlane.xlu0 %727
        %729 = vmax.xlane.f32.xlu0 %v440
        %v730 = vpop.xlane.xlu0 %729
        %731 = vmax.xlane.f32.xlu0 %v441
        %v732 = vpop.xlane.xlu0 %731
        %733 = vmax.xlane.f32.xlu0 %v442
        %v734 = vpop.xlane.xlu0 %733
        %735 = vmax.xlane.f32.xlu0 %v443
        %v736 = vpop.xlane.xlu0 %735
        %737 = vmax.xlane.f32.xlu0 %v444
        %v738 = vpop.xlane.xlu0 %737
        %739 = vmax.xlane.f32.xlu0 %v445
        %v740 = vpop.xlane.xlu0 %739
        %741 = vmax.xlane.f32.xlu0 %v446
        %v742 = vpop.xlane.xlu0 %741
        %743 = vmax.xlane.f32.xlu0 %v447
        %v744 = vpop.xlane.xlu0 %743
        %745 = vmax.xlane.f32.xlu0 %v448
        %v746 = vpop.xlane.xlu0 %745
        %747 = vmax.xlane.f32.xlu0 %v449
        %v748 = vpop.xlane.xlu0 %747
        %749 = vmax.xlane.f32.xlu0 %v450
        %v750 = vpop.xlane.xlu0 %749
        %751 = vmax.xlane.f32.xlu0 %v451
        %v752 = vpop.xlane.xlu0 %751
        %753 = vmax.xlane.f32.xlu0 %v452
        %v754 = vpop.xlane.xlu0 %753
        %755 = vmax.xlane.f32.xlu0 %v453
        %v756 = vpop.xlane.xlu0 %755
        %757 = vmax.xlane.f32.xlu0 %v454
        %v758 = vpop.xlane.xlu0 %757
        %759 = vmax.xlane.f32.xlu0 %v455
        %v760 = vpop.xlane.xlu0 %759
        %761 = vmax.xlane.f32.xlu0 %v456
        %v762 = vpop.xlane.xlu0 %761
        %763 = vmax.xlane.f32.xlu0 %v457
        %v764 = vpop.xlane.xlu0 %763
        %765 = vmax.xlane.f32.xlu0 %v458
        %v766 = vpop.xlane.xlu0 %765
        %767 = vmax.xlane.f32.xlu0 %v459
        %v768 = vpop.xlane.xlu0 %767
        %769 = vmax.xlane.f32.xlu0 %v460
        %v770 = vpop.xlane.xlu0 %769
        %771 = vmax.xlane.f32.xlu0 %v461
        %v772 = vpop.xlane.xlu0 %771
        %773 = vmax.xlane.f32.xlu0 %v462
        %v774 = vpop.xlane.xlu0 %773
        %775 = vmax.xlane.f32.xlu0 %v463
        %v776 = vpop.xlane.xlu0 %775
        %777 = vmax.xlane.f32.xlu0 %v464
        %v778 = vpop.xlane.xlu0 %777
        %779 = vmax.xlane.f32.xlu0 %v465
        %v780 = vpop.xlane.xlu0 %779
        %781 = vmax.xlane.f32.xlu0 %v466
        %v782 = vpop.xlane.xlu0 %781
        %783 = vmax.xlane.f32.xlu0 %v467
        %v784 = vpop.xlane.xlu0 %783
        %785 = vmax.xlane.f32.xlu0 %v468
        %v786 = vpop.xlane.xlu0 %785
        %787 = vmax.xlane.f32.xlu0 %v469
        %v788 = vpop.xlane.xlu0 %787
        %789 = vmax.xlane.f32.xlu0 %v470
        %v790 = vpop.xlane.xlu0 %789
        %791 = vmax.xlane.f32.xlu0 %v471
        %v792 = vpop.xlane.xlu0 %791
        %793 = vmax.xlane.f32.xlu0 %v472
        %v794 = vpop.xlane.xlu0 %793
        %795 = vmax.xlane.f32.xlu0 %v473
        %v796 = vpop.xlane.xlu0 %795
        %797 = vmax.xlane.f32.xlu0 %v474
        %v798 = vpop.xlane.xlu0 %797
        %799 = vmax.xlane.f32.xlu0 %v475
        %v800 = vpop.xlane.xlu0 %799
        %801 = vmax.xlane.f32.xlu0 %v476
        %v802 = vpop.xlane.xlu0 %801
        %803 = vmax.xlane.f32.xlu0 %v477
        %v804 = vpop.xlane.xlu0 %803
        %805 = vmax.xlane.f32.xlu0 %v478
        %v806 = vpop.xlane.xlu0 %805
        %807 = vmax.xlane.f32.xlu0 %v479
        %v808 = vpop.xlane.xlu0 %807
        %809 = vmax.xlane.f32.xlu0 %v480
        %v810 = vpop.xlane.xlu0 %809
        %811 = vmax.xlane.f32.xlu0 %v481
        %v812 = vpop.xlane.xlu0 %811
        %813 = vmax.xlane.f32.xlu0 %v482
        %v814 = vpop.xlane.xlu0 %813
        %815 = vmax.xlane.f32.xlu0 %v483
        %v816 = vpop.xlane.xlu0 %815
        %817 = vmax.xlane.f32.xlu0 %v484
        %v818 = vpop.xlane.xlu0 %817
        %819 = vmax.xlane.f32.xlu0 %v485
        %v820 = vpop.xlane.xlu0 %819
        %821 = vmax.xlane.f32.xlu0 %v486
        %v822 = vpop.xlane.xlu0 %821
        %823 = vmax.xlane.f32.xlu0 %v487
        %v824 = vpop.xlane.xlu0 %823
        %825 = vmax.xlane.f32.xlu0 %v488
        %v826 = vpop.xlane.xlu0 %825
        %827 = vmax.xlane.f32.xlu0 %v489
        %v828 = vpop.xlane.xlu0 %827
        %829 = vmax.xlane.f32.xlu0 %v490
        %v830 = vpop.xlane.xlu0 %829
        %831 = vmax.xlane.f32.xlu0 %v491
        %v832 = vpop.xlane.xlu0 %831
        %833 = vmax.xlane.f32.xlu0 %v492
        %v834 = vpop.xlane.xlu0 %833
        %835 = vmax.xlane.f32.xlu0 %v493
        %v836 = vpop.xlane.xlu0 %835
        %837 = vmax.xlane.f32.xlu0 %v494
        %v838 = vpop.xlane.xlu0 %837
        %839 = vmax.xlane.f32.xlu0 %v495
        %v840 = vpop.xlane.xlu0 %839
        %841 = vmax.xlane.f32.xlu0 %v496
        %v842 = vpop.xlane.xlu0 %841
        %843 = vmax.xlane.f32.xlu0 %v497
        %v844 = vpop.xlane.xlu0 %843
        %845 = vmax.xlane.f32.xlu0 %v498
        %v846 = vpop.xlane.xlu0 %845
        %847 = vmax.xlane.f32.xlu0 %v499
        %v848 = vpop.xlane.xlu0 %847
        %849 = vmax.xlane.f32.xlu0 %v500
        %v850 = vpop.xlane.xlu0 %849
        %851 = vmax.xlane.f32.xlu0 %v501
        %v852 = vpop.xlane.xlu0 %851
        %853 = vmax.xlane.f32.xlu0 %v502
        %v854 = vpop.xlane.xlu0 %853
        %855 = vmax.xlane.f32.xlu0 %v503
        %v856 = vpop.xlane.xlu0 %855
        %857 = vmax.xlane.f32.xlu0 %v504
        %v858 = vpop.xlane.xlu0 %857
        %859 = vmax.xlane.f32.xlu0 %v505
        %v860 = vpop.xlane.xlu0 %859
        %861 = vmax.xlane.f32.xlu0 %v506
        %v862 = vpop.xlane.xlu0 %861
        %863 = vmax.xlane.f32.xlu0 %v507
        %v864 = vpop.xlane.xlu0 %863
        %865 = vmax.xlane.f32.xlu0 %v508
        %v866 = vpop.xlane.xlu0 %865
        %867 = vmax.xlane.f32.xlu0 %v509
        %v868 = vpop.xlane.xlu0 %867
        %869 = vmax.xlane.f32.xlu0 %v510
        %v870 = vpop.xlane.xlu0 %869
        %871 = vmax.xlane.f32.xlu0 %v511
        %v872 = vpop.xlane.xlu0 %871
        %873 = vmax.xlane.f32.xlu0 %v512
        %v874 = vpop.xlane.xlu0 %873
        %875 = vmax.xlane.f32.xlu0 %v513
        %v876 = vpop.xlane.xlu0 %875
        %877 = vmax.xlane.f32.xlu0 %v514
        %v878 = vpop.xlane.xlu0 %877
        %879 = vmax.xlane.f32.xlu0 %v515
        %v880 = vpop.xlane.xlu0 %879
        %881 = vmax.xlane.f32.xlu0 %v516
        %v882 = vpop.xlane.xlu0 %881
        %883 = vmax.xlane.f32.xlu0 %v517
        %v884 = vpop.xlane.xlu0 %883
        %885 = vmax.xlane.f32.xlu0 %v518
        %v886 = vpop.xlane.xlu0 %885
        %887 = vmax.xlane.f32.xlu0 %v519
        %v888 = vpop.xlane.xlu0 %887
        %889 = vmax.xlane.f32.xlu0 %v520
        %v890 = vpop.xlane.xlu0 %889
        %891 = vmax.xlane.f32.xlu0 %v521
        %v892 = vpop.xlane.xlu0 %891
        %893 = vmax.xlane.f32.xlu0 %v522
        %v894 = vpop.xlane.xlu0 %893
        %895 = vmax.xlane.f32.xlu0 %v523
        %v896 = vpop.xlane.xlu0 %895
        %897 = vmax.xlane.f32.xlu0 %v524
        %v898 = vpop.xlane.xlu0 %897
        %899 = vmax.xlane.f32.xlu0 %v525
        %v900 = vpop.xlane.xlu0 %899
        %901 = vmax.xlane.f32.xlu0 %v526
        %v902 = vpop.xlane.xlu0 %901
        %903 = vmax.xlane.f32.xlu0 %v527
        %v904 = vpop.xlane.xlu0 %903
        %905 = vmax.xlane.f32.xlu0 %v528
        %v906 = vpop.xlane.xlu0 %905
        %907 = vmax.xlane.f32.xlu0 %v529
        %v908 = vpop.xlane.xlu0 %907
        %909 = vmax.xlane.f32.xlu0 %v530
        %v910 = vpop.xlane.xlu0 %909
        %911 = vmax.xlane.f32.xlu0 %v531
        %v912 = vpop.xlane.xlu0 %911
        %913 = vmax.xlane.f32.xlu0 %v532
        %v914 = vpop.xlane.xlu0 %913
        %915 = vmax.xlane.f32.xlu0 %v533
        %v916 = vpop.xlane.xlu0 %915
        %917 = vmax.xlane.f32.xlu0 %v534
        %v918 = vpop.xlane.xlu0 %917
        %v919 = vsub.f32 %v407, %v664
        %v920 = vsub.f32 %v408, %v666
        %v921 = vsub.f32 %v409, %v668
        %v922 = vsub.f32 %v410, %v670
        %v923 = vsub.f32 %v411, %v672
        %v924 = vsub.f32 %v412, %v674
        %v925 = vsub.f32 %v413, %v676
        %v926 = vsub.f32 %v414, %v678
        %v927 = vsub.f32 %v415, %v680
        %v928 = vsub.f32 %v416, %v682
        %v929 = vsub.f32 %v417, %v684
        %v930 = vsub.f32 %v418, %v686
        %v931 = vsub.f32 %v419, %v688
        %v932 = vsub.f32 %v420, %v690
        %v933 = vsub.f32 %v421, %v692
        %v934 = vsub.f32 %v422, %v694
        %v935 = vsub.f32 %v423, %v696
        %v936 = vsub.f32 %v424, %v698
        %v937 = vsub.f32 %v425, %v700
        %v938 = vsub.f32 %v426, %v702
        %v939 = vsub.f32 %v427, %v704
        %v940 = vsub.f32 %v428, %v706
        %v941 = vsub.f32 %v429, %v708
        %v942 = vsub.f32 %v430, %v710
        %v943 = vsub.f32 %v431, %v712
        %v944 = vsub.f32 %v432, %v714
        %v945 = vsub.f32 %v433, %v716
        %v946 = vsub.f32 %v434, %v718
        %v947 = vsub.f32 %v435, %v720
        %v948 = vsub.f32 %v436, %v722
        %v949 = vsub.f32 %v437, %v724
        %v950 = vsub.f32 %v438, %v726
        %v951 = vsub.f32 %v439, %v728
        %v952 = vsub.f32 %v440, %v730
        %v953 = vsub.f32 %v441, %v732
        %v954 = vsub.f32 %v442, %v734
        %v955 = vsub.f32 %v443, %v736
        %v956 = vsub.f32 %v444, %v738
        %v957 = vsub.f32 %v445, %v740
        %v958 = vsub.f32 %v446, %v742
        %v959 = vsub.f32 %v447, %v744
        %v960 = vsub.f32 %v448, %v746
        %v961 = vsub.f32 %v449, %v748
        %v962 = vsub.f32 %v450, %v750
        %v963 = vsub.f32 %v451, %v752
        %v964 = vsub.f32 %v452, %v754
        %v965 = vsub.f32 %v453, %v756
        %v966 = vsub.f32 %v454, %v758
        %v967 = vsub.f32 %v455, %v760
        %v968 = vsub.f32 %v456, %v762
        %v969 = vsub.f32 %v457, %v764
        %v970 = vsub.f32 %v458, %v766
        %v971 = vsub.f32 %v459, %v768
        %v972 = vsub.f32 %v460, %v770
        %v973 = vsub.f32 %v461, %v772
        %v974 = vsub.f32 %v462, %v774
        %v975 = vsub.f32 %v463, %v776
        %v976 = vsub.f32 %v464, %v778
        %v977 = vsub.f32 %v465, %v780
        %v978 = vsub.f32 %v466, %v782
        %v979 = vsub.f32 %v467, %v784
        %v980 = vsub.f32 %v468, %v786
        %v981 = vsub.f32 %v469, %v788
        %v982 = vsub.f32 %v470, %v790
        %v983 = vsub.f32 %v471, %v792
        %v984 = vsub.f32 %v472, %v794
        %v985 = vsub.f32 %v473, %v796
        %v986 = vsub.f32 %v474, %v798
        %v987 = vsub.f32 %v475, %v800
        %v988 = vsub.f32 %v476, %v802
        %v989 = vsub.f32 %v477, %v804
        %v990 = vsub.f32 %v478, %v806
        %v991 = vsub.f32 %v479, %v808
        %v992 = vsub.f32 %v480, %v810
        %v993 = vsub.f32 %v481, %v812
        %v994 = vsub.f32 %v482, %v814
        %v995 = vsub.f32 %v483, %v816
        %v996 = vsub.f32 %v484, %v818
        %v997 = vsub.f32 %v485, %v820
        %v998 = vsub.f32 %v486, %v822
        %v999 = vsub.f32 %v487, %v824
        %v1000 = vsub.f32 %v488, %v826
        %v1001 = vsub.f32 %v489, %v828
        %v1002 = vsub.f32 %v490, %v830
        %v1003 = vsub.f32 %v491, %v832
        %v1004 = vsub.f32 %v492, %v834
        %v1005 = vsub.f32 %v493, %v836
        %v1006 = vsub.f32 %v494, %v838
        %v1007 = vsub.f32 %v495, %v840
        %v1008 = vsub.f32 %v496, %v842
        %v1009 = vsub.f32 %v497, %v844
        %v1010 = vsub.f32 %v498, %v846
        %v1011 = vsub.f32 %v499, %v848
        %v1012 = vsub.f32 %v500, %v850
        %v1013 = vsub.f32 %v501, %v852
        %v1014 = vsub.f32 %v502, %v854
        %v1015 = vsub.f32 %v503, %v856
        %v1016 = vsub.f32 %v504, %v858
        %v1017 = vsub.f32 %v505, %v860
        %v1018 = vsub.f32 %v506, %v862
        %v1019 = vsub.f32 %v507, %v864
        %v1020 = vsub.f32 %v508, %v866
        %v1021 = vsub.f32 %v509, %v868
        %v1022 = vsub.f32 %v510, %v870
        %v1023 = vsub.f32 %v511, %v872
        %v1024 = vsub.f32 %v512, %v874
        %v1025 = vsub.f32 %v513, %v876
        %v1026 = vsub.f32 %v514, %v878
        %v1027 = vsub.f32 %v515, %v880
        %v1028 = vsub.f32 %v516, %v882
        %v1029 = vsub.f32 %v517, %v884
        %v1030 = vsub.f32 %v518, %v886
        %v1031 = vsub.f32 %v519, %v888
        %v1032 = vsub.f32 %v520, %v890
        %v1033 = vsub.f32 %v521, %v892
        %v1034 = vsub.f32 %v522, %v894
        %v1035 = vsub.f32 %v523, %v896
        %v1036 = vsub.f32 %v524, %v898
        %v1037 = vsub.f32 %v525, %v900
        %v1038 = vsub.f32 %v526, %v902
        %v1039 = vsub.f32 %v527, %v904
        %v1040 = vsub.f32 %v528, %v906
        %v1041 = vsub.f32 %v529, %v908
        %v1042 = vsub.f32 %v530, %v910
        %v1043 = vsub.f32 %v531, %v912
        %v1044 = vsub.f32 %v532, %v914
        %v1045 = vsub.f32 %v533, %v916
        %v1046 = vsub.f32 %v534, %v918
        %v1047 = vmul.f32 %v919, 1.442695
        %v1048 = vpow.pop %v1047
        %v1049 = vmul.f32 %v920, 1.442695
        %v1050 = vpow.pop %v1049
        %v1051 = vmul.f32 %v921, 1.442695
        %v1052 = vpow.pop %v1051
        %v1053 = vmul.f32 %v922, 1.442695
        %v1054 = vpow.pop %v1053
        %v1055 = vmul.f32 %v923, 1.442695
        %v1056 = vpow.pop %v1055
        %v1057 = vmul.f32 %v924, 1.442695
        %v1058 = vpow.pop %v1057
        %v1059 = vmul.f32 %v925, 1.442695
        %v1060 = vpow.pop %v1059
        %v1061 = vmul.f32 %v926, 1.442695
        %v1062 = vpow.pop %v1061
        %v1063 = vmul.f32 %v927, 1.442695
        %v1064 = vpow.pop %v1063
        %v1065 = vmul.f32 %v928, 1.442695
        %v1066 = vpow.pop %v1065
        %v1067 = vmul.f32 %v929, 1.442695
        %v1068 = vpow.pop %v1067
        %v1069 = vmul.f32 %v930, 1.442695
        %v1070 = vpow.pop %v1069
        %v1071 = vmul.f32 %v931, 1.442695
        %v1072 = vpow.pop %v1071
        %v1073 = vmul.f32 %v932, 1.442695
        %v1074 = vpow.pop %v1073
        %v1075 = vmul.f32 %v933, 1.442695
        %v1076 = vpow.pop %v1075
        %v1077 = vmul.f32 %v934, 1.442695
        %v1078 = vpow.pop %v1077
        %v1079 = vmul.f32 %v935, 1.442695
        %v1080 = vpow.pop %v1079
        %v1081 = vmul.f32 %v936, 1.442695
        %v1082 = vpow.pop %v1081
        %v1083 = vmul.f32 %v937, 1.442695
        %v1084 = vpow.pop %v1083
        %v1085 = vmul.f32 %v938, 1.442695
        %v1086 = vpow.pop %v1085
        %v1087 = vmul.f32 %v939, 1.442695
        %v1088 = vpow.pop %v1087
        %v1089 = vmul.f32 %v940, 1.442695
        %v1090 = vpow.pop %v1089
        %v1091 = vmul.f32 %v941, 1.442695
        %v1092 = vpow.pop %v1091
        %v1093 = vmul.f32 %v942, 1.442695
        %v1094 = vpow.pop %v1093
        %v1095 = vmul.f32 %v943, 1.442695
        %v1096 = vpow.pop %v1095
        %v1097 = vmul.f32 %v944, 1.442695
        %v1098 = vpow.pop %v1097
        %v1099 = vmul.f32 %v945, 1.442695
        %v1100 = vpow.pop %v1099
        %v1101 = vmul.f32 %v946, 1.442695
        %v1102 = vpow.pop %v1101
        %v1103 = vmul.f32 %v947, 1.442695
        %v1104 = vpow.pop %v1103
        %v1105 = vmul.f32 %v948, 1.442695
        %v1106 = vpow.pop %v1105
        %v1107 = vmul.f32 %v949, 1.442695
        %v1108 = vpow.pop %v1107
        %v1109 = vmul.f32 %v950, 1.442695
        %v1110 = vpow.pop %v1109
        %v1111 = vmul.f32 %v951, 1.442695
        %v1112 = vpow.pop %v1111
        %v1113 = vmul.f32 %v952, 1.442695
        %v1114 = vpow.pop %v1113
        %v1115 = vmul.f32 %v953, 1.442695
        %v1116 = vpow.pop %v1115
        %v1117 = vmul.f32 %v954, 1.442695
        %v1118 = vpow.pop %v1117
        %v1119 = vmul.f32 %v955, 1.442695
        %v1120 = vpow.pop %v1119
        %v1121 = vmul.f32 %v956, 1.442695
        %v1122 = vpow.pop %v1121
        %v1123 = vmul.f32 %v957, 1.442695
        %v1124 = vpow.pop %v1123
        %v1125 = vmul.f32 %v958, 1.442695
        %v1126 = vpow.pop %v1125
        %v1127 = vmul.f32 %v959, 1.442695
        %v1128 = vpow.pop %v1127
        %v1129 = vmul.f32 %v960, 1.442695
        %v1130 = vpow.pop %v1129
        %v1131 = vmul.f32 %v961, 1.442695
        %v1132 = vpow.pop %v1131
        %v1133 = vmul.f32 %v962, 1.442695
        %v1134 = vpow.pop %v1133
        %v1135 = vmul.f32 %v963, 1.442695
        %v1136 = vpow.pop %v1135
        %v1137 = vmul.f32 %v964, 1.442695
        %v1138 = vpow.pop %v1137
        %v1139 = vmul.f32 %v965, 1.442695
        %v1140 = vpow.pop %v1139
        %v1141 = vmul.f32 %v966, 1.442695
        %v1142 = vpow.pop %v1141
        %v1143 = vmul.f32 %v967, 1.442695
        %v1144 = vpow.pop %v1143
        %v1145 = vmul.f32 %v968, 1.442695
        %v1146 = vpow.pop %v1145
        %v1147 = vmul.f32 %v969, 1.442695
        %v1148 = vpow.pop %v1147
        %v1149 = vmul.f32 %v970, 1.442695
        %v1150 = vpow.pop %v1149
        %v1151 = vmul.f32 %v971, 1.442695
        %v1152 = vpow.pop %v1151
        %v1153 = vmul.f32 %v972, 1.442695
        %v1154 = vpow.pop %v1153
        %v1155 = vmul.f32 %v973, 1.442695
        %v1156 = vpow.pop %v1155
        %v1157 = vmul.f32 %v974, 1.442695
        %v1158 = vpow.pop %v1157
        %v1159 = vmul.f32 %v975, 1.442695
        %v1160 = vpow.pop %v1159
        %v1161 = vmul.f32 %v976, 1.442695
        %v1162 = vpow.pop %v1161
        %v1163 = vmul.f32 %v977, 1.442695
        %v1164 = vpow.pop %v1163
        %v1165 = vmul.f32 %v978, 1.442695
        %v1166 = vpow.pop %v1165
        %v1167 = vmul.f32 %v979, 1.442695
        %v1168 = vpow.pop %v1167
        %v1169 = vmul.f32 %v980, 1.442695
        %v1170 = vpow.pop %v1169
        %v1171 = vmul.f32 %v981, 1.442695
        %v1172 = vpow.pop %v1171
        %v1173 = vmul.f32 %v982, 1.442695
        %v1174 = vpow.pop %v1173
        %v1175 = vmul.f32 %v983, 1.442695
        %v1176 = vpow.pop %v1175
        %v1177 = vmul.f32 %v984, 1.442695
        %v1178 = vpow.pop %v1177
        %v1179 = vmul.f32 %v985, 1.442695
        %v1180 = vpow.pop %v1179
        %v1181 = vmul.f32 %v986, 1.442695
        %v1182 = vpow.pop %v1181
        %v1183 = vmul.f32 %v987, 1.442695
        %v1184 = vpow.pop %v1183
        %v1185 = vmul.f32 %v988, 1.442695
        %v1186 = vpow.pop %v1185
        %v1187 = vmul.f32 %v989, 1.442695
        %v1188 = vpow.pop %v1187
        %v1189 = vmul.f32 %v990, 1.442695
        %v1190 = vpow.pop %v1189
        %v1191 = vmul.f32 %v991, 1.442695
        %v1192 = vpow.pop %v1191
        %v1193 = vmul.f32 %v992, 1.442695
        %v1194 = vpow.pop %v1193
        %v1195 = vmul.f32 %v993, 1.442695
        %v1196 = vpow.pop %v1195
        %v1197 = vmul.f32 %v994, 1.442695
        %v1198 = vpow.pop %v1197
        %v1199 = vmul.f32 %v995, 1.442695
        %v1200 = vpow.pop %v1199
        %v1201 = vmul.f32 %v996, 1.442695
        %v1202 = vpow.pop %v1201
        %v1203 = vmul.f32 %v997, 1.442695
        %v1204 = vpow.pop %v1203
        %v1205 = vmul.f32 %v998, 1.442695
        %v1206 = vpow.pop %v1205
        %v1207 = vmul.f32 %v999, 1.442695
        %v1208 = vpow.pop %v1207
        %v1209 = vmul.f32 %v1000, 1.442695
        %v1210 = vpow.pop %v1209
        %v1211 = vmul.f32 %v1001, 1.442695
        %v1212 = vpow.pop %v1211
        %v1213 = vmul.f32 %v1002, 1.442695
        %v1214 = vpow.pop %v1213
        %v1215 = vmul.f32 %v1003, 1.442695
        %v1216 = vpow.pop %v1215
        %v1217 = vmul.f32 %v1004, 1.442695
        %v1218 = vpow.pop %v1217
        %v1219 = vmul.f32 %v1005, 1.442695
        %v1220 = vpow.pop %v1219
        %v1221 = vmul.f32 %v1006, 1.442695
        %v1222 = vpow.pop %v1221
        %v1223 = vmul.f32 %v1007, 1.442695
        %v1224 = vpow.pop %v1223
        %v1225 = vmul.f32 %v1008, 1.442695
        %v1226 = vpow.pop %v1225
        %v1227 = vmul.f32 %v1009, 1.442695
        %v1228 = vpow.pop %v1227
        %v1229 = vmul.f32 %v1010, 1.442695
        %v1230 = vpow.pop %v1229
        %v1231 = vmul.f32 %v1011, 1.442695
        %v1232 = vpow.pop %v1231
        %v1233 = vmul.f32 %v1012, 1.442695
        %v1234 = vpow.pop %v1233
        %v1235 = vmul.f32 %v1013, 1.442695
        %v1236 = vpow.pop %v1235
        %v1237 = vmul.f32 %v1014, 1.442695
        %v1238 = vpow.pop %v1237
        %v1239 = vmul.f32 %v1015, 1.442695
        %v1240 = vpow.pop %v1239
        %v1241 = vmul.f32 %v1016, 1.442695
        %v1242 = vpow.pop %v1241
        %v1243 = vmul.f32 %v1017, 1.442695
        %v1244 = vpow.pop %v1243
        %v1245 = vmul.f32 %v1018, 1.442695
        %v1246 = vpow.pop %v1245
        %v1247 = vmul.f32 %v1019, 1.442695
        %v1248 = vpow.pop %v1247
        %v1249 = vmul.f32 %v1020, 1.442695
        %v1250 = vpow.pop %v1249
        %v1251 = vmul.f32 %v1021, 1.442695
        %v1252 = vpow.pop %v1251
        %v1253 = vmul.f32 %v1022, 1.442695
        %v1254 = vpow.pop %v1253
        %v1255 = vmul.f32 %v1023, 1.442695
        %v1256 = vpow.pop %v1255
        %v1257 = vmul.f32 %v1024, 1.442695
        %v1258 = vpow.pop %v1257
        %v1259 = vmul.f32 %v1025, 1.442695
        %v1260 = vpow.pop %v1259
        %v1261 = vmul.f32 %v1026, 1.442695
        %v1262 = vpow.pop %v1261
        %v1263 = vmul.f32 %v1027, 1.442695
        %v1264 = vpow.pop %v1263
        %v1265 = vmul.f32 %v1028, 1.442695
        %v1266 = vpow.pop %v1265
        %v1267 = vmul.f32 %v1029, 1.442695
        %v1268 = vpow.pop %v1267
        %v1269 = vmul.f32 %v1030, 1.442695
        %v1270 = vpow.pop %v1269
        %v1271 = vmul.f32 %v1031, 1.442695
        %v1272 = vpow.pop %v1271
        %v1273 = vmul.f32 %v1032, 1.442695
        %v1274 = vpow.pop %v1273
        %v1275 = vmul.f32 %v1033, 1.442695
        %v1276 = vpow.pop %v1275
        %v1277 = vmul.f32 %v1034, 1.442695
        %v1278 = vpow.pop %v1277
        %v1279 = vmul.f32 %v1035, 1.442695
        %v1280 = vpow.pop %v1279
        %v1281 = vmul.f32 %v1036, 1.442695
        %v1282 = vpow.pop %v1281
        %v1283 = vmul.f32 %v1037, 1.442695
        %v1284 = vpow.pop %v1283
        %v1285 = vmul.f32 %v1038, 1.442695
        %v1286 = vpow.pop %v1285
        %v1287 = vmul.f32 %v1039, 1.442695
        %v1288 = vpow.pop %v1287
        %v1289 = vmul.f32 %v1040, 1.442695
        %v1290 = vpow.pop %v1289
        %v1291 = vmul.f32 %v1041, 1.442695
        %v1292 = vpow.pop %v1291
        %v1293 = vmul.f32 %v1042, 1.442695
        %v1294 = vpow.pop %v1293
        %v1295 = vmul.f32 %v1043, 1.442695
        %v1296 = vpow.pop %v1295
        %v1297 = vmul.f32 %v1044, 1.442695
        %v1298 = vpow.pop %v1297
        %v1299 = vmul.f32 %v1045, 1.442695
        %v1300 = vpow.pop %v1299
        %v1301 = vmul.f32 %v1046, 1.442695
        %v1302 = vpow.pop %v1301
        %1303 = vadd.xlane.f32.xlu0 %v1048
        %v1304 = vpop.xlane.xlu0 %1303
        %1305 = vadd.xlane.f32.xlu0 %v1050
        %v1306 = vpop.xlane.xlu0 %1305
        %1307 = vadd.xlane.f32.xlu0 %v1052
        %v1308 = vpop.xlane.xlu0 %1307
        %1309 = vadd.xlane.f32.xlu0 %v1054
        %v1310 = vpop.xlane.xlu0 %1309
        %1311 = vadd.xlane.f32.xlu0 %v1056
        %v1312 = vpop.xlane.xlu0 %1311
        %1313 = vadd.xlane.f32.xlu0 %v1058
        %v1314 = vpop.xlane.xlu0 %1313
        %1315 = vadd.xlane.f32.xlu0 %v1060
        %v1316 = vpop.xlane.xlu0 %1315
        %1317 = vadd.xlane.f32.xlu0 %v1062
        %v1318 = vpop.xlane.xlu0 %1317
        %1319 = vadd.xlane.f32.xlu0 %v1064
        %v1320 = vpop.xlane.xlu0 %1319
        %1321 = vadd.xlane.f32.xlu0 %v1066
        %v1322 = vpop.xlane.xlu0 %1321
        %1323 = vadd.xlane.f32.xlu0 %v1068
        %v1324 = vpop.xlane.xlu0 %1323
        %1325 = vadd.xlane.f32.xlu0 %v1070
        %v1326 = vpop.xlane.xlu0 %1325
        %1327 = vadd.xlane.f32.xlu0 %v1072
        %v1328 = vpop.xlane.xlu0 %1327
        %1329 = vadd.xlane.f32.xlu0 %v1074
        %v1330 = vpop.xlane.xlu0 %1329
        %1331 = vadd.xlane.f32.xlu0 %v1076
        %v1332 = vpop.xlane.xlu0 %1331
        %1333 = vadd.xlane.f32.xlu0 %v1078
        %v1334 = vpop.xlane.xlu0 %1333
        %1335 = vadd.xlane.f32.xlu0 %v1080
        %v1336 = vpop.xlane.xlu0 %1335
        %1337 = vadd.xlane.f32.xlu0 %v1082
        %v1338 = vpop.xlane.xlu0 %1337
        %1339 = vadd.xlane.f32.xlu0 %v1084
        %v1340 = vpop.xlane.xlu0 %1339
        %1341 = vadd.xlane.f32.xlu0 %v1086
        %v1342 = vpop.xlane.xlu0 %1341
        %1343 = vadd.xlane.f32.xlu0 %v1088
        %v1344 = vpop.xlane.xlu0 %1343
        %1345 = vadd.xlane.f32.xlu0 %v1090
        %v1346 = vpop.xlane.xlu0 %1345
        %1347 = vadd.xlane.f32.xlu0 %v1092
        %v1348 = vpop.xlane.xlu0 %1347
        %1349 = vadd.xlane.f32.xlu0 %v1094
        %v1350 = vpop.xlane.xlu0 %1349
        %1351 = vadd.xlane.f32.xlu0 %v1096
        %v1352 = vpop.xlane.xlu0 %1351
        %1353 = vadd.xlane.f32.xlu0 %v1098
        %v1354 = vpop.xlane.xlu0 %1353
        %1355 = vadd.xlane.f32.xlu0 %v1100
        %v1356 = vpop.xlane.xlu0 %1355
        %1357 = vadd.xlane.f32.xlu0 %v1102
        %v1358 = vpop.xlane.xlu0 %1357
        %1359 = vadd.xlane.f32.xlu0 %v1104
        %v1360 = vpop.xlane.xlu0 %1359
        %1361 = vadd.xlane.f32.xlu0 %v1106
        %v1362 = vpop.xlane.xlu0 %1361
        %1363 = vadd.xlane.f32.xlu0 %v1108
        %v1364 = vpop.xlane.xlu0 %1363
        %1365 = vadd.xlane.f32.xlu0 %v1110
        %v1366 = vpop.xlane.xlu0 %1365
        %1367 = vadd.xlane.f32.xlu0 %v1112
        %v1368 = vpop.xlane.xlu0 %1367
        %1369 = vadd.xlane.f32.xlu0 %v1114
        %v1370 = vpop.xlane.xlu0 %1369
        %1371 = vadd.xlane.f32.xlu0 %v1116
        %v1372 = vpop.xlane.xlu0 %1371
        %1373 = vadd.xlane.f32.xlu0 %v1118
        %v1374 = vpop.xlane.xlu0 %1373
        %1375 = vadd.xlane.f32.xlu0 %v1120
        %v1376 = vpop.xlane.xlu0 %1375
        %1377 = vadd.xlane.f32.xlu0 %v1122
        %v1378 = vpop.xlane.xlu0 %1377
        %1379 = vadd.xlane.f32.xlu0 %v1124
        %v1380 = vpop.xlane.xlu0 %1379
        %1381 = vadd.xlane.f32.xlu0 %v1126
        %v1382 = vpop.xlane.xlu0 %1381
        %1383 = vadd.xlane.f32.xlu0 %v1128
        %v1384 = vpop.xlane.xlu0 %1383
        %1385 = vadd.xlane.f32.xlu0 %v1130
        %v1386 = vpop.xlane.xlu0 %1385
        %1387 = vadd.xlane.f32.xlu0 %v1132
        %v1388 = vpop.xlane.xlu0 %1387
        %1389 = vadd.xlane.f32.xlu0 %v1134
        %v1390 = vpop.xlane.xlu0 %1389
        %1391 = vadd.xlane.f32.xlu0 %v1136
        %v1392 = vpop.xlane.xlu0 %1391
        %1393 = vadd.xlane.f32.xlu0 %v1138
        %v1394 = vpop.xlane.xlu0 %1393
        %1395 = vadd.xlane.f32.xlu0 %v1140
        %v1396 = vpop.xlane.xlu0 %1395
        %1397 = vadd.xlane.f32.xlu0 %v1142
        %v1398 = vpop.xlane.xlu0 %1397
        %1399 = vadd.xlane.f32.xlu0 %v1144
        %v1400 = vpop.xlane.xlu0 %1399
        %1401 = vadd.xlane.f32.xlu0 %v1146
        %v1402 = vpop.xlane.xlu0 %1401
        %1403 = vadd.xlane.f32.xlu0 %v1148
        %v1404 = vpop.xlane.xlu0 %1403
        %1405 = vadd.xlane.f32.xlu0 %v1150
        %v1406 = vpop.xlane.xlu0 %1405
        %1407 = vadd.xlane.f32.xlu0 %v1152
        %v1408 = vpop.xlane.xlu0 %1407
        %1409 = vadd.xlane.f32.xlu0 %v1154
        %v1410 = vpop.xlane.xlu0 %1409
        %1411 = vadd.xlane.f32.xlu0 %v1156
        %v1412 = vpop.xlane.xlu0 %1411
        %1413 = vadd.xlane.f32.xlu0 %v1158
        %v1414 = vpop.xlane.xlu0 %1413
        %1415 = vadd.xlane.f32.xlu0 %v1160
        %v1416 = vpop.xlane.xlu0 %1415
        %1417 = vadd.xlane.f32.xlu0 %v1162
        %v1418 = vpop.xlane.xlu0 %1417
        %1419 = vadd.xlane.f32.xlu0 %v1164
        %v1420 = vpop.xlane.xlu0 %1419
        %1421 = vadd.xlane.f32.xlu0 %v1166
        %v1422 = vpop.xlane.xlu0 %1421
        %1423 = vadd.xlane.f32.xlu0 %v1168
        %v1424 = vpop.xlane.xlu0 %1423
        %1425 = vadd.xlane.f32.xlu0 %v1170
        %v1426 = vpop.xlane.xlu0 %1425
        %1427 = vadd.xlane.f32.xlu0 %v1172
        %v1428 = vpop.xlane.xlu0 %1427
        %1429 = vadd.xlane.f32.xlu0 %v1174
        %v1430 = vpop.xlane.xlu0 %1429
        %1431 = vadd.xlane.f32.xlu0 %v1176
        %v1432 = vpop.xlane.xlu0 %1431
        %1433 = vadd.xlane.f32.xlu0 %v1178
        %v1434 = vpop.xlane.xlu0 %1433
        %1435 = vadd.xlane.f32.xlu0 %v1180
        %v1436 = vpop.xlane.xlu0 %1435
        %1437 = vadd.xlane.f32.xlu0 %v1182
        %v1438 = vpop.xlane.xlu0 %1437
        %1439 = vadd.xlane.f32.xlu0 %v1184
        %v1440 = vpop.xlane.xlu0 %1439
        %1441 = vadd.xlane.f32.xlu0 %v1186
        %v1442 = vpop.xlane.xlu0 %1441
        %1443 = vadd.xlane.f32.xlu0 %v1188
        %v1444 = vpop.xlane.xlu0 %1443
        %1445 = vadd.xlane.f32.xlu0 %v1190
        %v1446 = vpop.xlane.xlu0 %1445
        %1447 = vadd.xlane.f32.xlu0 %v1192
        %v1448 = vpop.xlane.xlu0 %1447
        %1449 = vadd.xlane.f32.xlu0 %v1194
        %v1450 = vpop.xlane.xlu0 %1449
        %1451 = vadd.xlane.f32.xlu0 %v1196
        %v1452 = vpop.xlane.xlu0 %1451
        %1453 = vadd.xlane.f32.xlu0 %v1198
        %v1454 = vpop.xlane.xlu0 %1453
        %1455 = vadd.xlane.f32.xlu0 %v1200
        %v1456 = vpop.xlane.xlu0 %1455
        %1457 = vadd.xlane.f32.xlu0 %v1202
        %v1458 = vpop.xlane.xlu0 %1457
        %1459 = vadd.xlane.f32.xlu0 %v1204
        %v1460 = vpop.xlane.xlu0 %1459
        %1461 = vadd.xlane.f32.xlu0 %v1206
        %v1462 = vpop.xlane.xlu0 %1461
        %1463 = vadd.xlane.f32.xlu0 %v1208
        %v1464 = vpop.xlane.xlu0 %1463
        %1465 = vadd.xlane.f32.xlu0 %v1210
        %v1466 = vpop.xlane.xlu0 %1465
        %1467 = vadd.xlane.f32.xlu0 %v1212
        %v1468 = vpop.xlane.xlu0 %1467
        %1469 = vadd.xlane.f32.xlu0 %v1214
        %v1470 = vpop.xlane.xlu0 %1469
        %1471 = vadd.xlane.f32.xlu0 %v1216
        %v1472 = vpop.xlane.xlu0 %1471
        %1473 = vadd.xlane.f32.xlu0 %v1218
        %v1474 = vpop.xlane.xlu0 %1473
        %1475 = vadd.xlane.f32.xlu0 %v1220
        %v1476 = vpop.xlane.xlu0 %1475
        %1477 = vadd.xlane.f32.xlu0 %v1222
        %v1478 = vpop.xlane.xlu0 %1477
        %1479 = vadd.xlane.f32.xlu0 %v1224
        %v1480 = vpop.xlane.xlu0 %1479
        %1481 = vadd.xlane.f32.xlu0 %v1226
        %v1482 = vpop.xlane.xlu0 %1481
        %1483 = vadd.xlane.f32.xlu0 %v1228
        %v1484 = vpop.xlane.xlu0 %1483
        %1485 = vadd.xlane.f32.xlu0 %v1230
        %v1486 = vpop.xlane.xlu0 %1485
        %1487 = vadd.xlane.f32.xlu0 %v1232
        %v1488 = vpop.xlane.xlu0 %1487
        %1489 = vadd.xlane.f32.xlu0 %v1234
        %v1490 = vpop.xlane.xlu0 %1489
        %1491 = vadd.xlane.f32.xlu0 %v1236
        %v1492 = vpop.xlane.xlu0 %1491
        %1493 = vadd.xlane.f32.xlu0 %v1238
        %v1494 = vpop.xlane.xlu0 %1493
        %1495 = vadd.xlane.f32.xlu0 %v1240
        %v1496 = vpop.xlane.xlu0 %1495
        %1497 = vadd.xlane.f32.xlu0 %v1242
        %v1498 = vpop.xlane.xlu0 %1497
        %1499 = vadd.xlane.f32.xlu0 %v1244
        %v1500 = vpop.xlane.xlu0 %1499
        %1501 = vadd.xlane.f32.xlu0 %v1246
        %v1502 = vpop.xlane.xlu0 %1501
        %1503 = vadd.xlane.f32.xlu0 %v1248
        %v1504 = vpop.xlane.xlu0 %1503
        %1505 = vadd.xlane.f32.xlu0 %v1250
        %v1506 = vpop.xlane.xlu0 %1505
        %1507 = vadd.xlane.f32.xlu0 %v1252
        %v1508 = vpop.xlane.xlu0 %1507
        %1509 = vadd.xlane.f32.xlu0 %v1254
        %v1510 = vpop.xlane.xlu0 %1509
        %1511 = vadd.xlane.f32.xlu0 %v1256
        %v1512 = vpop.xlane.xlu0 %1511
        %1513 = vadd.xlane.f32.xlu0 %v1258
        %v1514 = vpop.xlane.xlu0 %1513
        %1515 = vadd.xlane.f32.xlu0 %v1260
        %v1516 = vpop.xlane.xlu0 %1515
        %1517 = vadd.xlane.f32.xlu0 %v1262
        %v1518 = vpop.xlane.xlu0 %1517
        %1519 = vadd.xlane.f32.xlu0 %v1264
        %v1520 = vpop.xlane.xlu0 %1519
        %1521 = vadd.xlane.f32.xlu0 %v1266
        %v1522 = vpop.xlane.xlu0 %1521
        %1523 = vadd.xlane.f32.xlu0 %v1268
        %v1524 = vpop.xlane.xlu0 %1523
        %1525 = vadd.xlane.f32.xlu0 %v1270
        %v1526 = vpop.xlane.xlu0 %1525
        %1527 = vadd.xlane.f32.xlu0 %v1272
        %v1528 = vpop.xlane.xlu0 %1527
        %1529 = vadd.xlane.f32.xlu0 %v1274
        %v1530 = vpop.xlane.xlu0 %1529
        %1531 = vadd.xlane.f32.xlu0 %v1276
        %v1532 = vpop.xlane.xlu0 %1531
        %1533 = vadd.xlane.f32.xlu0 %v1278
        %v1534 = vpop.xlane.xlu0 %1533
        %1535 = vadd.xlane.f32.xlu0 %v1280
        %v1536 = vpop.xlane.xlu0 %1535
        %1537 = vadd.xlane.f32.xlu0 %v1282
        %v1538 = vpop.xlane.xlu0 %1537
        %1539 = vadd.xlane.f32.xlu0 %v1284
        %v1540 = vpop.xlane.xlu0 %1539
        %1541 = vadd.xlane.f32.xlu0 %v1286
        %v1542 = vpop.xlane.xlu0 %1541
        %1543 = vadd.xlane.f32.xlu0 %v1288
        %v1544 = vpop.xlane.xlu0 %1543
        %1545 = vadd.xlane.f32.xlu0 %v1290
        %v1546 = vpop.xlane.xlu0 %1545
        %1547 = vadd.xlane.f32.xlu0 %v1292
        %v1548 = vpop.xlane.xlu0 %1547
        %1549 = vadd.xlane.f32.xlu0 %v1294
        %v1550 = vpop.xlane.xlu0 %1549
        %1551 = vadd.xlane.f32.xlu0 %v1296
        %v1552 = vpop.xlane.xlu0 %1551
        %1553 = vadd.xlane.f32.xlu0 %v1298
        %v1554 = vpop.xlane.xlu0 %1553
        %1555 = vadd.xlane.f32.xlu0 %v1300
        %v1556 = vpop.xlane.xlu0 %1555
        %1557 = vadd.xlane.f32.xlu0 %v1302
        %v1558 = vpop.xlane.xlu0 %1557
        %v1559 = vlog2.pop %v1304
        %v1560 = vmul.f32 %v1559, 0.6931472
        %v1561 = vlog2.pop %v1306
        %v1562 = vmul.f32 %v1561, 0.6931472
        %v1563 = vlog2.pop %v1308
        %v1564 = vmul.f32 %v1563, 0.6931472
        %v1565 = vlog2.pop %v1310
        %v1566 = vmul.f32 %v1565, 0.6931472
        %v1567 = vlog2.pop %v1312
        %v1568 = vmul.f32 %v1567, 0.6931472
        %v1569 = vlog2.pop %v1314
        %v1570 = vmul.f32 %v1569, 0.6931472
        %v1571 = vlog2.pop %v1316
        %v1572 = vmul.f32 %v1571, 0.6931472
        %v1573 = vlog2.pop %v1318
        %v1574 = vmul.f32 %v1573, 0.6931472
        %v1575 = vlog2.pop %v1320
        %v1576 = vmul.f32 %v1575, 0.6931472
        %v1577 = vlog2.pop %v1322
        %v1578 = vmul.f32 %v1577, 0.6931472
        %v1579 = vlog2.pop %v1324
        %v1580 = vmul.f32 %v1579, 0.6931472
        %v1581 = vlog2.pop %v1326
        %v1582 = vmul.f32 %v1581, 0.6931472
        %v1583 = vlog2.pop %v1328
        %v1584 = vmul.f32 %v1583, 0.6931472
        %v1585 = vlog2.pop %v1330
        %v1586 = vmul.f32 %v1585, 0.6931472
        %v1587 = vlog2.pop %v1332
        %v1588 = vmul.f32 %v1587, 0.6931472
        %v1589 = vlog2.pop %v1334
        %v1590 = vmul.f32 %v1589, 0.6931472
        %v1591 = vlog2.pop %v1336
        %v1592 = vmul.f32 %v1591, 0.6931472
        %v1593 = vlog2.pop %v1338
        %v1594 = vmul.f32 %v1593, 0.6931472
        %v1595 = vlog2.pop %v1340
        %v1596 = vmul.f32 %v1595, 0.6931472
        %v1597 = vlog2.pop %v1342
        %v1598 = vmul.f32 %v1597, 0.6931472
        %v1599 = vlog2.pop %v1344
        %v1600 = vmul.f32 %v1599, 0.6931472
        %v1601 = vlog2.pop %v1346
        %v1602 = vmul.f32 %v1601, 0.6931472
        %v1603 = vlog2.pop %v1348
        %v1604 = vmul.f32 %v1603, 0.6931472
        %v1605 = vlog2.pop %v1350
        %v1606 = vmul.f32 %v1605, 0.6931472
        %v1607 = vlog2.pop %v1352
        %v1608 = vmul.f32 %v1607, 0.6931472
        %v1609 = vlog2.pop %v1354
        %v1610 = vmul.f32 %v1609, 0.6931472
        %v1611 = vlog2.pop %v1356
        %v1612 = vmul.f32 %v1611, 0.6931472
        %v1613 = vlog2.pop %v1358
        %v1614 = vmul.f32 %v1613, 0.6931472
        %v1615 = vlog2.pop %v1360
        %v1616 = vmul.f32 %v1615, 0.6931472
        %v1617 = vlog2.pop %v1362
        %v1618 = vmul.f32 %v1617, 0.6931472
        %v1619 = vlog2.pop %v1364
        %v1620 = vmul.f32 %v1619, 0.6931472
        %v1621 = vlog2.pop %v1366
        %v1622 = vmul.f32 %v1621, 0.6931472
        %v1623 = vlog2.pop %v1368
        %v1624 = vmul.f32 %v1623, 0.6931472
        %v1625 = vlog2.pop %v1370
        %v1626 = vmul.f32 %v1625, 0.6931472
        %v1627 = vlog2.pop %v1372
        %v1628 = vmul.f32 %v1627, 0.6931472
        %v1629 = vlog2.pop %v1374
        %v1630 = vmul.f32 %v1629, 0.6931472
        %v1631 = vlog2.pop %v1376
        %v1632 = vmul.f32 %v1631, 0.6931472
        %v1633 = vlog2.pop %v1378
        %v1634 = vmul.f32 %v1633, 0.6931472
        %v1635 = vlog2.pop %v1380
        %v1636 = vmul.f32 %v1635, 0.6931472
        %v1637 = vlog2.pop %v1382
        %v1638 = vmul.f32 %v1637, 0.6931472
        %v1639 = vlog2.pop %v1384
        %v1640 = vmul.f32 %v1639, 0.6931472
        %v1641 = vlog2.pop %v1386
        %v1642 = vmul.f32 %v1641, 0.6931472
        %v1643 = vlog2.pop %v1388
        %v1644 = vmul.f32 %v1643, 0.6931472
        %v1645 = vlog2.pop %v1390
        %v1646 = vmul.f32 %v1645, 0.6931472
        %v1647 = vlog2.pop %v1392
        %v1648 = vmul.f32 %v1647, 0.6931472
        %v1649 = vlog2.pop %v1394
        %v1650 = vmul.f32 %v1649, 0.6931472
        %v1651 = vlog2.pop %v1396
        %v1652 = vmul.f32 %v1651, 0.6931472
        %v1653 = vlog2.pop %v1398
        %v1654 = vmul.f32 %v1653, 0.6931472
        %v1655 = vlog2.pop %v1400
        %v1656 = vmul.f32 %v1655, 0.6931472
        %v1657 = vlog2.pop %v1402
        %v1658 = vmul.f32 %v1657, 0.6931472
        %v1659 = vlog2.pop %v1404
        %v1660 = vmul.f32 %v1659, 0.6931472
        %v1661 = vlog2.pop %v1406
        %v1662 = vmul.f32 %v1661, 0.6931472
        %v1663 = vlog2.pop %v1408
        %v1664 = vmul.f32 %v1663, 0.6931472
        %v1665 = vlog2.pop %v1410
        %v1666 = vmul.f32 %v1665, 0.6931472
        %v1667 = vlog2.pop %v1412
        %v1668 = vmul.f32 %v1667, 0.6931472
        %v1669 = vlog2.pop %v1414
        %v1670 = vmul.f32 %v1669, 0.6931472
        %v1671 = vlog2.pop %v1416
        %v1672 = vmul.f32 %v1671, 0.6931472
        %v1673 = vlog2.pop %v1418
        %v1674 = vmul.f32 %v1673, 0.6931472
        %v1675 = vlog2.pop %v1420
        %v1676 = vmul.f32 %v1675, 0.6931472
        %v1677 = vlog2.pop %v1422
        %v1678 = vmul.f32 %v1677, 0.6931472
        %v1679 = vlog2.pop %v1424
        %v1680 = vmul.f32 %v1679, 0.6931472
        %v1681 = vlog2.pop %v1426
        %v1682 = vmul.f32 %v1681, 0.6931472
        %v1683 = vlog2.pop %v1428
        %v1684 = vmul.f32 %v1683, 0.6931472
        %v1685 = vlog2.pop %v1430
        %v1686 = vmul.f32 %v1685, 0.6931472
        %v1687 = vlog2.pop %v1432
        %v1688 = vmul.f32 %v1687, 0.6931472
        %v1689 = vlog2.pop %v1434
        %v1690 = vmul.f32 %v1689, 0.6931472
        %v1691 = vlog2.pop %v1436
        %v1692 = vmul.f32 %v1691, 0.6931472
        %v1693 = vlog2.pop %v1438
        %v1694 = vmul.f32 %v1693, 0.6931472
        %v1695 = vlog2.pop %v1440
        %v1696 = vmul.f32 %v1695, 0.6931472
        %v1697 = vlog2.pop %v1442
        %v1698 = vmul.f32 %v1697, 0.6931472
        %v1699 = vlog2.pop %v1444
        %v1700 = vmul.f32 %v1699, 0.6931472
        %v1701 = vlog2.pop %v1446
        %v1702 = vmul.f32 %v1701, 0.6931472
        %v1703 = vlog2.pop %v1448
        %v1704 = vmul.f32 %v1703, 0.6931472
        %v1705 = vlog2.pop %v1450
        %v1706 = vmul.f32 %v1705, 0.6931472
        %v1707 = vlog2.pop %v1452
        %v1708 = vmul.f32 %v1707, 0.6931472
        %v1709 = vlog2.pop %v1454
        %v1710 = vmul.f32 %v1709, 0.6931472
        %v1711 = vlog2.pop %v1456
        %v1712 = vmul.f32 %v1711, 0.6931472
        %v1713 = vlog2.pop %v1458
        %v1714 = vmul.f32 %v1713, 0.6931472
        %v1715 = vlog2.pop %v1460
        %v1716 = vmul.f32 %v1715, 0.6931472
        %v1717 = vlog2.pop %v1462
        %v1718 = vmul.f32 %v1717, 0.6931472
        %v1719 = vlog2.pop %v1464
        %v1720 = vmul.f32 %v1719, 0.6931472
        %v1721 = vlog2.pop %v1466
        %v1722 = vmul.f32 %v1721, 0.6931472
        %v1723 = vlog2.pop %v1468
        %v1724 = vmul.f32 %v1723, 0.6931472
        %v1725 = vlog2.pop %v1470
        %v1726 = vmul.f32 %v1725, 0.6931472
        %v1727 = vlog2.pop %v1472
        %v1728 = vmul.f32 %v1727, 0.6931472
        %v1729 = vlog2.pop %v1474
        %v1730 = vmul.f32 %v1729, 0.6931472
        %v1731 = vlog2.pop %v1476
        %v1732 = vmul.f32 %v1731, 0.6931472
        %v1733 = vlog2.pop %v1478
        %v1734 = vmul.f32 %v1733, 0.6931472
        %v1735 = vlog2.pop %v1480
        %v1736 = vmul.f32 %v1735, 0.6931472
        %v1737 = vlog2.pop %v1482
        %v1738 = vmul.f32 %v1737, 0.6931472
        %v1739 = vlog2.pop %v1484
        %v1740 = vmul.f32 %v1739, 0.6931472
        %v1741 = vlog2.pop %v1486
        %v1742 = vmul.f32 %v1741, 0.6931472
        %v1743 = vlog2.pop %v1488
        %v1744 = vmul.f32 %v1743, 0.6931472
        %v1745 = vlog2.pop %v1490
        %v1746 = vmul.f32 %v1745, 0.6931472
        %v1747 = vlog2.pop %v1492
        %v1748 = vmul.f32 %v1747, 0.6931472
        %v1749 = vlog2.pop %v1494
        %v1750 = vmul.f32 %v1749, 0.6931472
        %v1751 = vlog2.pop %v1496
        %v1752 = vmul.f32 %v1751, 0.6931472
        %v1753 = vlog2.pop %v1498
        %v1754 = vmul.f32 %v1753, 0.6931472
        %v1755 = vlog2.pop %v1500
        %v1756 = vmul.f32 %v1755, 0.6931472
        %v1757 = vlog2.pop %v1502
        %v1758 = vmul.f32 %v1757, 0.6931472
        %v1759 = vlog2.pop %v1504
        %v1760 = vmul.f32 %v1759, 0.6931472
        %v1761 = vlog2.pop %v1506
        %v1762 = vmul.f32 %v1761, 0.6931472
        %v1763 = vlog2.pop %v1508
        %v1764 = vmul.f32 %v1763, 0.6931472
        %v1765 = vlog2.pop %v1510
        %v1766 = vmul.f32 %v1765, 0.6931472
        %v1767 = vlog2.pop %v1512
        %v1768 = vmul.f32 %v1767, 0.6931472
        %v1769 = vlog2.pop %v1514
        %v1770 = vmul.f32 %v1769, 0.6931472
        %v1771 = vlog2.pop %v1516
        %v1772 = vmul.f32 %v1771, 0.6931472
        %v1773 = vlog2.pop %v1518
        %v1774 = vmul.f32 %v1773, 0.6931472
        %v1775 = vlog2.pop %v1520
        %v1776 = vmul.f32 %v1775, 0.6931472
        %v1777 = vlog2.pop %v1522
        %v1778 = vmul.f32 %v1777, 0.6931472
        %v1779 = vlog2.pop %v1524
        %v1780 = vmul.f32 %v1779, 0.6931472
        %v1781 = vlog2.pop %v1526
        %v1782 = vmul.f32 %v1781, 0.6931472
        %v1783 = vlog2.pop %v1528
        %v1784 = vmul.f32 %v1783, 0.6931472
        %v1785 = vlog2.pop %v1530
        %v1786 = vmul.f32 %v1785, 0.6931472
        %v1787 = vlog2.pop %v1532
        %v1788 = vmul.f32 %v1787, 0.6931472
        %v1789 = vlog2.pop %v1534
        %v1790 = vmul.f32 %v1789, 0.6931472
        %v1791 = vlog2.pop %v1536
        %v1792 = vmul.f32 %v1791, 0.6931472
        %v1793 = vlog2.pop %v1538
        %v1794 = vmul.f32 %v1793, 0.6931472
        %v1795 = vlog2.pop %v1540
        %v1796 = vmul.f32 %v1795, 0.6931472
        %v1797 = vlog2.pop %v1542
        %v1798 = vmul.f32 %v1797, 0.6931472
        %v1799 = vlog2.pop %v1544
        %v1800 = vmul.f32 %v1799, 0.6931472
        %v1801 = vlog2.pop %v1546
        %v1802 = vmul.f32 %v1801, 0.6931472
        %v1803 = vlog2.pop %v1548
        %v1804 = vmul.f32 %v1803, 0.6931472
        %v1805 = vlog2.pop %v1550
        %v1806 = vmul.f32 %v1805, 0.6931472
        %v1807 = vlog2.pop %v1552
        %v1808 = vmul.f32 %v1807, 0.6931472
        %v1809 = vlog2.pop %v1554
        %v1810 = vmul.f32 %v1809, 0.6931472
        %v1811 = vlog2.pop %v1556
        %v1812 = vmul.f32 %v1811, 0.6931472
        %v1813 = vlog2.pop %v1558
        %v1814 = vmul.f32 %v1813, 0.6931472
        %1815 = vadd.xlane.f32.xlu0 %v919
        %v1816 = vpop.xlane.xlu0 %1815
        %1817 = vadd.xlane.f32.xlu0 %v920
        %v1818 = vpop.xlane.xlu0 %1817
        %1819 = vadd.xlane.f32.xlu0 %v921
        %v1820 = vpop.xlane.xlu0 %1819
        %1821 = vadd.xlane.f32.xlu0 %v922
        %v1822 = vpop.xlane.xlu0 %1821
        %1823 = vadd.xlane.f32.xlu0 %v923
        %v1824 = vpop.xlane.xlu0 %1823
        %1825 = vadd.xlane.f32.xlu0 %v924
        %v1826 = vpop.xlane.xlu0 %1825
        %1827 = vadd.xlane.f32.xlu0 %v925
        %v1828 = vpop.xlane.xlu0 %1827
        %1829 = vadd.xlane.f32.xlu0 %v926
        %v1830 = vpop.xlane.xlu0 %1829
        %1831 = vadd.xlane.f32.xlu0 %v927
        %v1832 = vpop.xlane.xlu0 %1831
        %1833 = vadd.xlane.f32.xlu0 %v928
        %v1834 = vpop.xlane.xlu0 %1833
        %1835 = vadd.xlane.f32.xlu0 %v929
        %v1836 = vpop.xlane.xlu0 %1835
        %1837 = vadd.xlane.f32.xlu0 %v930
        %v1838 = vpop.xlane.xlu0 %1837
        %1839 = vadd.xlane.f32.xlu0 %v931
        %v1840 = vpop.xlane.xlu0 %1839
        %1841 = vadd.xlane.f32.xlu0 %v932
        %v1842 = vpop.xlane.xlu0 %1841
        %1843 = vadd.xlane.f32.xlu0 %v933
        %v1844 = vpop.xlane.xlu0 %1843
        %1845 = vadd.xlane.f32.xlu0 %v934
        %v1846 = vpop.xlane.xlu0 %1845
        %1847 = vadd.xlane.f32.xlu0 %v935
        %v1848 = vpop.xlane.xlu0 %1847
        %1849 = vadd.xlane.f32.xlu0 %v936
        %v1850 = vpop.xlane.xlu0 %1849
        %1851 = vadd.xlane.f32.xlu0 %v937
        %v1852 = vpop.xlane.xlu0 %1851
        %1853 = vadd.xlane.f32.xlu0 %v938
        %v1854 = vpop.xlane.xlu0 %1853
        %1855 = vadd.xlane.f32.xlu0 %v939
        %v1856 = vpop.xlane.xlu0 %1855
        %1857 = vadd.xlane.f32.xlu0 %v940
        %v1858 = vpop.xlane.xlu0 %1857
        %1859 = vadd.xlane.f32.xlu0 %v941
        %v1860 = vpop.xlane.xlu0 %1859
        %1861 = vadd.xlane.f32.xlu0 %v942
        %v1862 = vpop.xlane.xlu0 %1861
        %1863 = vadd.xlane.f32.xlu0 %v943
        %v1864 = vpop.xlane.xlu0 %1863
        %1865 = vadd.xlane.f32.xlu0 %v944
        %v1866 = vpop.xlane.xlu0 %1865
        %1867 = vadd.xlane.f32.xlu0 %v945
        %v1868 = vpop.xlane.xlu0 %1867
        %1869 = vadd.xlane.f32.xlu0 %v946
        %v1870 = vpop.xlane.xlu0 %1869
        %1871 = vadd.xlane.f32.xlu0 %v947
        %v1872 = vpop.xlane.xlu0 %1871
        %1873 = vadd.xlane.f32.xlu0 %v948
        %v1874 = vpop.xlane.xlu0 %1873
        %1875 = vadd.xlane.f32.xlu0 %v949
        %v1876 = vpop.xlane.xlu0 %1875
        %1877 = vadd.xlane.f32.xlu0 %v950
        %v1878 = vpop.xlane.xlu0 %1877
        %1879 = vadd.xlane.f32.xlu0 %v951
        %v1880 = vpop.xlane.xlu0 %1879
        %1881 = vadd.xlane.f32.xlu0 %v952
        %v1882 = vpop.xlane.xlu0 %1881
        %1883 = vadd.xlane.f32.xlu0 %v953
        %v1884 = vpop.xlane.xlu0 %1883
        %1885 = vadd.xlane.f32.xlu0 %v954
        %v1886 = vpop.xlane.xlu0 %1885
        %1887 = vadd.xlane.f32.xlu0 %v955
        %v1888 = vpop.xlane.xlu0 %1887
        %1889 = vadd.xlane.f32.xlu0 %v956
        %v1890 = vpop.xlane.xlu0 %1889
        %1891 = vadd.xlane.f32.xlu0 %v957
        %v1892 = vpop.xlane.xlu0 %1891
        %1893 = vadd.xlane.f32.xlu0 %v958
        %v1894 = vpop.xlane.xlu0 %1893
        %1895 = vadd.xlane.f32.xlu0 %v959
        %v1896 = vpop.xlane.xlu0 %1895
        %1897 = vadd.xlane.f32.xlu0 %v960
        %v1898 = vpop.xlane.xlu0 %1897
        %1899 = vadd.xlane.f32.xlu0 %v961
        %v1900 = vpop.xlane.xlu0 %1899
        %1901 = vadd.xlane.f32.xlu0 %v962
        %v1902 = vpop.xlane.xlu0 %1901
        %1903 = vadd.xlane.f32.xlu0 %v963
        %v1904 = vpop.xlane.xlu0 %1903
        %1905 = vadd.xlane.f32.xlu0 %v964
        %v1906 = vpop.xlane.xlu0 %1905
        %1907 = vadd.xlane.f32.xlu0 %v965
        %v1908 = vpop.xlane.xlu0 %1907
        %1909 = vadd.xlane.f32.xlu0 %v966
        %v1910 = vpop.xlane.xlu0 %1909
        %1911 = vadd.xlane.f32.xlu0 %v967
        %v1912 = vpop.xlane.xlu0 %1911
        %1913 = vadd.xlane.f32.xlu0 %v968
        %v1914 = vpop.xlane.xlu0 %1913
        %1915 = vadd.xlane.f32.xlu0 %v969
        %v1916 = vpop.xlane.xlu0 %1915
        %1917 = vadd.xlane.f32.xlu0 %v970
        %v1918 = vpop.xlane.xlu0 %1917
        %1919 = vadd.xlane.f32.xlu0 %v971
        %v1920 = vpop.xlane.xlu0 %1919
        %1921 = vadd.xlane.f32.xlu0 %v972
        %v1922 = vpop.xlane.xlu0 %1921
        %1923 = vadd.xlane.f32.xlu0 %v973
        %v1924 = vpop.xlane.xlu0 %1923
        %1925 = vadd.xlane.f32.xlu0 %v974
        %v1926 = vpop.xlane.xlu0 %1925
        %1927 = vadd.xlane.f32.xlu0 %v975
        %v1928 = vpop.xlane.xlu0 %1927
        %1929 = vadd.xlane.f32.xlu0 %v976
        %v1930 = vpop.xlane.xlu0 %1929
        %1931 = vadd.xlane.f32.xlu0 %v977
        %v1932 = vpop.xlane.xlu0 %1931
        %1933 = vadd.xlane.f32.xlu0 %v978
        %v1934 = vpop.xlane.xlu0 %1933
        %1935 = vadd.xlane.f32.xlu0 %v979
        %v1936 = vpop.xlane.xlu0 %1935
        %1937 = vadd.xlane.f32.xlu0 %v980
        %v1938 = vpop.xlane.xlu0 %1937
        %1939 = vadd.xlane.f32.xlu0 %v981
        %v1940 = vpop.xlane.xlu0 %1939
        %1941 = vadd.xlane.f32.xlu0 %v982
        %v1942 = vpop.xlane.xlu0 %1941
        %1943 = vadd.xlane.f32.xlu0 %v983
        %v1944 = vpop.xlane.xlu0 %1943
        %1945 = vadd.xlane.f32.xlu0 %v984
        %v1946 = vpop.xlane.xlu0 %1945
        %1947 = vadd.xlane.f32.xlu0 %v985
        %v1948 = vpop.xlane.xlu0 %1947
        %1949 = vadd.xlane.f32.xlu0 %v986
        %v1950 = vpop.xlane.xlu0 %1949
        %1951 = vadd.xlane.f32.xlu0 %v987
        %v1952 = vpop.xlane.xlu0 %1951
        %1953 = vadd.xlane.f32.xlu0 %v988
        %v1954 = vpop.xlane.xlu0 %1953
        %1955 = vadd.xlane.f32.xlu0 %v989
        %v1956 = vpop.xlane.xlu0 %1955
        %1957 = vadd.xlane.f32.xlu0 %v990
        %v1958 = vpop.xlane.xlu0 %1957
        %1959 = vadd.xlane.f32.xlu0 %v991
        %v1960 = vpop.xlane.xlu0 %1959
        %1961 = vadd.xlane.f32.xlu0 %v992
        %v1962 = vpop.xlane.xlu0 %1961
        %1963 = vadd.xlane.f32.xlu0 %v993
        %v1964 = vpop.xlane.xlu0 %1963
        %1965 = vadd.xlane.f32.xlu0 %v994
        %v1966 = vpop.xlane.xlu0 %1965
        %1967 = vadd.xlane.f32.xlu0 %v995
        %v1968 = vpop.xlane.xlu0 %1967
        %1969 = vadd.xlane.f32.xlu0 %v996
        %v1970 = vpop.xlane.xlu0 %1969
        %1971 = vadd.xlane.f32.xlu0 %v997
        %v1972 = vpop.xlane.xlu0 %1971
        %1973 = vadd.xlane.f32.xlu0 %v998
        %v1974 = vpop.xlane.xlu0 %1973
        %1975 = vadd.xlane.f32.xlu0 %v999
        %v1976 = vpop.xlane.xlu0 %1975
        %1977 = vadd.xlane.f32.xlu0 %v1000
        %v1978 = vpop.xlane.xlu0 %1977
        %1979 = vadd.xlane.f32.xlu0 %v1001
        %v1980 = vpop.xlane.xlu0 %1979
        %1981 = vadd.xlane.f32.xlu0 %v1002
        %v1982 = vpop.xlane.xlu0 %1981
        %1983 = vadd.xlane.f32.xlu0 %v1003
        %v1984 = vpop.xlane.xlu0 %1983
        %1985 = vadd.xlane.f32.xlu0 %v1004
        %v1986 = vpop.xlane.xlu0 %1985
        %1987 = vadd.xlane.f32.xlu0 %v1005
        %v1988 = vpop.xlane.xlu0 %1987
        %1989 = vadd.xlane.f32.xlu0 %v1006
        %v1990 = vpop.xlane.xlu0 %1989
        %1991 = vadd.xlane.f32.xlu0 %v1007
        %v1992 = vpop.xlane.xlu0 %1991
        %1993 = vadd.xlane.f32.xlu0 %v1008
        %v1994 = vpop.xlane.xlu0 %1993
        %1995 = vadd.xlane.f32.xlu0 %v1009
        %v1996 = vpop.xlane.xlu0 %1995
        %1997 = vadd.xlane.f32.xlu0 %v1010
        %v1998 = vpop.xlane.xlu0 %1997
        %1999 = vadd.xlane.f32.xlu0 %v1011
        %v2000 = vpop.xlane.xlu0 %1999
        %2001 = vadd.xlane.f32.xlu0 %v1012
        %v2002 = vpop.xlane.xlu0 %2001
        %2003 = vadd.xlane.f32.xlu0 %v1013
        %v2004 = vpop.xlane.xlu0 %2003
        %2005 = vadd.xlane.f32.xlu0 %v1014
        %v2006 = vpop.xlane.xlu0 %2005
        %2007 = vadd.xlane.f32.xlu0 %v1015
        %v2008 = vpop.xlane.xlu0 %2007
        %2009 = vadd.xlane.f32.xlu0 %v1016
        %v2010 = vpop.xlane.xlu0 %2009
        %2011 = vadd.xlane.f32.xlu0 %v1017
        %v2012 = vpop.xlane.xlu0 %2011
        %2013 = vadd.xlane.f32.xlu0 %v1018
        %v2014 = vpop.xlane.xlu0 %2013
        %2015 = vadd.xlane.f32.xlu0 %v1019
        %v2016 = vpop.xlane.xlu0 %2015
        %2017 = vadd.xlane.f32.xlu0 %v1020
        %v2018 = vpop.xlane.xlu0 %2017
        %2019 = vadd.xlane.f32.xlu0 %v1021
        %v2020 = vpop.xlane.xlu0 %2019
        %2021 = vadd.xlane.f32.xlu0 %v1022
        %v2022 = vpop.xlane.xlu0 %2021
        %2023 = vadd.xlane.f32.xlu0 %v1023
        %v2024 = vpop.xlane.xlu0 %2023
        %2025 = vadd.xlane.f32.xlu0 %v1024
        %v2026 = vpop.xlane.xlu0 %2025
        %2027 = vadd.xlane.f32.xlu0 %v1025
        %v2028 = vpop.xlane.xlu0 %2027
        %2029 = vadd.xlane.f32.xlu0 %v1026
        %v2030 = vpop.xlane.xlu0 %2029
        %2031 = vadd.xlane.f32.xlu0 %v1027
        %v2032 = vpop.xlane.xlu0 %2031
        %2033 = vadd.xlane.f32.xlu0 %v1028
        %v2034 = vpop.xlane.xlu0 %2033
        %2035 = vadd.xlane.f32.xlu0 %v1029
        %v2036 = vpop.xlane.xlu0 %2035
        %2037 = vadd.xlane.f32.xlu0 %v1030
        %v2038 = vpop.xlane.xlu0 %2037
        %2039 = vadd.xlane.f32.xlu0 %v1031
        %v2040 = vpop.xlane.xlu0 %2039
        %2041 = vadd.xlane.f32.xlu0 %v1032
        %v2042 = vpop.xlane.xlu0 %2041
        %2043 = vadd.xlane.f32.xlu0 %v1033
        %v2044 = vpop.xlane.xlu0 %2043
        %2045 = vadd.xlane.f32.xlu0 %v1034
        %v2046 = vpop.xlane.xlu0 %2045
        %2047 = vadd.xlane.f32.xlu0 %v1035
        %v2048 = vpop.xlane.xlu0 %2047
        %2049 = vadd.xlane.f32.xlu0 %v1036
        %v2050 = vpop.xlane.xlu0 %2049
        %2051 = vadd.xlane.f32.xlu0 %v1037
        %v2052 = vpop.xlane.xlu0 %2051
        %2053 = vadd.xlane.f32.xlu0 %v1038
        %v2054 = vpop.xlane.xlu0 %2053
        %2055 = vadd.xlane.f32.xlu0 %v1039
        %v2056 = vpop.xlane.xlu0 %2055
        %2057 = vadd.xlane.f32.xlu0 %v1040
        %v2058 = vpop.xlane.xlu0 %2057
        %2059 = vadd.xlane.f32.xlu0 %v1041
        %v2060 = vpop.xlane.xlu0 %2059
        %2061 = vadd.xlane.f32.xlu0 %v1042
        %v2062 = vpop.xlane.xlu0 %2061
        %2063 = vadd.xlane.f32.xlu0 %v1043
        %v2064 = vpop.xlane.xlu0 %2063
        %2065 = vadd.xlane.f32.xlu0 %v1044
        %v2066 = vpop.xlane.xlu0 %2065
        %2067 = vadd.xlane.f32.xlu0 %v1045
        %v2068 = vpop.xlane.xlu0 %2067
        %2069 = vadd.xlane.f32.xlu0 %v1046
        %v2070 = vpop.xlane.xlu0 %2069
        %v2071 = vlaneseq
        %v2072 = vand.u32 %v2071, 127
        %2073 = vset.pattern.permute.xlu0 0
        %2074 = vperm.xlu0 %2073, %v535
        %v2075 = vpop.permute.xlu0 %2074
        %2076 = vset.pattern.permute.xlu0 0
        %2077 = vperm.xlu0 %2076, %v536
        %v2078 = vpop.permute.xlu0 %2077
        %2079 = vset.pattern.permute.xlu0 0
        %2080 = vperm.xlu0 %2079, %v537
        %v2081 = vpop.permute.xlu0 %2080
        %2082 = vset.pattern.permute.xlu0 0
        %2083 = vperm.xlu0 %2082, %v538
        %v2084 = vpop.permute.xlu0 %2083
        %2085 = vset.pattern.permute.xlu0 0
        %2086 = vperm.xlu0 %2085, %v539
        %v2087 = vpop.permute.xlu0 %2086
        %2088 = vset.pattern.permute.xlu0 0
        %2089 = vperm.xlu0 %2088, %v540
        %v2090 = vpop.permute.xlu0 %2089
        %2091 = vset.pattern.permute.xlu0 0
        %2092 = vperm.xlu0 %2091, %v541
        %v2093 = vpop.permute.xlu0 %2092
        %2094 = vset.pattern.permute.xlu0 0
        %2095 = vperm.xlu0 %2094, %v542
        %v2096 = vpop.permute.xlu0 %2095
        %2097 = vset.pattern.permute.xlu0 0
        %2098 = vperm.xlu0 %2097, %v543
        %v2099 = vpop.permute.xlu0 %2098
        %2100 = vset.pattern.permute.xlu0 0
        %2101 = vperm.xlu0 %2100, %v544
        %v2102 = vpop.permute.xlu0 %2101
        %2103 = vset.pattern.permute.xlu0 0
        %2104 = vperm.xlu0 %2103, %v545
        %v2105 = vpop.permute.xlu0 %2104
        %2106 = vset.pattern.permute.xlu0 0
        %2107 = vperm.xlu0 %2106, %v546
        %v2108 = vpop.permute.xlu0 %2107
        %2109 = vset.pattern.permute.xlu0 0
        %2110 = vperm.xlu0 %2109, %v547
        %v2111 = vpop.permute.xlu0 %2110
        %2112 = vset.pattern.permute.xlu0 0
        %2113 = vperm.xlu0 %2112, %v548
        %v2114 = vpop.permute.xlu0 %2113
        %2115 = vset.pattern.permute.xlu0 0
        %2116 = vperm.xlu0 %2115, %v549
        %v2117 = vpop.permute.xlu0 %2116
        %2118 = vset.pattern.permute.xlu0 0
        %2119 = vperm.xlu0 %2118, %v550
        %v2120 = vpop.permute.xlu0 %2119
        %2121 = vset.pattern.permute.xlu0 0
        %2122 = vperm.xlu0 %2121, %v551
        %v2123 = vpop.permute.xlu0 %2122
        %2124 = vset.pattern.permute.xlu0 0
        %2125 = vperm.xlu0 %2124, %v552
        %v2126 = vpop.permute.xlu0 %2125
        %2127 = vset.pattern.permute.xlu0 0
        %2128 = vperm.xlu0 %2127, %v553
        %v2129 = vpop.permute.xlu0 %2128
        %2130 = vset.pattern.permute.xlu0 0
        %2131 = vperm.xlu0 %2130, %v554
        %v2132 = vpop.permute.xlu0 %2131
        %2133 = vset.pattern.permute.xlu0 0
        %2134 = vperm.xlu0 %2133, %v555
        %v2135 = vpop.permute.xlu0 %2134
        %2136 = vset.pattern.permute.xlu0 0
        %2137 = vperm.xlu0 %2136, %v556
        %v2138 = vpop.permute.xlu0 %2137
        %2139 = vset.pattern.permute.xlu0 0
        %2140 = vperm.xlu0 %2139, %v557
        %v2141 = vpop.permute.xlu0 %2140
        %2142 = vset.pattern.permute.xlu0 0
        %2143 = vperm.xlu0 %2142, %v558
        %v2144 = vpop.permute.xlu0 %2143
        %2145 = vset.pattern.permute.xlu0 0
        %2146 = vperm.xlu0 %2145, %v559
        %v2147 = vpop.permute.xlu0 %2146
        %2148 = vset.pattern.permute.xlu0 0
        %2149 = vperm.xlu0 %2148, %v560
        %v2150 = vpop.permute.xlu0 %2149
        %2151 = vset.pattern.permute.xlu0 0
        %2152 = vperm.xlu0 %2151, %v561
        %v2153 = vpop.permute.xlu0 %2152
        %2154 = vset.pattern.permute.xlu0 0
        %2155 = vperm.xlu0 %2154, %v562
        %v2156 = vpop.permute.xlu0 %2155
        %2157 = vset.pattern.permute.xlu0 0
        %2158 = vperm.xlu0 %2157, %v563
        %v2159 = vpop.permute.xlu0 %2158
        %2160 = vset.pattern.permute.xlu0 0
        %2161 = vperm.xlu0 %2160, %v564
        %v2162 = vpop.permute.xlu0 %2161
        %2163 = vset.pattern.permute.xlu0 0
        %2164 = vperm.xlu0 %2163, %v565
        %v2165 = vpop.permute.xlu0 %2164
        %2166 = vset.pattern.permute.xlu0 0
        %2167 = vperm.xlu0 %2166, %v566
        %v2168 = vpop.permute.xlu0 %2167
        %2169 = vset.pattern.permute.xlu0 0
        %2170 = vperm.xlu0 %2169, %v567
        %v2171 = vpop.permute.xlu0 %2170
        %2172 = vset.pattern.permute.xlu0 0
        %2173 = vperm.xlu0 %2172, %v568
        %v2174 = vpop.permute.xlu0 %2173
        %2175 = vset.pattern.permute.xlu0 0
        %2176 = vperm.xlu0 %2175, %v569
        %v2177 = vpop.permute.xlu0 %2176
        %2178 = vset.pattern.permute.xlu0 0
        %2179 = vperm.xlu0 %2178, %v570
        %v2180 = vpop.permute.xlu0 %2179
        %2181 = vset.pattern.permute.xlu0 0
        %2182 = vperm.xlu0 %2181, %v571
        %v2183 = vpop.permute.xlu0 %2182
        %2184 = vset.pattern.permute.xlu0 0
        %2185 = vperm.xlu0 %2184, %v572
        %v2186 = vpop.permute.xlu0 %2185
        %2187 = vset.pattern.permute.xlu0 0
        %2188 = vperm.xlu0 %2187, %v573
        %v2189 = vpop.permute.xlu0 %2188
        %2190 = vset.pattern.permute.xlu0 0
        %2191 = vperm.xlu0 %2190, %v574
        %v2192 = vpop.permute.xlu0 %2191
        %2193 = vset.pattern.permute.xlu0 0
        %2194 = vperm.xlu0 %2193, %v575
        %v2195 = vpop.permute.xlu0 %2194
        %2196 = vset.pattern.permute.xlu0 0
        %2197 = vperm.xlu0 %2196, %v576
        %v2198 = vpop.permute.xlu0 %2197
        %2199 = vset.pattern.permute.xlu0 0
        %2200 = vperm.xlu0 %2199, %v577
        %v2201 = vpop.permute.xlu0 %2200
        %2202 = vset.pattern.permute.xlu0 0
        %2203 = vperm.xlu0 %2202, %v578
        %v2204 = vpop.permute.xlu0 %2203
        %2205 = vset.pattern.permute.xlu0 0
        %2206 = vperm.xlu0 %2205, %v579
        %v2207 = vpop.permute.xlu0 %2206
        %2208 = vset.pattern.permute.xlu0 0
        %2209 = vperm.xlu0 %2208, %v580
        %v2210 = vpop.permute.xlu0 %2209
        %2211 = vset.pattern.permute.xlu0 0
        %2212 = vperm.xlu0 %2211, %v581
        %v2213 = vpop.permute.xlu0 %2212
        %2214 = vset.pattern.permute.xlu0 0
        %2215 = vperm.xlu0 %2214, %v582
        %v2216 = vpop.permute.xlu0 %2215
        %2217 = vset.pattern.permute.xlu0 0
        %2218 = vperm.xlu0 %2217, %v583
        %v2219 = vpop.permute.xlu0 %2218
        %2220 = vset.pattern.permute.xlu0 0
        %2221 = vperm.xlu0 %2220, %v584
        %v2222 = vpop.permute.xlu0 %2221
        %2223 = vset.pattern.permute.xlu0 0
        %2224 = vperm.xlu0 %2223, %v585
        %v2225 = vpop.permute.xlu0 %2224
        %2226 = vset.pattern.permute.xlu0 0
        %2227 = vperm.xlu0 %2226, %v586
        %v2228 = vpop.permute.xlu0 %2227
        %2229 = vset.pattern.permute.xlu0 0
        %2230 = vperm.xlu0 %2229, %v587
        %v2231 = vpop.permute.xlu0 %2230
        %2232 = vset.pattern.permute.xlu0 0
        %2233 = vperm.xlu0 %2232, %v588
        %v2234 = vpop.permute.xlu0 %2233
        %2235 = vset.pattern.permute.xlu0 0
        %2236 = vperm.xlu0 %2235, %v589
        %v2237 = vpop.permute.xlu0 %2236
        %2238 = vset.pattern.permute.xlu0 0
        %2239 = vperm.xlu0 %2238, %v590
        %v2240 = vpop.permute.xlu0 %2239
        %2241 = vset.pattern.permute.xlu0 0
        %2242 = vperm.xlu0 %2241, %v591
        %v2243 = vpop.permute.xlu0 %2242
        %2244 = vset.pattern.permute.xlu0 0
        %2245 = vperm.xlu0 %2244, %v592
        %v2246 = vpop.permute.xlu0 %2245
        %2247 = vset.pattern.permute.xlu0 0
        %2248 = vperm.xlu0 %2247, %v593
        %v2249 = vpop.permute.xlu0 %2248
        %2250 = vset.pattern.permute.xlu0 0
        %2251 = vperm.xlu0 %2250, %v594
        %v2252 = vpop.permute.xlu0 %2251
        %2253 = vset.pattern.permute.xlu0 0
        %2254 = vperm.xlu0 %2253, %v595
        %v2255 = vpop.permute.xlu0 %2254
        %2256 = vset.pattern.permute.xlu0 0
        %2257 = vperm.xlu0 %2256, %v596
        %v2258 = vpop.permute.xlu0 %2257
        %2259 = vset.pattern.permute.xlu0 0
        %2260 = vperm.xlu0 %2259, %v597
        %v2261 = vpop.permute.xlu0 %2260
        %2262 = vset.pattern.permute.xlu0 0
        %2263 = vperm.xlu0 %2262, %v598
        %v2264 = vpop.permute.xlu0 %2263
        %2265 = vset.pattern.permute.xlu0 0
        %2266 = vperm.xlu0 %2265, %v599
        %v2267 = vpop.permute.xlu0 %2266
        %2268 = vset.pattern.permute.xlu0 0
        %2269 = vperm.xlu0 %2268, %v600
        %v2270 = vpop.permute.xlu0 %2269
        %2271 = vset.pattern.permute.xlu0 0
        %2272 = vperm.xlu0 %2271, %v601
        %v2273 = vpop.permute.xlu0 %2272
        %2274 = vset.pattern.permute.xlu0 0
        %2275 = vperm.xlu0 %2274, %v602
        %v2276 = vpop.permute.xlu0 %2275
        %2277 = vset.pattern.permute.xlu0 0
        %2278 = vperm.xlu0 %2277, %v603
        %v2279 = vpop.permute.xlu0 %2278
        %2280 = vset.pattern.permute.xlu0 0
        %2281 = vperm.xlu0 %2280, %v604
        %v2282 = vpop.permute.xlu0 %2281
        %2283 = vset.pattern.permute.xlu0 0
        %2284 = vperm.xlu0 %2283, %v605
        %v2285 = vpop.permute.xlu0 %2284
        %2286 = vset.pattern.permute.xlu0 0
        %2287 = vperm.xlu0 %2286, %v606
        %v2288 = vpop.permute.xlu0 %2287
        %2289 = vset.pattern.permute.xlu0 0
        %2290 = vperm.xlu0 %2289, %v607
        %v2291 = vpop.permute.xlu0 %2290
        %2292 = vset.pattern.permute.xlu0 0
        %2293 = vperm.xlu0 %2292, %v608
        %v2294 = vpop.permute.xlu0 %2293
        %2295 = vset.pattern.permute.xlu0 0
        %2296 = vperm.xlu0 %2295, %v609
        %v2297 = vpop.permute.xlu0 %2296
        %2298 = vset.pattern.permute.xlu0 0
        %2299 = vperm.xlu0 %2298, %v610
        %v2300 = vpop.permute.xlu0 %2299
        %2301 = vset.pattern.permute.xlu0 0
        %2302 = vperm.xlu0 %2301, %v611
        %v2303 = vpop.permute.xlu0 %2302
        %2304 = vset.pattern.permute.xlu0 0
        %2305 = vperm.xlu0 %2304, %v612
        %v2306 = vpop.permute.xlu0 %2305
        %2307 = vset.pattern.permute.xlu0 0
        %2308 = vperm.xlu0 %2307, %v613
        %v2309 = vpop.permute.xlu0 %2308
        %2310 = vset.pattern.permute.xlu0 0
        %2311 = vperm.xlu0 %2310, %v614
        %v2312 = vpop.permute.xlu0 %2311
        %2313 = vset.pattern.permute.xlu0 0
        %2314 = vperm.xlu0 %2313, %v615
        %v2315 = vpop.permute.xlu0 %2314
        %2316 = vset.pattern.permute.xlu0 0
        %2317 = vperm.xlu0 %2316, %v616
        %v2318 = vpop.permute.xlu0 %2317
        %2319 = vset.pattern.permute.xlu0 0
        %2320 = vperm.xlu0 %2319, %v617
        %v2321 = vpop.permute.xlu0 %2320
        %2322 = vset.pattern.permute.xlu0 0
        %2323 = vperm.xlu0 %2322, %v618
        %v2324 = vpop.permute.xlu0 %2323
        %2325 = vset.pattern.permute.xlu0 0
        %2326 = vperm.xlu0 %2325, %v619
        %v2327 = vpop.permute.xlu0 %2326
        %2328 = vset.pattern.permute.xlu0 0
        %2329 = vperm.xlu0 %2328, %v620
        %v2330 = vpop.permute.xlu0 %2329
        %2331 = vset.pattern.permute.xlu0 0
        %2332 = vperm.xlu0 %2331, %v621
        %v2333 = vpop.permute.xlu0 %2332
        %2334 = vset.pattern.permute.xlu0 0
        %2335 = vperm.xlu0 %2334, %v622
        %v2336 = vpop.permute.xlu0 %2335
        %2337 = vset.pattern.permute.xlu0 0
        %2338 = vperm.xlu0 %2337, %v623
        %v2339 = vpop.permute.xlu0 %2338
        %2340 = vset.pattern.permute.xlu0 0
        %2341 = vperm.xlu0 %2340, %v624
        %v2342 = vpop.permute.xlu0 %2341
        %2343 = vset.pattern.permute.xlu0 0
        %2344 = vperm.xlu0 %2343, %v625
        %v2345 = vpop.permute.xlu0 %2344
        %2346 = vset.pattern.permute.xlu0 0
        %2347 = vperm.xlu0 %2346, %v626
        %v2348 = vpop.permute.xlu0 %2347
        %2349 = vset.pattern.permute.xlu0 0
        %2350 = vperm.xlu0 %2349, %v627
        %v2351 = vpop.permute.xlu0 %2350
        %2352 = vset.pattern.permute.xlu0 0
        %2353 = vperm.xlu0 %2352, %v628
        %v2354 = vpop.permute.xlu0 %2353
        %2355 = vset.pattern.permute.xlu0 0
        %2356 = vperm.xlu0 %2355, %v629
        %v2357 = vpop.permute.xlu0 %2356
        %2358 = vset.pattern.permute.xlu0 0
        %2359 = vperm.xlu0 %2358, %v630
        %v2360 = vpop.permute.xlu0 %2359
        %2361 = vset.pattern.permute.xlu0 0
        %2362 = vperm.xlu0 %2361, %v631
        %v2363 = vpop.permute.xlu0 %2362
        %2364 = vset.pattern.permute.xlu0 0
        %2365 = vperm.xlu0 %2364, %v632
        %v2366 = vpop.permute.xlu0 %2365
        %2367 = vset.pattern.permute.xlu0 0
        %2368 = vperm.xlu0 %2367, %v633
        %v2369 = vpop.permute.xlu0 %2368
        %2370 = vset.pattern.permute.xlu0 0
        %2371 = vperm.xlu0 %2370, %v634
        %v2372 = vpop.permute.xlu0 %2371
        %2373 = vset.pattern.permute.xlu0 0
        %2374 = vperm.xlu0 %2373, %v635
        %v2375 = vpop.permute.xlu0 %2374
        %2376 = vset.pattern.permute.xlu0 0
        %2377 = vperm.xlu0 %2376, %v636
        %v2378 = vpop.permute.xlu0 %2377
        %2379 = vset.pattern.permute.xlu0 0
        %2380 = vperm.xlu0 %2379, %v637
        %v2381 = vpop.permute.xlu0 %2380
        %2382 = vset.pattern.permute.xlu0 0
        %2383 = vperm.xlu0 %2382, %v638
        %v2384 = vpop.permute.xlu0 %2383
        %2385 = vset.pattern.permute.xlu0 0
        %2386 = vperm.xlu0 %2385, %v639
        %v2387 = vpop.permute.xlu0 %2386
        %2388 = vset.pattern.permute.xlu0 0
        %2389 = vperm.xlu0 %2388, %v640
        %v2390 = vpop.permute.xlu0 %2389
        %2391 = vset.pattern.permute.xlu0 0
        %2392 = vperm.xlu0 %2391, %v641
        %v2393 = vpop.permute.xlu0 %2392
        %2394 = vset.pattern.permute.xlu0 0
        %2395 = vperm.xlu0 %2394, %v642
        %v2396 = vpop.permute.xlu0 %2395
        %2397 = vset.pattern.permute.xlu0 0
        %2398 = vperm.xlu0 %2397, %v643
        %v2399 = vpop.permute.xlu0 %2398
        %2400 = vset.pattern.permute.xlu0 0
        %2401 = vperm.xlu0 %2400, %v644
        %v2402 = vpop.permute.xlu0 %2401
        %2403 = vset.pattern.permute.xlu0 0
        %2404 = vperm.xlu0 %2403, %v645
        %v2405 = vpop.permute.xlu0 %2404
        %2406 = vset.pattern.permute.xlu0 0
        %2407 = vperm.xlu0 %2406, %v646
        %v2408 = vpop.permute.xlu0 %2407
        %2409 = vset.pattern.permute.xlu0 0
        %2410 = vperm.xlu0 %2409, %v647
        %v2411 = vpop.permute.xlu0 %2410
        %2412 = vset.pattern.permute.xlu0 0
        %2413 = vperm.xlu0 %2412, %v648
        %v2414 = vpop.permute.xlu0 %2413
        %2415 = vset.pattern.permute.xlu0 0
        %2416 = vperm.xlu0 %2415, %v649
        %v2417 = vpop.permute.xlu0 %2416
        %2418 = vset.pattern.permute.xlu0 0
        %2419 = vperm.xlu0 %2418, %v650
        %v2420 = vpop.permute.xlu0 %2419
        %2421 = vset.pattern.permute.xlu0 0
        %2422 = vperm.xlu0 %2421, %v651
        %v2423 = vpop.permute.xlu0 %2422
        %2424 = vset.pattern.permute.xlu0 0
        %2425 = vperm.xlu0 %2424, %v652
        %v2426 = vpop.permute.xlu0 %2425
        %2427 = vset.pattern.permute.xlu0 0
        %2428 = vperm.xlu0 %2427, %v653
        %v2429 = vpop.permute.xlu0 %2428
        %2430 = vset.pattern.permute.xlu0 0
        %2431 = vperm.xlu0 %2430, %v654
        %v2432 = vpop.permute.xlu0 %2431
        %2433 = vset.pattern.permute.xlu0 0
        %2434 = vperm.xlu0 %2433, %v655
        %v2435 = vpop.permute.xlu0 %2434
        %2436 = vset.pattern.permute.xlu0 0
        %2437 = vperm.xlu0 %2436, %v656
        %v2438 = vpop.permute.xlu0 %2437
        %2439 = vset.pattern.permute.xlu0 0
        %2440 = vperm.xlu0 %2439, %v657
        %v2441 = vpop.permute.xlu0 %2440
        %2442 = vset.pattern.permute.xlu0 0
        %2443 = vperm.xlu0 %2442, %v658
        %v2444 = vpop.permute.xlu0 %2443
        %2445 = vset.pattern.permute.xlu0 0
        %2446 = vperm.xlu0 %2445, %v659
        %v2447 = vpop.permute.xlu0 %2446
        %2448 = vset.pattern.permute.xlu0 0
        %2449 = vperm.xlu0 %2448, %v660
        %v2450 = vpop.permute.xlu0 %2449
        %2451 = vset.pattern.permute.xlu0 0
        %2452 = vperm.xlu0 %2451, %v661
        %v2453 = vpop.permute.xlu0 %2452
        %2454 = vset.pattern.permute.xlu0 0
        %2455 = vperm.xlu0 %2454, %v662
        %v2456 = vpop.permute.xlu0 %2455
        %vm2457 = vcmp.eq.s32.totalorder %v2072, %v2075
        %vm2458 = vcmp.eq.s32.totalorder %v2072, %v2078
        %vm2459 = vcmp.eq.s32.totalorder %v2072, %v2081
        %vm2460 = vcmp.eq.s32.totalorder %v2072, %v2084
        %vm2461 = vcmp.eq.s32.totalorder %v2072, %v2087
        %vm2462 = vcmp.eq.s32.totalorder %v2072, %v2090
        %vm2463 = vcmp.eq.s32.totalorder %v2072, %v2093
        %vm2464 = vcmp.eq.s32.totalorder %v2072, %v2096
        %vm2465 = vcmp.eq.s32.totalorder %v2072, %v2099
        %vm2466 = vcmp.eq.s32.totalorder %v2072, %v2102
        %vm2467 = vcmp.eq.s32.totalorder %v2072, %v2105
        %vm2468 = vcmp.eq.s32.totalorder %v2072, %v2108
        %vm2469 = vcmp.eq.s32.totalorder %v2072, %v2111
        %vm2470 = vcmp.eq.s32.totalorder %v2072, %v2114
        %vm2471 = vcmp.eq.s32.totalorder %v2072, %v2117
        %vm2472 = vcmp.eq.s32.totalorder %v2072, %v2120
        %vm2473 = vcmp.eq.s32.totalorder %v2072, %v2123
        %vm2474 = vcmp.eq.s32.totalorder %v2072, %v2126
        %vm2475 = vcmp.eq.s32.totalorder %v2072, %v2129
        %vm2476 = vcmp.eq.s32.totalorder %v2072, %v2132
        %vm2477 = vcmp.eq.s32.totalorder %v2072, %v2135
        %vm2478 = vcmp.eq.s32.totalorder %v2072, %v2138
        %vm2479 = vcmp.eq.s32.totalorder %v2072, %v2141
        %vm2480 = vcmp.eq.s32.totalorder %v2072, %v2144
        %vm2481 = vcmp.eq.s32.totalorder %v2072, %v2147
        %vm2482 = vcmp.eq.s32.totalorder %v2072, %v2150
        %vm2483 = vcmp.eq.s32.totalorder %v2072, %v2153
        %vm2484 = vcmp.eq.s32.totalorder %v2072, %v2156
        %vm2485 = vcmp.eq.s32.totalorder %v2072, %v2159
        %vm2486 = vcmp.eq.s32.totalorder %v2072, %v2162
        %vm2487 = vcmp.eq.s32.totalorder %v2072, %v2165
        %vm2488 = vcmp.eq.s32.totalorder %v2072, %v2168
        %vm2489 = vcmp.eq.s32.totalorder %v2072, %v2171
        %vm2490 = vcmp.eq.s32.totalorder %v2072, %v2174
        %vm2491 = vcmp.eq.s32.totalorder %v2072, %v2177
        %vm2492 = vcmp.eq.s32.totalorder %v2072, %v2180
        %vm2493 = vcmp.eq.s32.totalorder %v2072, %v2183
        %vm2494 = vcmp.eq.s32.totalorder %v2072, %v2186
        %vm2495 = vcmp.eq.s32.totalorder %v2072, %v2189
        %vm2496 = vcmp.eq.s32.totalorder %v2072, %v2192
        %vm2497 = vcmp.eq.s32.totalorder %v2072, %v2195
        %vm2498 = vcmp.eq.s32.totalorder %v2072, %v2198
        %vm2499 = vcmp.eq.s32.totalorder %v2072, %v2201
        %vm2500 = vcmp.eq.s32.totalorder %v2072, %v2204
        %vm2501 = vcmp.eq.s32.totalorder %v2072, %v2207
        %vm2502 = vcmp.eq.s32.totalorder %v2072, %v2210
        %vm2503 = vcmp.eq.s32.totalorder %v2072, %v2213
        %vm2504 = vcmp.eq.s32.totalorder %v2072, %v2216
        %vm2505 = vcmp.eq.s32.totalorder %v2072, %v2219
        %vm2506 = vcmp.eq.s32.totalorder %v2072, %v2222
        %vm2507 = vcmp.eq.s32.totalorder %v2072, %v2225
        %vm2508 = vcmp.eq.s32.totalorder %v2072, %v2228
        %vm2509 = vcmp.eq.s32.totalorder %v2072, %v2231
        %vm2510 = vcmp.eq.s32.totalorder %v2072, %v2234
        %vm2511 = vcmp.eq.s32.totalorder %v2072, %v2237
        %vm2512 = vcmp.eq.s32.totalorder %v2072, %v2240
        %vm2513 = vcmp.eq.s32.totalorder %v2072, %v2243
        %vm2514 = vcmp.eq.s32.totalorder %v2072, %v2246
        %vm2515 = vcmp.eq.s32.totalorder %v2072, %v2249
        %vm2516 = vcmp.eq.s32.totalorder %v2072, %v2252
        %vm2517 = vcmp.eq.s32.totalorder %v2072, %v2255
        %vm2518 = vcmp.eq.s32.totalorder %v2072, %v2258
        %vm2519 = vcmp.eq.s32.totalorder %v2072, %v2261
        %vm2520 = vcmp.eq.s32.totalorder %v2072, %v2264
        %vm2521 = vcmp.eq.s32.totalorder %v2072, %v2267
        %vm2522 = vcmp.eq.s32.totalorder %v2072, %v2270
        %vm2523 = vcmp.eq.s32.totalorder %v2072, %v2273
        %vm2524 = vcmp.eq.s32.totalorder %v2072, %v2276
        %vm2525 = vcmp.eq.s32.totalorder %v2072, %v2279
        %vm2526 = vcmp.eq.s32.totalorder %v2072, %v2282
        %vm2527 = vcmp.eq.s32.totalorder %v2072, %v2285
        %vm2528 = vcmp.eq.s32.totalorder %v2072, %v2288
        %vm2529 = vcmp.eq.s32.totalorder %v2072, %v2291
        %vm2530 = vcmp.eq.s32.totalorder %v2072, %v2294
        %vm2531 = vcmp.eq.s32.totalorder %v2072, %v2297
        %vm2532 = vcmp.eq.s32.totalorder %v2072, %v2300
        %vm2533 = vcmp.eq.s32.totalorder %v2072, %v2303
        %vm2534 = vcmp.eq.s32.totalorder %v2072, %v2306
        %vm2535 = vcmp.eq.s32.totalorder %v2072, %v2309
        %vm2536 = vcmp.eq.s32.totalorder %v2072, %v2312
        %vm2537 = vcmp.eq.s32.totalorder %v2072, %v2315
        %vm2538 = vcmp.eq.s32.totalorder %v2072, %v2318
        %vm2539 = vcmp.eq.s32.totalorder %v2072, %v2321
        %vm2540 = vcmp.eq.s32.totalorder %v2072, %v2324
        %vm2541 = vcmp.eq.s32.totalorder %v2072, %v2327
        %vm2542 = vcmp.eq.s32.totalorder %v2072, %v2330
        %vm2543 = vcmp.eq.s32.totalorder %v2072, %v2333
        %vm2544 = vcmp.eq.s32.totalorder %v2072, %v2336
        %vm2545 = vcmp.eq.s32.totalorder %v2072, %v2339
        %vm2546 = vcmp.eq.s32.totalorder %v2072, %v2342
        %vm2547 = vcmp.eq.s32.totalorder %v2072, %v2345
        %vm2548 = vcmp.eq.s32.totalorder %v2072, %v2348
        %vm2549 = vcmp.eq.s32.totalorder %v2072, %v2351
        %vm2550 = vcmp.eq.s32.totalorder %v2072, %v2354
        %vm2551 = vcmp.eq.s32.totalorder %v2072, %v2357
        %vm2552 = vcmp.eq.s32.totalorder %v2072, %v2360
        %vm2553 = vcmp.eq.s32.totalorder %v2072, %v2363
        %vm2554 = vcmp.eq.s32.totalorder %v2072, %v2366
        %vm2555 = vcmp.eq.s32.totalorder %v2072, %v2369
        %vm2556 = vcmp.eq.s32.totalorder %v2072, %v2372
        %vm2557 = vcmp.eq.s32.totalorder %v2072, %v2375
        %vm2558 = vcmp.eq.s32.totalorder %v2072, %v2378
        %vm2559 = vcmp.eq.s32.totalorder %v2072, %v2381
        %vm2560 = vcmp.eq.s32.totalorder %v2072, %v2384
        %vm2561 = vcmp.eq.s32.totalorder %v2072, %v2387
        %vm2562 = vcmp.eq.s32.totalorder %v2072, %v2390
        %vm2563 = vcmp.eq.s32.totalorder %v2072, %v2393
        %vm2564 = vcmp.eq.s32.totalorder %v2072, %v2396
        %vm2565 = vcmp.eq.s32.totalorder %v2072, %v2399
        %vm2566 = vcmp.eq.s32.totalorder %v2072, %v2402
        %vm2567 = vcmp.eq.s32.totalorder %v2072, %v2405
        %vm2568 = vcmp.eq.s32.totalorder %v2072, %v2408
        %vm2569 = vcmp.eq.s32.totalorder %v2072, %v2411
        %vm2570 = vcmp.eq.s32.totalorder %v2072, %v2414
        %vm2571 = vcmp.eq.s32.totalorder %v2072, %v2417
        %vm2572 = vcmp.eq.s32.totalorder %v2072, %v2420
        %vm2573 = vcmp.eq.s32.totalorder %v2072, %v2423
        %vm2574 = vcmp.eq.s32.totalorder %v2072, %v2426
        %vm2575 = vcmp.eq.s32.totalorder %v2072, %v2429
        %vm2576 = vcmp.eq.s32.totalorder %v2072, %v2432
        %vm2577 = vcmp.eq.s32.totalorder %v2072, %v2435
        %vm2578 = vcmp.eq.s32.totalorder %v2072, %v2438
        %vm2579 = vcmp.eq.s32.totalorder %v2072, %v2441
        %vm2580 = vcmp.eq.s32.totalorder %v2072, %v2444
        %vm2581 = vcmp.eq.s32.totalorder %v2072, %v2447
        %vm2582 = vcmp.eq.s32.totalorder %v2072, %v2450
        %vm2583 = vcmp.eq.s32.totalorder %v2072, %v2453
        %vm2584 = vcmp.eq.s32.totalorder %v2072, %v2456
        %v2585 = vsel %vm2457, %v919, 0.0
        %v2586 = vsel %vm2458, %v920, 0.0
        %v2587 = vsel %vm2459, %v921, 0.0
        %v2588 = vsel %vm2460, %v922, 0.0
        %v2589 = vsel %vm2461, %v923, 0.0
        %v2590 = vsel %vm2462, %v924, 0.0
        %v2591 = vsel %vm2463, %v925, 0.0
        %v2592 = vsel %vm2464, %v926, 0.0
        %v2593 = vsel %vm2465, %v927, 0.0
        %v2594 = vsel %vm2466, %v928, 0.0
        %v2595 = vsel %vm2467, %v929, 0.0
        %v2596 = vsel %vm2468, %v930, 0.0
        %v2597 = vsel %vm2469, %v931, 0.0
        %v2598 = vsel %vm2470, %v932, 0.0
        %v2599 = vsel %vm2471, %v933, 0.0
        %v2600 = vsel %vm2472, %v934, 0.0
        %v2601 = vsel %vm2473, %v935, 0.0
        %v2602 = vsel %vm2474, %v936, 0.0
        %v2603 = vsel %vm2475, %v937, 0.0
        %v2604 = vsel %vm2476, %v938, 0.0
        %v2605 = vsel %vm2477, %v939, 0.0
        %v2606 = vsel %vm2478, %v940, 0.0
        %v2607 = vsel %vm2479, %v941, 0.0
        %v2608 = vsel %vm2480, %v942, 0.0
        %v2609 = vsel %vm2481, %v943, 0.0
        %v2610 = vsel %vm2482, %v944, 0.0
        %v2611 = vsel %vm2483, %v945, 0.0
        %v2612 = vsel %vm2484, %v946, 0.0
        %v2613 = vsel %vm2485, %v947, 0.0
        %v2614 = vsel %vm2486, %v948, 0.0
        %v2615 = vsel %vm2487, %v949, 0.0
        %v2616 = vsel %vm2488, %v950, 0.0
        %v2617 = vsel %vm2489, %v951, 0.0
        %v2618 = vsel %vm2490, %v952, 0.0
        %v2619 = vsel %vm2491, %v953, 0.0
        %v2620 = vsel %vm2492, %v954, 0.0
        %v2621 = vsel %vm2493, %v955, 0.0
        %v2622 = vsel %vm2494, %v956, 0.0
        %v2623 = vsel %vm2495, %v957, 0.0
        %v2624 = vsel %vm2496, %v958, 0.0
        %v2625 = vsel %vm2497, %v959, 0.0
        %v2626 = vsel %vm2498, %v960, 0.0
        %v2627 = vsel %vm2499, %v961, 0.0
        %v2628 = vsel %vm2500, %v962, 0.0
        %v2629 = vsel %vm2501, %v963, 0.0
        %v2630 = vsel %vm2502, %v964, 0.0
        %v2631 = vsel %vm2503, %v965, 0.0
        %v2632 = vsel %vm2504, %v966, 0.0
        %v2633 = vsel %vm2505, %v967, 0.0
        %v2634 = vsel %vm2506, %v968, 0.0
        %v2635 = vsel %vm2507, %v969, 0.0
        %v2636 = vsel %vm2508, %v970, 0.0
        %v2637 = vsel %vm2509, %v971, 0.0
        %v2638 = vsel %vm2510, %v972, 0.0
        %v2639 = vsel %vm2511, %v973, 0.0
        %v2640 = vsel %vm2512, %v974, 0.0
        %v2641 = vsel %vm2513, %v975, 0.0
        %v2642 = vsel %vm2514, %v976, 0.0
        %v2643 = vsel %vm2515, %v977, 0.0
        %v2644 = vsel %vm2516, %v978, 0.0
        %v2645 = vsel %vm2517, %v979, 0.0
        %v2646 = vsel %vm2518, %v980, 0.0
        %v2647 = vsel %vm2519, %v981, 0.0
        %v2648 = vsel %vm2520, %v982, 0.0
        %v2649 = vsel %vm2521, %v983, 0.0
        %v2650 = vsel %vm2522, %v984, 0.0
        %v2651 = vsel %vm2523, %v985, 0.0
        %v2652 = vsel %vm2524, %v986, 0.0
        %v2653 = vsel %vm2525, %v987, 0.0
        %v2654 = vsel %vm2526, %v988, 0.0
        %v2655 = vsel %vm2527, %v989, 0.0
        %v2656 = vsel %vm2528, %v990, 0.0
        %v2657 = vsel %vm2529, %v991, 0.0
        %v2658 = vsel %vm2530, %v992, 0.0
        %v2659 = vsel %vm2531, %v993, 0.0
        %v2660 = vsel %vm2532, %v994, 0.0
        %v2661 = vsel %vm2533, %v995, 0.0
        %v2662 = vsel %vm2534, %v996, 0.0
        %v2663 = vsel %vm2535, %v997, 0.0
        %v2664 = vsel %vm2536, %v998, 0.0
        %v2665 = vsel %vm2537, %v999, 0.0
        %v2666 = vsel %vm2538, %v1000, 0.0
        %v2667 = vsel %vm2539, %v1001, 0.0
        %v2668 = vsel %vm2540, %v1002, 0.0
        %v2669 = vsel %vm2541, %v1003, 0.0
        %v2670 = vsel %vm2542, %v1004, 0.0
        %v2671 = vsel %vm2543, %v1005, 0.0
        %v2672 = vsel %vm2544, %v1006, 0.0
        %v2673 = vsel %vm2545, %v1007, 0.0
        %v2674 = vsel %vm2546, %v1008, 0.0
        %v2675 = vsel %vm2547, %v1009, 0.0
        %v2676 = vsel %vm2548, %v1010, 0.0
        %v2677 = vsel %vm2549, %v1011, 0.0
        %v2678 = vsel %vm2550, %v1012, 0.0
        %v2679 = vsel %vm2551, %v1013, 0.0
        %v2680 = vsel %vm2552, %v1014, 0.0
        %v2681 = vsel %vm2553, %v1015, 0.0
        %v2682 = vsel %vm2554, %v1016, 0.0
        %v2683 = vsel %vm2555, %v1017, 0.0
        %v2684 = vsel %vm2556, %v1018, 0.0
        %v2685 = vsel %vm2557, %v1019, 0.0
        %v2686 = vsel %vm2558, %v1020, 0.0
        %v2687 = vsel %vm2559, %v1021, 0.0
        %v2688 = vsel %vm2560, %v1022, 0.0
        %v2689 = vsel %vm2561, %v1023, 0.0
        %v2690 = vsel %vm2562, %v1024, 0.0
        %v2691 = vsel %vm2563, %v1025, 0.0
        %v2692 = vsel %vm2564, %v1026, 0.0
        %v2693 = vsel %vm2565, %v1027, 0.0
        %v2694 = vsel %vm2566, %v1028, 0.0
        %v2695 = vsel %vm2567, %v1029, 0.0
        %v2696 = vsel %vm2568, %v1030, 0.0
        %v2697 = vsel %vm2569, %v1031, 0.0
        %v2698 = vsel %vm2570, %v1032, 0.0
        %v2699 = vsel %vm2571, %v1033, 0.0
        %v2700 = vsel %vm2572, %v1034, 0.0
        %v2701 = vsel %vm2573, %v1035, 0.0
        %v2702 = vsel %vm2574, %v1036, 0.0
        %v2703 = vsel %vm2575, %v1037, 0.0
        %v2704 = vsel %vm2576, %v1038, 0.0
        %v2705 = vsel %vm2577, %v1039, 0.0
        %v2706 = vsel %vm2578, %v1040, 0.0
        %v2707 = vsel %vm2579, %v1041, 0.0
        %v2708 = vsel %vm2580, %v1042, 0.0
        %v2709 = vsel %vm2581, %v1043, 0.0
        %v2710 = vsel %vm2582, %v1044, 0.0
        %v2711 = vsel %vm2583, %v1045, 0.0
        %v2712 = vsel %vm2584, %v1046, 0.0
        %2713 = vadd.xlane.f32.xlu0 %v2585
        %v2714 = vpop.xlane.xlu0 %2713
        %2715 = vadd.xlane.f32.xlu0 %v2586
        %v2716 = vpop.xlane.xlu0 %2715
        %2717 = vadd.xlane.f32.xlu0 %v2587
        %v2718 = vpop.xlane.xlu0 %2717
        %2719 = vadd.xlane.f32.xlu0 %v2588
        %v2720 = vpop.xlane.xlu0 %2719
        %2721 = vadd.xlane.f32.xlu0 %v2589
        %v2722 = vpop.xlane.xlu0 %2721
        %2723 = vadd.xlane.f32.xlu0 %v2590
        %v2724 = vpop.xlane.xlu0 %2723
        %2725 = vadd.xlane.f32.xlu0 %v2591
        %v2726 = vpop.xlane.xlu0 %2725
        %2727 = vadd.xlane.f32.xlu0 %v2592
        %v2728 = vpop.xlane.xlu0 %2727
        %2729 = vadd.xlane.f32.xlu0 %v2593
        %v2730 = vpop.xlane.xlu0 %2729
        %2731 = vadd.xlane.f32.xlu0 %v2594
        %v2732 = vpop.xlane.xlu0 %2731
        %2733 = vadd.xlane.f32.xlu0 %v2595
        %v2734 = vpop.xlane.xlu0 %2733
        %2735 = vadd.xlane.f32.xlu0 %v2596
        %v2736 = vpop.xlane.xlu0 %2735
        %2737 = vadd.xlane.f32.xlu0 %v2597
        %v2738 = vpop.xlane.xlu0 %2737
        %2739 = vadd.xlane.f32.xlu0 %v2598
        %v2740 = vpop.xlane.xlu0 %2739
        %2741 = vadd.xlane.f32.xlu0 %v2599
        %v2742 = vpop.xlane.xlu0 %2741
        %2743 = vadd.xlane.f32.xlu0 %v2600
        %v2744 = vpop.xlane.xlu0 %2743
        %2745 = vadd.xlane.f32.xlu0 %v2601
        %v2746 = vpop.xlane.xlu0 %2745
        %2747 = vadd.xlane.f32.xlu0 %v2602
        %v2748 = vpop.xlane.xlu0 %2747
        %2749 = vadd.xlane.f32.xlu0 %v2603
        %v2750 = vpop.xlane.xlu0 %2749
        %2751 = vadd.xlane.f32.xlu0 %v2604
        %v2752 = vpop.xlane.xlu0 %2751
        %2753 = vadd.xlane.f32.xlu0 %v2605
        %v2754 = vpop.xlane.xlu0 %2753
        %2755 = vadd.xlane.f32.xlu0 %v2606
        %v2756 = vpop.xlane.xlu0 %2755
        %2757 = vadd.xlane.f32.xlu0 %v2607
        %v2758 = vpop.xlane.xlu0 %2757
        %2759 = vadd.xlane.f32.xlu0 %v2608
        %v2760 = vpop.xlane.xlu0 %2759
        %2761 = vadd.xlane.f32.xlu0 %v2609
        %v2762 = vpop.xlane.xlu0 %2761
        %2763 = vadd.xlane.f32.xlu0 %v2610
        %v2764 = vpop.xlane.xlu0 %2763
        %2765 = vadd.xlane.f32.xlu0 %v2611
        %v2766 = vpop.xlane.xlu0 %2765
        %2767 = vadd.xlane.f32.xlu0 %v2612
        %v2768 = vpop.xlane.xlu0 %2767
        %2769 = vadd.xlane.f32.xlu0 %v2613
        %v2770 = vpop.xlane.xlu0 %2769
        %2771 = vadd.xlane.f32.xlu0 %v2614
        %v2772 = vpop.xlane.xlu0 %2771
        %2773 = vadd.xlane.f32.xlu0 %v2615
        %v2774 = vpop.xlane.xlu0 %2773
        %2775 = vadd.xlane.f32.xlu0 %v2616
        %v2776 = vpop.xlane.xlu0 %2775
        %2777 = vadd.xlane.f32.xlu0 %v2617
        %v2778 = vpop.xlane.xlu0 %2777
        %2779 = vadd.xlane.f32.xlu0 %v2618
        %v2780 = vpop.xlane.xlu0 %2779
        %2781 = vadd.xlane.f32.xlu0 %v2619
        %v2782 = vpop.xlane.xlu0 %2781
        %2783 = vadd.xlane.f32.xlu0 %v2620
        %v2784 = vpop.xlane.xlu0 %2783
        %2785 = vadd.xlane.f32.xlu0 %v2621
        %v2786 = vpop.xlane.xlu0 %2785
        %2787 = vadd.xlane.f32.xlu0 %v2622
        %v2788 = vpop.xlane.xlu0 %2787
        %2789 = vadd.xlane.f32.xlu0 %v2623
        %v2790 = vpop.xlane.xlu0 %2789
        %2791 = vadd.xlane.f32.xlu0 %v2624
        %v2792 = vpop.xlane.xlu0 %2791
        %2793 = vadd.xlane.f32.xlu0 %v2625
        %v2794 = vpop.xlane.xlu0 %2793
        %2795 = vadd.xlane.f32.xlu0 %v2626
        %v2796 = vpop.xlane.xlu0 %2795
        %2797 = vadd.xlane.f32.xlu0 %v2627
        %v2798 = vpop.xlane.xlu0 %2797
        %2799 = vadd.xlane.f32.xlu0 %v2628
        %v2800 = vpop.xlane.xlu0 %2799
        %2801 = vadd.xlane.f32.xlu0 %v2629
        %v2802 = vpop.xlane.xlu0 %2801
        %2803 = vadd.xlane.f32.xlu0 %v2630
        %v2804 = vpop.xlane.xlu0 %2803
        %2805 = vadd.xlane.f32.xlu0 %v2631
        %v2806 = vpop.xlane.xlu0 %2805
        %2807 = vadd.xlane.f32.xlu0 %v2632
        %v2808 = vpop.xlane.xlu0 %2807
        %2809 = vadd.xlane.f32.xlu0 %v2633
        %v2810 = vpop.xlane.xlu0 %2809
        %2811 = vadd.xlane.f32.xlu0 %v2634
        %v2812 = vpop.xlane.xlu0 %2811
        %2813 = vadd.xlane.f32.xlu0 %v2635
        %v2814 = vpop.xlane.xlu0 %2813
        %2815 = vadd.xlane.f32.xlu0 %v2636
        %v2816 = vpop.xlane.xlu0 %2815
        %2817 = vadd.xlane.f32.xlu0 %v2637
        %v2818 = vpop.xlane.xlu0 %2817
        %2819 = vadd.xlane.f32.xlu0 %v2638
        %v2820 = vpop.xlane.xlu0 %2819
        %2821 = vadd.xlane.f32.xlu0 %v2639
        %v2822 = vpop.xlane.xlu0 %2821
        %2823 = vadd.xlane.f32.xlu0 %v2640
        %v2824 = vpop.xlane.xlu0 %2823
        %2825 = vadd.xlane.f32.xlu0 %v2641
        %v2826 = vpop.xlane.xlu0 %2825
        %2827 = vadd.xlane.f32.xlu0 %v2642
        %v2828 = vpop.xlane.xlu0 %2827
        %2829 = vadd.xlane.f32.xlu0 %v2643
        %v2830 = vpop.xlane.xlu0 %2829
        %2831 = vadd.xlane.f32.xlu0 %v2644
        %v2832 = vpop.xlane.xlu0 %2831
        %2833 = vadd.xlane.f32.xlu0 %v2645
        %v2834 = vpop.xlane.xlu0 %2833
        %2835 = vadd.xlane.f32.xlu0 %v2646
        %v2836 = vpop.xlane.xlu0 %2835
        %2837 = vadd.xlane.f32.xlu0 %v2647
        %v2838 = vpop.xlane.xlu0 %2837
        %2839 = vadd.xlane.f32.xlu0 %v2648
        %v2840 = vpop.xlane.xlu0 %2839
        %2841 = vadd.xlane.f32.xlu0 %v2649
        %v2842 = vpop.xlane.xlu0 %2841
        %2843 = vadd.xlane.f32.xlu0 %v2650
        %v2844 = vpop.xlane.xlu0 %2843
        %2845 = vadd.xlane.f32.xlu0 %v2651
        %v2846 = vpop.xlane.xlu0 %2845
        %2847 = vadd.xlane.f32.xlu0 %v2652
        %v2848 = vpop.xlane.xlu0 %2847
        %2849 = vadd.xlane.f32.xlu0 %v2653
        %v2850 = vpop.xlane.xlu0 %2849
        %2851 = vadd.xlane.f32.xlu0 %v2654
        %v2852 = vpop.xlane.xlu0 %2851
        %2853 = vadd.xlane.f32.xlu0 %v2655
        %v2854 = vpop.xlane.xlu0 %2853
        %2855 = vadd.xlane.f32.xlu0 %v2656
        %v2856 = vpop.xlane.xlu0 %2855
        %2857 = vadd.xlane.f32.xlu0 %v2657
        %v2858 = vpop.xlane.xlu0 %2857
        %2859 = vadd.xlane.f32.xlu0 %v2658
        %v2860 = vpop.xlane.xlu0 %2859
        %2861 = vadd.xlane.f32.xlu0 %v2659
        %v2862 = vpop.xlane.xlu0 %2861
        %2863 = vadd.xlane.f32.xlu0 %v2660
        %v2864 = vpop.xlane.xlu0 %2863
        %2865 = vadd.xlane.f32.xlu0 %v2661
        %v2866 = vpop.xlane.xlu0 %2865
        %2867 = vadd.xlane.f32.xlu0 %v2662
        %v2868 = vpop.xlane.xlu0 %2867
        %2869 = vadd.xlane.f32.xlu0 %v2663
        %v2870 = vpop.xlane.xlu0 %2869
        %2871 = vadd.xlane.f32.xlu0 %v2664
        %v2872 = vpop.xlane.xlu0 %2871
        %2873 = vadd.xlane.f32.xlu0 %v2665
        %v2874 = vpop.xlane.xlu0 %2873
        %2875 = vadd.xlane.f32.xlu0 %v2666
        %v2876 = vpop.xlane.xlu0 %2875
        %2877 = vadd.xlane.f32.xlu0 %v2667
        %v2878 = vpop.xlane.xlu0 %2877
        %2879 = vadd.xlane.f32.xlu0 %v2668
        %v2880 = vpop.xlane.xlu0 %2879
        %2881 = vadd.xlane.f32.xlu0 %v2669
        %v2882 = vpop.xlane.xlu0 %2881
        %2883 = vadd.xlane.f32.xlu0 %v2670
        %v2884 = vpop.xlane.xlu0 %2883
        %2885 = vadd.xlane.f32.xlu0 %v2671
        %v2886 = vpop.xlane.xlu0 %2885
        %2887 = vadd.xlane.f32.xlu0 %v2672
        %v2888 = vpop.xlane.xlu0 %2887
        %2889 = vadd.xlane.f32.xlu0 %v2673
        %v2890 = vpop.xlane.xlu0 %2889
        %2891 = vadd.xlane.f32.xlu0 %v2674
        %v2892 = vpop.xlane.xlu0 %2891
        %2893 = vadd.xlane.f32.xlu0 %v2675
        %v2894 = vpop.xlane.xlu0 %2893
        %2895 = vadd.xlane.f32.xlu0 %v2676
        %v2896 = vpop.xlane.xlu0 %2895
        %2897 = vadd.xlane.f32.xlu0 %v2677
        %v2898 = vpop.xlane.xlu0 %2897
        %2899 = vadd.xlane.f32.xlu0 %v2678
        %v2900 = vpop.xlane.xlu0 %2899
        %2901 = vadd.xlane.f32.xlu0 %v2679
        %v2902 = vpop.xlane.xlu0 %2901
        %2903 = vadd.xlane.f32.xlu0 %v2680
        %v2904 = vpop.xlane.xlu0 %2903
        %2905 = vadd.xlane.f32.xlu0 %v2681
        %v2906 = vpop.xlane.xlu0 %2905
        %2907 = vadd.xlane.f32.xlu0 %v2682
        %v2908 = vpop.xlane.xlu0 %2907
        %2909 = vadd.xlane.f32.xlu0 %v2683
        %v2910 = vpop.xlane.xlu0 %2909
        %2911 = vadd.xlane.f32.xlu0 %v2684
        %v2912 = vpop.xlane.xlu0 %2911
        %2913 = vadd.xlane.f32.xlu0 %v2685
        %v2914 = vpop.xlane.xlu0 %2913
        %2915 = vadd.xlane.f32.xlu0 %v2686
        %v2916 = vpop.xlane.xlu0 %2915
        %2917 = vadd.xlane.f32.xlu0 %v2687
        %v2918 = vpop.xlane.xlu0 %2917
        %2919 = vadd.xlane.f32.xlu0 %v2688
        %v2920 = vpop.xlane.xlu0 %2919
        %2921 = vadd.xlane.f32.xlu0 %v2689
        %v2922 = vpop.xlane.xlu0 %2921
        %2923 = vadd.xlane.f32.xlu0 %v2690
        %v2924 = vpop.xlane.xlu0 %2923
        %2925 = vadd.xlane.f32.xlu0 %v2691
        %v2926 = vpop.xlane.xlu0 %2925
        %2927 = vadd.xlane.f32.xlu0 %v2692
        %v2928 = vpop.xlane.xlu0 %2927
        %2929 = vadd.xlane.f32.xlu0 %v2693
        %v2930 = vpop.xlane.xlu0 %2929
        %2931 = vadd.xlane.f32.xlu0 %v2694
        %v2932 = vpop.xlane.xlu0 %2931
        %2933 = vadd.xlane.f32.xlu0 %v2695
        %v2934 = vpop.xlane.xlu0 %2933
        %2935 = vadd.xlane.f32.xlu0 %v2696
        %v2936 = vpop.xlane.xlu0 %2935
        %2937 = vadd.xlane.f32.xlu0 %v2697
        %v2938 = vpop.xlane.xlu0 %2937
        %2939 = vadd.xlane.f32.xlu0 %v2698
        %v2940 = vpop.xlane.xlu0 %2939
        %2941 = vadd.xlane.f32.xlu0 %v2699
        %v2942 = vpop.xlane.xlu0 %2941
        %2943 = vadd.xlane.f32.xlu0 %v2700
        %v2944 = vpop.xlane.xlu0 %2943
        %2945 = vadd.xlane.f32.xlu0 %v2701
        %v2946 = vpop.xlane.xlu0 %2945
        %2947 = vadd.xlane.f32.xlu0 %v2702
        %v2948 = vpop.xlane.xlu0 %2947
        %2949 = vadd.xlane.f32.xlu0 %v2703
        %v2950 = vpop.xlane.xlu0 %2949
        %2951 = vadd.xlane.f32.xlu0 %v2704
        %v2952 = vpop.xlane.xlu0 %2951
        %2953 = vadd.xlane.f32.xlu0 %v2705
        %v2954 = vpop.xlane.xlu0 %2953
        %2955 = vadd.xlane.f32.xlu0 %v2706
        %v2956 = vpop.xlane.xlu0 %2955
        %2957 = vadd.xlane.f32.xlu0 %v2707
        %v2958 = vpop.xlane.xlu0 %2957
        %2959 = vadd.xlane.f32.xlu0 %v2708
        %v2960 = vpop.xlane.xlu0 %2959
        %2961 = vadd.xlane.f32.xlu0 %v2709
        %v2962 = vpop.xlane.xlu0 %2961
        %2963 = vadd.xlane.f32.xlu0 %v2710
        %v2964 = vpop.xlane.xlu0 %2963
        %2965 = vadd.xlane.f32.xlu0 %v2711
        %v2966 = vpop.xlane.xlu0 %2965
        %2967 = vadd.xlane.f32.xlu0 %v2712
        %v2968 = vpop.xlane.xlu0 %2967
        %v2969 = vmul.f32 %v2714, 0.9
        %v2970 = vmul.f32 %v2716, 0.9
        %v2971 = vmul.f32 %v2718, 0.9
        %v2972 = vmul.f32 %v2720, 0.9
        %v2973 = vmul.f32 %v2722, 0.9
        %v2974 = vmul.f32 %v2724, 0.9
        %v2975 = vmul.f32 %v2726, 0.9
        %v2976 = vmul.f32 %v2728, 0.9
        %v2977 = vmul.f32 %v2730, 0.9
        %v2978 = vmul.f32 %v2732, 0.9
        %v2979 = vmul.f32 %v2734, 0.9
        %v2980 = vmul.f32 %v2736, 0.9
        %v2981 = vmul.f32 %v2738, 0.9
        %v2982 = vmul.f32 %v2740, 0.9
        %v2983 = vmul.f32 %v2742, 0.9
        %v2984 = vmul.f32 %v2744, 0.9
        %v2985 = vmul.f32 %v2746, 0.9
        %v2986 = vmul.f32 %v2748, 0.9
        %v2987 = vmul.f32 %v2750, 0.9
        %v2988 = vmul.f32 %v2752, 0.9
        %v2989 = vmul.f32 %v2754, 0.9
        %v2990 = vmul.f32 %v2756, 0.9
        %v2991 = vmul.f32 %v2758, 0.9
        %v2992 = vmul.f32 %v2760, 0.9
        %v2993 = vmul.f32 %v2762, 0.9
        %v2994 = vmul.f32 %v2764, 0.9
        %v2995 = vmul.f32 %v2766, 0.9
        %v2996 = vmul.f32 %v2768, 0.9
        %v2997 = vmul.f32 %v2770, 0.9
        %v2998 = vmul.f32 %v2772, 0.9
        %v2999 = vmul.f32 %v2774, 0.9
        %v3000 = vmul.f32 %v2776, 0.9
        %v3001 = vmul.f32 %v2778, 0.9
        %v3002 = vmul.f32 %v2780, 0.9
        %v3003 = vmul.f32 %v2782, 0.9
        %v3004 = vmul.f32 %v2784, 0.9
        %v3005 = vmul.f32 %v2786, 0.9
        %v3006 = vmul.f32 %v2788, 0.9
        %v3007 = vmul.f32 %v2790, 0.9
        %v3008 = vmul.f32 %v2792, 0.9
        %v3009 = vmul.f32 %v2794, 0.9
        %v3010 = vmul.f32 %v2796, 0.9
        %v3011 = vmul.f32 %v2798, 0.9
        %v3012 = vmul.f32 %v2800, 0.9
        %v3013 = vmul.f32 %v2802, 0.9
        %v3014 = vmul.f32 %v2804, 0.9
        %v3015 = vmul.f32 %v2806, 0.9
        %v3016 = vmul.f32 %v2808, 0.9
        %v3017 = vmul.f32 %v2810, 0.9
        %v3018 = vmul.f32 %v2812, 0.9
        %v3019 = vmul.f32 %v2814, 0.9
        %v3020 = vmul.f32 %v2816, 0.9
        %v3021 = vmul.f32 %v2818, 0.9
        %v3022 = vmul.f32 %v2820, 0.9
        %v3023 = vmul.f32 %v2822, 0.9
        %v3024 = vmul.f32 %v2824, 0.9
        %v3025 = vmul.f32 %v2826, 0.9
        %v3026 = vmul.f32 %v2828, 0.9
        %v3027 = vmul.f32 %v2830, 0.9
        %v3028 = vmul.f32 %v2832, 0.9
        %v3029 = vmul.f32 %v2834, 0.9
        %v3030 = vmul.f32 %v2836, 0.9
        %v3031 = vmul.f32 %v2838, 0.9
        %v3032 = vmul.f32 %v2840, 0.9
        %v3033 = vmul.f32 %v2842, 0.9
        %v3034 = vmul.f32 %v2844, 0.9
        %v3035 = vmul.f32 %v2846, 0.9
        %v3036 = vmul.f32 %v2848, 0.9
        %v3037 = vmul.f32 %v2850, 0.9
        %v3038 = vmul.f32 %v2852, 0.9
        %v3039 = vmul.f32 %v2854, 0.9
        %v3040 = vmul.f32 %v2856, 0.9
        %v3041 = vmul.f32 %v2858, 0.9
        %v3042 = vmul.f32 %v2860, 0.9
        %v3043 = vmul.f32 %v2862, 0.9
        %v3044 = vmul.f32 %v2864, 0.9
        %v3045 = vmul.f32 %v2866, 0.9
        %v3046 = vmul.f32 %v2868, 0.9
        %v3047 = vmul.f32 %v2870, 0.9
        %v3048 = vmul.f32 %v2872, 0.9
        %v3049 = vmul.f32 %v2874, 0.9
        %v3050 = vmul.f32 %v2876, 0.9
        %v3051 = vmul.f32 %v2878, 0.9
        %v3052 = vmul.f32 %v2880, 0.9
        %v3053 = vmul.f32 %v2882, 0.9
        %v3054 = vmul.f32 %v2884, 0.9
        %v3055 = vmul.f32 %v2886, 0.9
        %v3056 = vmul.f32 %v2888, 0.9
        %v3057 = vmul.f32 %v2890, 0.9
        %v3058 = vmul.f32 %v2892, 0.9
        %v3059 = vmul.f32 %v2894, 0.9
        %v3060 = vmul.f32 %v2896, 0.9
        %v3061 = vmul.f32 %v2898, 0.9
        %v3062 = vmul.f32 %v2900, 0.9
        %v3063 = vmul.f32 %v2902, 0.9
        %v3064 = vmul.f32 %v2904, 0.9
        %v3065 = vmul.f32 %v2906, 0.9
        %v3066 = vmul.f32 %v2908, 0.9
        %v3067 = vmul.f32 %v2910, 0.9
        %v3068 = vmul.f32 %v2912, 0.9
        %v3069 = vmul.f32 %v2914, 0.9
        %v3070 = vmul.f32 %v2916, 0.9
        %v3071 = vmul.f32 %v2918, 0.9
        %v3072 = vmul.f32 %v2920, 0.9
        %v3073 = vmul.f32 %v2922, 0.9
        %v3074 = vmul.f32 %v2924, 0.9
        %v3075 = vmul.f32 %v2926, 0.9
        %v3076 = vmul.f32 %v2928, 0.9
        %v3077 = vmul.f32 %v2930, 0.9
        %v3078 = vmul.f32 %v2932, 0.9
        %v3079 = vmul.f32 %v2934, 0.9
        %v3080 = vmul.f32 %v2936, 0.9
        %v3081 = vmul.f32 %v2938, 0.9
        %v3082 = vmul.f32 %v2940, 0.9
        %v3083 = vmul.f32 %v2942, 0.9
        %v3084 = vmul.f32 %v2944, 0.9
        %v3085 = vmul.f32 %v2946, 0.9
        %v3086 = vmul.f32 %v2948, 0.9
        %v3087 = vmul.f32 %v2950, 0.9
        %v3088 = vmul.f32 %v2952, 0.9
        %v3089 = vmul.f32 %v2954, 0.9
        %v3090 = vmul.f32 %v2956, 0.9
        %v3091 = vmul.f32 %v2958, 0.9
        %v3092 = vmul.f32 %v2960, 0.9
        %v3093 = vmul.f32 %v2962, 0.9
        %v3094 = vmul.f32 %v2964, 0.9
        %v3095 = vmul.f32 %v2966, 0.9
        %v3096 = vmul.f32 %v2968, 0.9
        %v3097 = vsub.f32 %v1560, %v2969
        %v3098 = vsub.f32 %v1562, %v2970
        %v3099 = vsub.f32 %v1564, %v2971
        %v3100 = vsub.f32 %v1566, %v2972
        %v3101 = vsub.f32 %v1568, %v2973
        %v3102 = vsub.f32 %v1570, %v2974
        %v3103 = vsub.f32 %v1572, %v2975
        %v3104 = vsub.f32 %v1574, %v2976
        %v3105 = vsub.f32 %v1576, %v2977
        %v3106 = vsub.f32 %v1578, %v2978
        %v3107 = vsub.f32 %v1580, %v2979
        %v3108 = vsub.f32 %v1582, %v2980
        %v3109 = vsub.f32 %v1584, %v2981
        %v3110 = vsub.f32 %v1586, %v2982
        %v3111 = vsub.f32 %v1588, %v2983
        %v3112 = vsub.f32 %v1590, %v2984
        %v3113 = vsub.f32 %v1592, %v2985
        %v3114 = vsub.f32 %v1594, %v2986
        %v3115 = vsub.f32 %v1596, %v2987
        %v3116 = vsub.f32 %v1598, %v2988
        %v3117 = vsub.f32 %v1600, %v2989
        %v3118 = vsub.f32 %v1602, %v2990
        %v3119 = vsub.f32 %v1604, %v2991
        %v3120 = vsub.f32 %v1606, %v2992
        %v3121 = vsub.f32 %v1608, %v2993
        %v3122 = vsub.f32 %v1610, %v2994
        %v3123 = vsub.f32 %v1612, %v2995
        %v3124 = vsub.f32 %v1614, %v2996
        %v3125 = vsub.f32 %v1616, %v2997
        %v3126 = vsub.f32 %v1618, %v2998
        %v3127 = vsub.f32 %v1620, %v2999
        %v3128 = vsub.f32 %v1622, %v3000
        %v3129 = vsub.f32 %v1624, %v3001
        %v3130 = vsub.f32 %v1626, %v3002
        %v3131 = vsub.f32 %v1628, %v3003
        %v3132 = vsub.f32 %v1630, %v3004
        %v3133 = vsub.f32 %v1632, %v3005
        %v3134 = vsub.f32 %v1634, %v3006
        %v3135 = vsub.f32 %v1636, %v3007
        %v3136 = vsub.f32 %v1638, %v3008
        %v3137 = vsub.f32 %v1640, %v3009
        %v3138 = vsub.f32 %v1642, %v3010
        %v3139 = vsub.f32 %v1644, %v3011
        %v3140 = vsub.f32 %v1646, %v3012
        %v3141 = vsub.f32 %v1648, %v3013
        %v3142 = vsub.f32 %v1650, %v3014
        %v3143 = vsub.f32 %v1652, %v3015
        %v3144 = vsub.f32 %v1654, %v3016
        %v3145 = vsub.f32 %v1656, %v3017
        %v3146 = vsub.f32 %v1658, %v3018
        %v3147 = vsub.f32 %v1660, %v3019
        %v3148 = vsub.f32 %v1662, %v3020
        %v3149 = vsub.f32 %v1664, %v3021
        %v3150 = vsub.f32 %v1666, %v3022
        %v3151 = vsub.f32 %v1668, %v3023
        %v3152 = vsub.f32 %v1670, %v3024
        %v3153 = vsub.f32 %v1672, %v3025
        %v3154 = vsub.f32 %v1674, %v3026
        %v3155 = vsub.f32 %v1676, %v3027
        %v3156 = vsub.f32 %v1678, %v3028
        %v3157 = vsub.f32 %v1680, %v3029
        %v3158 = vsub.f32 %v1682, %v3030
        %v3159 = vsub.f32 %v1684, %v3031
        %v3160 = vsub.f32 %v1686, %v3032
        %v3161 = vsub.f32 %v1688, %v3033
        %v3162 = vsub.f32 %v1690, %v3034
        %v3163 = vsub.f32 %v1692, %v3035
        %v3164 = vsub.f32 %v1694, %v3036
        %v3165 = vsub.f32 %v1696, %v3037
        %v3166 = vsub.f32 %v1698, %v3038
        %v3167 = vsub.f32 %v1700, %v3039
        %v3168 = vsub.f32 %v1702, %v3040
        %v3169 = vsub.f32 %v1704, %v3041
        %v3170 = vsub.f32 %v1706, %v3042
        %v3171 = vsub.f32 %v1708, %v3043
        %v3172 = vsub.f32 %v1710, %v3044
        %v3173 = vsub.f32 %v1712, %v3045
        %v3174 = vsub.f32 %v1714, %v3046
        %v3175 = vsub.f32 %v1716, %v3047
        %v3176 = vsub.f32 %v1718, %v3048
        %v3177 = vsub.f32 %v1720, %v3049
        %v3178 = vsub.f32 %v1722, %v3050
        %v3179 = vsub.f32 %v1724, %v3051
        %v3180 = vsub.f32 %v1726, %v3052
        %v3181 = vsub.f32 %v1728, %v3053
        %v3182 = vsub.f32 %v1730, %v3054
        %v3183 = vsub.f32 %v1732, %v3055
        %v3184 = vsub.f32 %v1734, %v3056
        %v3185 = vsub.f32 %v1736, %v3057
        %v3186 = vsub.f32 %v1738, %v3058
        %v3187 = vsub.f32 %v1740, %v3059
        %v3188 = vsub.f32 %v1742, %v3060
        %v3189 = vsub.f32 %v1744, %v3061
        %v3190 = vsub.f32 %v1746, %v3062
        %v3191 = vsub.f32 %v1748, %v3063
        %v3192 = vsub.f32 %v1750, %v3064
        %v3193 = vsub.f32 %v1752, %v3065
        %v3194 = vsub.f32 %v1754, %v3066
        %v3195 = vsub.f32 %v1756, %v3067
        %v3196 = vsub.f32 %v1758, %v3068
        %v3197 = vsub.f32 %v1760, %v3069
        %v3198 = vsub.f32 %v1762, %v3070
        %v3199 = vsub.f32 %v1764, %v3071
        %v3200 = vsub.f32 %v1766, %v3072
        %v3201 = vsub.f32 %v1768, %v3073
        %v3202 = vsub.f32 %v1770, %v3074
        %v3203 = vsub.f32 %v1772, %v3075
        %v3204 = vsub.f32 %v1774, %v3076
        %v3205 = vsub.f32 %v1776, %v3077
        %v3206 = vsub.f32 %v1778, %v3078
        %v3207 = vsub.f32 %v1780, %v3079
        %v3208 = vsub.f32 %v1782, %v3080
        %v3209 = vsub.f32 %v1784, %v3081
        %v3210 = vsub.f32 %v1786, %v3082
        %v3211 = vsub.f32 %v1788, %v3083
        %v3212 = vsub.f32 %v1790, %v3084
        %v3213 = vsub.f32 %v1792, %v3085
        %v3214 = vsub.f32 %v1794, %v3086
        %v3215 = vsub.f32 %v1796, %v3087
        %v3216 = vsub.f32 %v1798, %v3088
        %v3217 = vsub.f32 %v1800, %v3089
        %v3218 = vsub.f32 %v1802, %v3090
        %v3219 = vsub.f32 %v1804, %v3091
        %v3220 = vsub.f32 %v1806, %v3092
        %v3221 = vsub.f32 %v1808, %v3093
        %v3222 = vsub.f32 %v1810, %v3094
        %v3223 = vsub.f32 %v1812, %v3095
        %v3224 = vsub.f32 %v1814, %v3096
        %v3225 = vmul.f32 %v1816, 0.00078125
        %v3226 = vmul.f32 %v1818, 0.00078125
        %v3227 = vmul.f32 %v1820, 0.00078125
        %v3228 = vmul.f32 %v1822, 0.00078125
        %v3229 = vmul.f32 %v1824, 0.00078125
        %v3230 = vmul.f32 %v1826, 0.00078125
        %v3231 = vmul.f32 %v1828, 0.00078125
        %v3232 = vmul.f32 %v1830, 0.00078125
        %v3233 = vmul.f32 %v1832, 0.00078125
        %v3234 = vmul.f32 %v1834, 0.00078125
        %v3235 = vmul.f32 %v1836, 0.00078125
        %v3236 = vmul.f32 %v1838, 0.00078125
        %v3237 = vmul.f32 %v1840, 0.00078125
        %v3238 = vmul.f32 %v1842, 0.00078125
        %v3239 = vmul.f32 %v1844, 0.00078125
        %v3240 = vmul.f32 %v1846, 0.00078125
        %v3241 = vmul.f32 %v1848, 0.00078125
        %v3242 = vmul.f32 %v1850, 0.00078125
        %v3243 = vmul.f32 %v1852, 0.00078125
        %v3244 = vmul.f32 %v1854, 0.00078125
        %v3245 = vmul.f32 %v1856, 0.00078125
        %v3246 = vmul.f32 %v1858, 0.00078125
        %v3247 = vmul.f32 %v1860, 0.00078125
        %v3248 = vmul.f32 %v1862, 0.00078125
        %v3249 = vmul.f32 %v1864, 0.00078125
        %v3250 = vmul.f32 %v1866, 0.00078125
        %v3251 = vmul.f32 %v1868, 0.00078125
        %v3252 = vmul.f32 %v1870, 0.00078125
        %v3253 = vmul.f32 %v1872, 0.00078125
        %v3254 = vmul.f32 %v1874, 0.00078125
        %v3255 = vmul.f32 %v1876, 0.00078125
        %v3256 = vmul.f32 %v1878, 0.00078125
        %v3257 = vmul.f32 %v1880, 0.00078125
        %v3258 = vmul.f32 %v1882, 0.00078125
        %v3259 = vmul.f32 %v1884, 0.00078125
        %v3260 = vmul.f32 %v1886, 0.00078125
        %v3261 = vmul.f32 %v1888, 0.00078125
        %v3262 = vmul.f32 %v1890, 0.00078125
        %v3263 = vmul.f32 %v1892, 0.00078125
        %v3264 = vmul.f32 %v1894, 0.00078125
        %v3265 = vmul.f32 %v1896, 0.00078125
        %v3266 = vmul.f32 %v1898, 0.00078125
        %v3267 = vmul.f32 %v1900, 0.00078125
        %v3268 = vmul.f32 %v1902, 0.00078125
        %v3269 = vmul.f32 %v1904, 0.00078125
        %v3270 = vmul.f32 %v1906, 0.00078125
        %v3271 = vmul.f32 %v1908, 0.00078125
        %v3272 = vmul.f32 %v1910, 0.00078125
        %v3273 = vmul.f32 %v1912, 0.00078125
        %v3274 = vmul.f32 %v1914, 0.00078125
        %v3275 = vmul.f32 %v1916, 0.00078125
        %v3276 = vmul.f32 %v1918, 0.00078125
        %v3277 = vmul.f32 %v1920, 0.00078125
        %v3278 = vmul.f32 %v1922, 0.00078125
        %v3279 = vmul.f32 %v1924, 0.00078125
        %v3280 = vmul.f32 %v1926, 0.00078125
        %v3281 = vmul.f32 %v1928, 0.00078125
        %v3282 = vmul.f32 %v1930, 0.00078125
        %v3283 = vmul.f32 %v1932, 0.00078125
        %v3284 = vmul.f32 %v1934, 0.00078125
        %v3285 = vmul.f32 %v1936, 0.00078125
        %v3286 = vmul.f32 %v1938, 0.00078125
        %v3287 = vmul.f32 %v1940, 0.00078125
        %v3288 = vmul.f32 %v1942, 0.00078125
        %v3289 = vmul.f32 %v1944, 0.00078125
        %v3290 = vmul.f32 %v1946, 0.00078125
        %v3291 = vmul.f32 %v1948, 0.00078125
        %v3292 = vmul.f32 %v1950, 0.00078125
        %v3293 = vmul.f32 %v1952, 0.00078125
        %v3294 = vmul.f32 %v1954, 0.00078125
        %v3295 = vmul.f32 %v1956, 0.00078125
        %v3296 = vmul.f32 %v1958, 0.00078125
        %v3297 = vmul.f32 %v1960, 0.00078125
        %v3298 = vmul.f32 %v1962, 0.00078125
        %v3299 = vmul.f32 %v1964, 0.00078125
        %v3300 = vmul.f32 %v1966, 0.00078125
        %v3301 = vmul.f32 %v1968, 0.00078125
        %v3302 = vmul.f32 %v1970, 0.00078125
        %v3303 = vmul.f32 %v1972, 0.00078125
        %v3304 = vmul.f32 %v1974, 0.00078125
        %v3305 = vmul.f32 %v1976, 0.00078125
        %v3306 = vmul.f32 %v1978, 0.00078125
        %v3307 = vmul.f32 %v1980, 0.00078125
        %v3308 = vmul.f32 %v1982, 0.00078125
        %v3309 = vmul.f32 %v1984, 0.00078125
        %v3310 = vmul.f32 %v1986, 0.00078125
        %v3311 = vmul.f32 %v1988, 0.00078125
        %v3312 = vmul.f32 %v1990, 0.00078125
        %v3313 = vmul.f32 %v1992, 0.00078125
        %v3314 = vmul.f32 %v1994, 0.00078125
        %v3315 = vmul.f32 %v1996, 0.00078125
        %v3316 = vmul.f32 %v1998, 0.00078125
        %v3317 = vmul.f32 %v2000, 0.00078125
        %v3318 = vmul.f32 %v2002, 0.00078125
        %v3319 = vmul.f32 %v2004, 0.00078125
        %v3320 = vmul.f32 %v2006, 0.00078125
        %v3321 = vmul.f32 %v2008, 0.00078125
        %v3322 = vmul.f32 %v2010, 0.00078125
        %v3323 = vmul.f32 %v2012, 0.00078125
        %v3324 = vmul.f32 %v2014, 0.00078125
        %v3325 = vmul.f32 %v2016, 0.00078125
        %v3326 = vmul.f32 %v2018, 0.00078125
        %v3327 = vmul.f32 %v2020, 0.00078125
        %v3328 = vmul.f32 %v2022, 0.00078125
        %v3329 = vmul.f32 %v2024, 0.00078125
        %v3330 = vmul.f32 %v2026, 0.00078125
        %v3331 = vmul.f32 %v2028, 0.00078125
        %v3332 = vmul.f32 %v2030, 0.00078125
        %v3333 = vmul.f32 %v2032, 0.00078125
        %v3334 = vmul.f32 %v2034, 0.00078125
        %v3335 = vmul.f32 %v2036, 0.00078125
        %v3336 = vmul.f32 %v2038, 0.00078125
        %v3337 = vmul.f32 %v2040, 0.00078125
        %v3338 = vmul.f32 %v2042, 0.00078125
        %v3339 = vmul.f32 %v2044, 0.00078125
        %v3340 = vmul.f32 %v2046, 0.00078125
        %v3341 = vmul.f32 %v2048, 0.00078125
        %v3342 = vmul.f32 %v2050, 0.00078125
        %v3343 = vmul.f32 %v2052, 0.00078125
        %v3344 = vmul.f32 %v2054, 0.00078125
        %v3345 = vmul.f32 %v2056, 0.00078125
        %v3346 = vmul.f32 %v2058, 0.00078125
        %v3347 = vmul.f32 %v2060, 0.00078125
        %v3348 = vmul.f32 %v2062, 0.00078125
        %v3349 = vmul.f32 %v2064, 0.00078125
        %v3350 = vmul.f32 %v2066, 0.00078125
        %v3351 = vmul.f32 %v2068, 0.00078125
        %v3352 = vmul.f32 %v2070, 0.00078125
        %v3353 = vsub.f32 %v3097, %v3225
        %v3354 = vsub.f32 %v3098, %v3226
        %v3355 = vsub.f32 %v3099, %v3227
        %v3356 = vsub.f32 %v3100, %v3228
        %v3357 = vsub.f32 %v3101, %v3229
        %v3358 = vsub.f32 %v3102, %v3230
        %v3359 = vsub.f32 %v3103, %v3231
        %v3360 = vsub.f32 %v3104, %v3232
        %v3361 = vsub.f32 %v3105, %v3233
        %v3362 = vsub.f32 %v3106, %v3234
        %v3363 = vsub.f32 %v3107, %v3235
        %v3364 = vsub.f32 %v3108, %v3236
        %v3365 = vsub.f32 %v3109, %v3237
        %v3366 = vsub.f32 %v3110, %v3238
        %v3367 = vsub.f32 %v3111, %v3239
        %v3368 = vsub.f32 %v3112, %v3240
        %v3369 = vsub.f32 %v3113, %v3241
        %v3370 = vsub.f32 %v3114, %v3242
        %v3371 = vsub.f32 %v3115, %v3243
        %v3372 = vsub.f32 %v3116, %v3244
        %v3373 = vsub.f32 %v3117, %v3245
        %v3374 = vsub.f32 %v3118, %v3246
        %v3375 = vsub.f32 %v3119, %v3247
        %v3376 = vsub.f32 %v3120, %v3248
        %v3377 = vsub.f32 %v3121, %v3249
        %v3378 = vsub.f32 %v3122, %v3250
        %v3379 = vsub.f32 %v3123, %v3251
        %v3380 = vsub.f32 %v3124, %v3252
        %v3381 = vsub.f32 %v3125, %v3253
        %v3382 = vsub.f32 %v3126, %v3254
        %v3383 = vsub.f32 %v3127, %v3255
        %v3384 = vsub.f32 %v3128, %v3256
        %v3385 = vsub.f32 %v3129, %v3257
        %v3386 = vsub.f32 %v3130, %v3258
        %v3387 = vsub.f32 %v3131, %v3259
        %v3388 = vsub.f32 %v3132, %v3260
        %v3389 = vsub.f32 %v3133, %v3261
        %v3390 = vsub.f32 %v3134, %v3262
        %v3391 = vsub.f32 %v3135, %v3263
        %v3392 = vsub.f32 %v3136, %v3264
        %v3393 = vsub.f32 %v3137, %v3265
        %v3394 = vsub.f32 %v3138, %v3266
        %v3395 = vsub.f32 %v3139, %v3267
        %v3396 = vsub.f32 %v3140, %v3268
        %v3397 = vsub.f32 %v3141, %v3269
        %v3398 = vsub.f32 %v3142, %v3270
        %v3399 = vsub.f32 %v3143, %v3271
        %v3400 = vsub.f32 %v3144, %v3272
        %v3401 = vsub.f32 %v3145, %v3273
        %v3402 = vsub.f32 %v3146, %v3274
        %v3403 = vsub.f32 %v3147, %v3275
        %v3404 = vsub.f32 %v3148, %v3276
        %v3405 = vsub.f32 %v3149, %v3277
        %v3406 = vsub.f32 %v3150, %v3278
        %v3407 = vsub.f32 %v3151, %v3279
        %v3408 = vsub.f32 %v3152, %v3280
        %v3409 = vsub.f32 %v3153, %v3281
        %v3410 = vsub.f32 %v3154, %v3282
        %v3411 = vsub.f32 %v3155, %v3283
        %v3412 = vsub.f32 %v3156, %v3284
        %v3413 = vsub.f32 %v3157, %v3285
        %v3414 = vsub.f32 %v3158, %v3286
        %v3415 = vsub.f32 %v3159, %v3287
        %v3416 = vsub.f32 %v3160, %v3288
        %v3417 = vsub.f32 %v3161, %v3289
        %v3418 = vsub.f32 %v3162, %v3290
        %v3419 = vsub.f32 %v3163, %v3291
        %v3420 = vsub.f32 %v3164, %v3292
        %v3421 = vsub.f32 %v3165, %v3293
        %v3422 = vsub.f32 %v3166, %v3294
        %v3423 = vsub.f32 %v3167, %v3295
        %v3424 = vsub.f32 %v3168, %v3296
        %v3425 = vsub.f32 %v3169, %v3297
        %v3426 = vsub.f32 %v3170, %v3298
        %v3427 = vsub.f32 %v3171, %v3299
        %v3428 = vsub.f32 %v3172, %v3300
        %v3429 = vsub.f32 %v3173, %v3301
        %v3430 = vsub.f32 %v3174, %v3302
        %v3431 = vsub.f32 %v3175, %v3303
        %v3432 = vsub.f32 %v3176, %v3304
        %v3433 = vsub.f32 %v3177, %v3305
        %v3434 = vsub.f32 %v3178, %v3306
        %v3435 = vsub.f32 %v3179, %v3307
        %v3436 = vsub.f32 %v3180, %v3308
        %v3437 = vsub.f32 %v3181, %v3309
        %v3438 = vsub.f32 %v3182, %v3310
        %v3439 = vsub.f32 %v3183, %v3311
        %v3440 = vsub.f32 %v3184, %v3312
        %v3441 = vsub.f32 %v3185, %v3313
        %v3442 = vsub.f32 %v3186, %v3314
        %v3443 = vsub.f32 %v3187, %v3315
        %v3444 = vsub.f32 %v3188, %v3316
        %v3445 = vsub.f32 %v3189, %v3317
        %v3446 = vsub.f32 %v3190, %v3318
        %v3447 = vsub.f32 %v3191, %v3319
        %v3448 = vsub.f32 %v3192, %v3320
        %v3449 = vsub.f32 %v3193, %v3321
        %v3450 = vsub.f32 %v3194, %v3322
        %v3451 = vsub.f32 %v3195, %v3323
        %v3452 = vsub.f32 %v3196, %v3324
        %v3453 = vsub.f32 %v3197, %v3325
        %v3454 = vsub.f32 %v3198, %v3326
        %v3455 = vsub.f32 %v3199, %v3327
        %v3456 = vsub.f32 %v3200, %v3328
        %v3457 = vsub.f32 %v3201, %v3329
        %v3458 = vsub.f32 %v3202, %v3330
        %v3459 = vsub.f32 %v3203, %v3331
        %v3460 = vsub.f32 %v3204, %v3332
        %v3461 = vsub.f32 %v3205, %v3333
        %v3462 = vsub.f32 %v3206, %v3334
        %v3463 = vsub.f32 %v3207, %v3335
        %v3464 = vsub.f32 %v3208, %v3336
        %v3465 = vsub.f32 %v3209, %v3337
        %v3466 = vsub.f32 %v3210, %v3338
        %v3467 = vsub.f32 %v3211, %v3339
        %v3468 = vsub.f32 %v3212, %v3340
        %v3469 = vsub.f32 %v3213, %v3341
        %v3470 = vsub.f32 %v3214, %v3342
        %v3471 = vsub.f32 %v3215, %v3343
        %v3472 = vsub.f32 %v3216, %v3344
        %v3473 = vsub.f32 %v3217, %v3345
        %v3474 = vsub.f32 %v3218, %v3346
        %v3475 = vsub.f32 %v3219, %v3347
        %v3476 = vsub.f32 %v3220, %v3348
        %v3477 = vsub.f32 %v3221, %v3349
        %v3478 = vsub.f32 %v3222, %v3350
        %v3479 = vsub.f32 %v3223, %v3351
        %v3480 = vsub.f32 %v3224, %v3352
        %v3481 = vlaneseq
        %v3482 = vshrl.u32 %v3481, 7
        %v3483 = vadd.s32 %v3482, 8
        %v3484 = vadd.s32 %v3482, 16
        %v3485 = vadd.s32 %v3482, 24
        %v3486 = vadd.s32 %v3482, 32
        %v3487 = vadd.s32 %v3482, 40
        %v3488 = vadd.s32 %v3482, 48
        %v3489 = vadd.s32 %v3482, 56
        %v3490 = vadd.s32 %v3482, 64
        %v3491 = vadd.s32 %v3482, 72
        %v3492 = vadd.s32 %v3482, 80
        %v3493 = vadd.s32 %v3482, 88
        %v3494 = vadd.s32 %v3482, 96
        %v3495 = vadd.s32 %v3482, 104
        %v3496 = vadd.s32 %v3482, 112
        %v3497 = vadd.s32 %v3482, 120
        %v3498 = vadd.s32 %v3482, 128
        %v3499 = vadd.s32 %v3482, 136
        %v3500 = vadd.s32 %v3482, 144
        %v3501 = vadd.s32 %v3482, 152
        %v3502 = vadd.s32 %v3482, 160
        %v3503 = vadd.s32 %v3482, 168
        %v3504 = vadd.s32 %v3482, 176
        %v3505 = vadd.s32 %v3482, 184
        %v3506 = vadd.s32 %v3482, 192
        %v3507 = vadd.s32 %v3482, 200
        %v3508 = vadd.s32 %v3482, 208
        %v3509 = vadd.s32 %v3482, 216
        %v3510 = vadd.s32 %v3482, 224
        %v3511 = vadd.s32 %v3482, 232
        %v3512 = vadd.s32 %v3482, 240
        %v3513 = vadd.s32 %v3482, 248
        %v3514 = vadd.s32 %v3482, 256
        %v3515 = vadd.s32 %v3482, 264
        %v3516 = vadd.s32 %v3482, 272
        %v3517 = vadd.s32 %v3482, 280
        %v3518 = vadd.s32 %v3482, 288
        %v3519 = vadd.s32 %v3482, 296
        %v3520 = vadd.s32 %v3482, 304
        %v3521 = vadd.s32 %v3482, 312
        %v3522 = vadd.s32 %v3482, 320
        %v3523 = vadd.s32 %v3482, 328
        %v3524 = vadd.s32 %v3482, 336
        %v3525 = vadd.s32 %v3482, 344
        %v3526 = vadd.s32 %v3482, 352
        %v3527 = vadd.s32 %v3482, 360
        %v3528 = vadd.s32 %v3482, 368
        %v3529 = vadd.s32 %v3482, 376
        %v3530 = vadd.s32 %v3482, 384
        %v3531 = vadd.s32 %v3482, 392
        %v3532 = vadd.s32 %v3482, 400
        %v3533 = vadd.s32 %v3482, 408
        %v3534 = vadd.s32 %v3482, 416
        %v3535 = vadd.s32 %v3482, 424
        %v3536 = vadd.s32 %v3482, 432
        %v3537 = vadd.s32 %v3482, 440
        %v3538 = vadd.s32 %v3482, 448
        %v3539 = vadd.s32 %v3482, 456
        %v3540 = vadd.s32 %v3482, 464
        %v3541 = vadd.s32 %v3482, 472
        %v3542 = vadd.s32 %v3482, 480
        %v3543 = vadd.s32 %v3482, 488
        %v3544 = vadd.s32 %v3482, 496
        %v3545 = vadd.s32 %v3482, 504
        %v3546 = vadd.s32 %v3482, 512
        %v3547 = vadd.s32 %v3482, 520
        %v3548 = vadd.s32 %v3482, 528
        %v3549 = vadd.s32 %v3482, 536
        %v3550 = vadd.s32 %v3482, 544
        %v3551 = vadd.s32 %v3482, 552
        %v3552 = vadd.s32 %v3482, 560
        %v3553 = vadd.s32 %v3482, 568
        %v3554 = vadd.s32 %v3482, 576
        %v3555 = vadd.s32 %v3482, 584
        %v3556 = vadd.s32 %v3482, 592
        %v3557 = vadd.s32 %v3482, 600
        %v3558 = vadd.s32 %v3482, 608
        %v3559 = vadd.s32 %v3482, 616
        %v3560 = vadd.s32 %v3482, 624
        %v3561 = vadd.s32 %v3482, 632
        %v3562 = vadd.s32 %v3482, 640
        %v3563 = vadd.s32 %v3482, 648
        %v3564 = vadd.s32 %v3482, 656
        %v3565 = vadd.s32 %v3482, 664
        %v3566 = vadd.s32 %v3482, 672
        %v3567 = vadd.s32 %v3482, 680
        %v3568 = vadd.s32 %v3482, 688
        %v3569 = vadd.s32 %v3482, 696
        %v3570 = vadd.s32 %v3482, 704
        %v3571 = vadd.s32 %v3482, 712
        %v3572 = vadd.s32 %v3482, 720
        %v3573 = vadd.s32 %v3482, 728
        %v3574 = vadd.s32 %v3482, 736
        %v3575 = vadd.s32 %v3482, 744
        %v3576 = vadd.s32 %v3482, 752
        %v3577 = vadd.s32 %v3482, 760
        %v3578 = vadd.s32 %v3482, 768
        %v3579 = vadd.s32 %v3482, 776
        %v3580 = vadd.s32 %v3482, 784
        %v3581 = vadd.s32 %v3482, 792
        %v3582 = vadd.s32 %v3482, 800
        %v3583 = vadd.s32 %v3482, 808
        %v3584 = vadd.s32 %v3482, 816
        %v3585 = vadd.s32 %v3482, 824
        %v3586 = vadd.s32 %v3482, 832
        %v3587 = vadd.s32 %v3482, 840
        %v3588 = vadd.s32 %v3482, 848
        %v3589 = vadd.s32 %v3482, 856
        %v3590 = vadd.s32 %v3482, 864
        %v3591 = vadd.s32 %v3482, 872
        %v3592 = vadd.s32 %v3482, 880
        %v3593 = vadd.s32 %v3482, 888
        %v3594 = vadd.s32 %v3482, 896
        %v3595 = vadd.s32 %v3482, 904
        %v3596 = vadd.s32 %v3482, 912
        %v3597 = vadd.s32 %v3482, 920
        %v3598 = vadd.s32 %v3482, 928
        %v3599 = vadd.s32 %v3482, 936
        %v3600 = vadd.s32 %v3482, 944
        %v3601 = vadd.s32 %v3482, 952
        %v3602 = vadd.s32 %v3482, 960
        %v3603 = vadd.s32 %v3482, 968
        %v3604 = vadd.s32 %v3482, 976
        %v3605 = vadd.s32 %v3482, 984
        %v3606 = vadd.s32 %v3482, 992
        %v3607 = vadd.s32 %v3482, 1000
        %v3608 = vadd.s32 %v3482, 1008
        %v3609 = vadd.s32 %v3482, 1016
        %s3610 = smul.u32 %s20, 2
        %s3611 = sadd.s32 %s3610, %s21
        %s3612 = smul.u32 %s3611, 1024
        %v3613 = vstv %s3612
        %v3614 = vadd.s32 %v3613, %v3482
        %v3615 = vadd.s32 %v3613, %v3483
        %v3616 = vadd.s32 %v3613, %v3484
        %v3617 = vadd.s32 %v3613, %v3485
        %v3618 = vadd.s32 %v3613, %v3486
        %v3619 = vadd.s32 %v3613, %v3487
        %v3620 = vadd.s32 %v3613, %v3488
        %v3621 = vadd.s32 %v3613, %v3489
        %v3622 = vadd.s32 %v3613, %v3490
        %v3623 = vadd.s32 %v3613, %v3491
        %v3624 = vadd.s32 %v3613, %v3492
        %v3625 = vadd.s32 %v3613, %v3493
        %v3626 = vadd.s32 %v3613, %v3494
        %v3627 = vadd.s32 %v3613, %v3495
        %v3628 = vadd.s32 %v3613, %v3496
        %v3629 = vadd.s32 %v3613, %v3497
        %v3630 = vadd.s32 %v3613, %v3498
        %v3631 = vadd.s32 %v3613, %v3499
        %v3632 = vadd.s32 %v3613, %v3500
        %v3633 = vadd.s32 %v3613, %v3501
        %v3634 = vadd.s32 %v3613, %v3502
        %v3635 = vadd.s32 %v3613, %v3503
        %v3636 = vadd.s32 %v3613, %v3504
        %v3637 = vadd.s32 %v3613, %v3505
        %v3638 = vadd.s32 %v3613, %v3506
        %v3639 = vadd.s32 %v3613, %v3507
        %v3640 = vadd.s32 %v3613, %v3508
        %v3641 = vadd.s32 %v3613, %v3509
        %v3642 = vadd.s32 %v3613, %v3510
        %v3643 = vadd.s32 %v3613, %v3511
        %v3644 = vadd.s32 %v3613, %v3512
        %v3645 = vadd.s32 %v3613, %v3513
        %v3646 = vadd.s32 %v3613, %v3514
        %v3647 = vadd.s32 %v3613, %v3515
        %v3648 = vadd.s32 %v3613, %v3516
        %v3649 = vadd.s32 %v3613, %v3517
        %v3650 = vadd.s32 %v3613, %v3518
        %v3651 = vadd.s32 %v3613, %v3519
        %v3652 = vadd.s32 %v3613, %v3520
        %v3653 = vadd.s32 %v3613, %v3521
        %v3654 = vadd.s32 %v3613, %v3522
        %v3655 = vadd.s32 %v3613, %v3523
        %v3656 = vadd.s32 %v3613, %v3524
        %v3657 = vadd.s32 %v3613, %v3525
        %v3658 = vadd.s32 %v3613, %v3526
        %v3659 = vadd.s32 %v3613, %v3527
        %v3660 = vadd.s32 %v3613, %v3528
        %v3661 = vadd.s32 %v3613, %v3529
        %v3662 = vadd.s32 %v3613, %v3530
        %v3663 = vadd.s32 %v3613, %v3531
        %v3664 = vadd.s32 %v3613, %v3532
        %v3665 = vadd.s32 %v3613, %v3533
        %v3666 = vadd.s32 %v3613, %v3534
        %v3667 = vadd.s32 %v3613, %v3535
        %v3668 = vadd.s32 %v3613, %v3536
        %v3669 = vadd.s32 %v3613, %v3537
        %v3670 = vadd.s32 %v3613, %v3538
        %v3671 = vadd.s32 %v3613, %v3539
        %v3672 = vadd.s32 %v3613, %v3540
        %v3673 = vadd.s32 %v3613, %v3541
        %v3674 = vadd.s32 %v3613, %v3542
        %v3675 = vadd.s32 %v3613, %v3543
        %v3676 = vadd.s32 %v3613, %v3544
        %v3677 = vadd.s32 %v3613, %v3545
        %v3678 = vadd.s32 %v3613, %v3546
        %v3679 = vadd.s32 %v3613, %v3547
        %v3680 = vadd.s32 %v3613, %v3548
        %v3681 = vadd.s32 %v3613, %v3549
        %v3682 = vadd.s32 %v3613, %v3550
        %v3683 = vadd.s32 %v3613, %v3551
        %v3684 = vadd.s32 %v3613, %v3552
        %v3685 = vadd.s32 %v3613, %v3553
        %v3686 = vadd.s32 %v3613, %v3554
        %v3687 = vadd.s32 %v3613, %v3555
        %v3688 = vadd.s32 %v3613, %v3556
        %v3689 = vadd.s32 %v3613, %v3557
        %v3690 = vadd.s32 %v3613, %v3558
        %v3691 = vadd.s32 %v3613, %v3559
        %v3692 = vadd.s32 %v3613, %v3560
        %v3693 = vadd.s32 %v3613, %v3561
        %v3694 = vadd.s32 %v3613, %v3562
        %v3695 = vadd.s32 %v3613, %v3563
        %v3696 = vadd.s32 %v3613, %v3564
        %v3697 = vadd.s32 %v3613, %v3565
        %v3698 = vadd.s32 %v3613, %v3566
        %v3699 = vadd.s32 %v3613, %v3567
        %v3700 = vadd.s32 %v3613, %v3568
        %v3701 = vadd.s32 %v3613, %v3569
        %v3702 = vadd.s32 %v3613, %v3570
        %v3703 = vadd.s32 %v3613, %v3571
        %v3704 = vadd.s32 %v3613, %v3572
        %v3705 = vadd.s32 %v3613, %v3573
        %v3706 = vadd.s32 %v3613, %v3574
        %v3707 = vadd.s32 %v3613, %v3575
        %v3708 = vadd.s32 %v3613, %v3576
        %v3709 = vadd.s32 %v3613, %v3577
        %v3710 = vadd.s32 %v3613, %v3578
        %v3711 = vadd.s32 %v3613, %v3579
        %v3712 = vadd.s32 %v3613, %v3580
        %v3713 = vadd.s32 %v3613, %v3581
        %v3714 = vadd.s32 %v3613, %v3582
        %v3715 = vadd.s32 %v3613, %v3583
        %v3716 = vadd.s32 %v3613, %v3584
        %v3717 = vadd.s32 %v3613, %v3585
        %v3718 = vadd.s32 %v3613, %v3586
        %v3719 = vadd.s32 %v3613, %v3587
        %v3720 = vadd.s32 %v3613, %v3588
        %v3721 = vadd.s32 %v3613, %v3589
        %v3722 = vadd.s32 %v3613, %v3590
        %v3723 = vadd.s32 %v3613, %v3591
        %v3724 = vadd.s32 %v3613, %v3592
        %v3725 = vadd.s32 %v3613, %v3593
        %v3726 = vadd.s32 %v3613, %v3594
        %v3727 = vadd.s32 %v3613, %v3595
        %v3728 = vadd.s32 %v3613, %v3596
        %v3729 = vadd.s32 %v3613, %v3597
        %v3730 = vadd.s32 %v3613, %v3598
        %v3731 = vadd.s32 %v3613, %v3599
        %v3732 = vadd.s32 %v3613, %v3600
        %v3733 = vadd.s32 %v3613, %v3601
        %v3734 = vadd.s32 %v3613, %v3602
        %v3735 = vadd.s32 %v3613, %v3603
        %v3736 = vadd.s32 %v3613, %v3604
        %v3737 = vadd.s32 %v3613, %v3605
        %v3738 = vadd.s32 %v3613, %v3606
        %v3739 = vadd.s32 %v3613, %v3607
        %v3740 = vadd.s32 %v3613, %v3608
        %v3741 = vadd.s32 %v3613, %v3609
        %vm3742 = vcmp.lt.s32.totalorder %v3614, 2500
        %vm3743 = vcmp.lt.s32.totalorder %v3615, 2500
        %vm3744 = vcmp.lt.s32.totalorder %v3616, 2500
        %vm3745 = vcmp.lt.s32.totalorder %v3617, 2500
        %vm3746 = vcmp.lt.s32.totalorder %v3618, 2500
        %vm3747 = vcmp.lt.s32.totalorder %v3619, 2500
        %vm3748 = vcmp.lt.s32.totalorder %v3620, 2500
        %vm3749 = vcmp.lt.s32.totalorder %v3621, 2500
        %vm3750 = vcmp.lt.s32.totalorder %v3622, 2500
        %vm3751 = vcmp.lt.s32.totalorder %v3623, 2500
        %vm3752 = vcmp.lt.s32.totalorder %v3624, 2500
        %vm3753 = vcmp.lt.s32.totalorder %v3625, 2500
        %vm3754 = vcmp.lt.s32.totalorder %v3626, 2500
        %vm3755 = vcmp.lt.s32.totalorder %v3627, 2500
        %vm3756 = vcmp.lt.s32.totalorder %v3628, 2500
        %vm3757 = vcmp.lt.s32.totalorder %v3629, 2500
        %vm3758 = vcmp.lt.s32.totalorder %v3630, 2500
        %vm3759 = vcmp.lt.s32.totalorder %v3631, 2500
        %vm3760 = vcmp.lt.s32.totalorder %v3632, 2500
        %vm3761 = vcmp.lt.s32.totalorder %v3633, 2500
        %vm3762 = vcmp.lt.s32.totalorder %v3634, 2500
        %vm3763 = vcmp.lt.s32.totalorder %v3635, 2500
        %vm3764 = vcmp.lt.s32.totalorder %v3636, 2500
        %vm3765 = vcmp.lt.s32.totalorder %v3637, 2500
        %vm3766 = vcmp.lt.s32.totalorder %v3638, 2500
        %vm3767 = vcmp.lt.s32.totalorder %v3639, 2500
        %vm3768 = vcmp.lt.s32.totalorder %v3640, 2500
        %vm3769 = vcmp.lt.s32.totalorder %v3641, 2500
        %vm3770 = vcmp.lt.s32.totalorder %v3642, 2500
        %vm3771 = vcmp.lt.s32.totalorder %v3643, 2500
        %vm3772 = vcmp.lt.s32.totalorder %v3644, 2500
        %vm3773 = vcmp.lt.s32.totalorder %v3645, 2500
        %vm3774 = vcmp.lt.s32.totalorder %v3646, 2500
        %vm3775 = vcmp.lt.s32.totalorder %v3647, 2500
        %vm3776 = vcmp.lt.s32.totalorder %v3648, 2500
        %vm3777 = vcmp.lt.s32.totalorder %v3649, 2500
        %vm3778 = vcmp.lt.s32.totalorder %v3650, 2500
        %vm3779 = vcmp.lt.s32.totalorder %v3651, 2500
        %vm3780 = vcmp.lt.s32.totalorder %v3652, 2500
        %vm3781 = vcmp.lt.s32.totalorder %v3653, 2500
        %vm3782 = vcmp.lt.s32.totalorder %v3654, 2500
        %vm3783 = vcmp.lt.s32.totalorder %v3655, 2500
        %vm3784 = vcmp.lt.s32.totalorder %v3656, 2500
        %vm3785 = vcmp.lt.s32.totalorder %v3657, 2500
        %vm3786 = vcmp.lt.s32.totalorder %v3658, 2500
        %vm3787 = vcmp.lt.s32.totalorder %v3659, 2500
        %vm3788 = vcmp.lt.s32.totalorder %v3660, 2500
        %vm3789 = vcmp.lt.s32.totalorder %v3661, 2500
        %vm3790 = vcmp.lt.s32.totalorder %v3662, 2500
        %vm3791 = vcmp.lt.s32.totalorder %v3663, 2500
        %vm3792 = vcmp.lt.s32.totalorder %v3664, 2500
        %vm3793 = vcmp.lt.s32.totalorder %v3665, 2500
        %vm3794 = vcmp.lt.s32.totalorder %v3666, 2500
        %vm3795 = vcmp.lt.s32.totalorder %v3667, 2500
        %vm3796 = vcmp.lt.s32.totalorder %v3668, 2500
        %vm3797 = vcmp.lt.s32.totalorder %v3669, 2500
        %vm3798 = vcmp.lt.s32.totalorder %v3670, 2500
        %vm3799 = vcmp.lt.s32.totalorder %v3671, 2500
        %vm3800 = vcmp.lt.s32.totalorder %v3672, 2500
        %vm3801 = vcmp.lt.s32.totalorder %v3673, 2500
        %vm3802 = vcmp.lt.s32.totalorder %v3674, 2500
        %vm3803 = vcmp.lt.s32.totalorder %v3675, 2500
        %vm3804 = vcmp.lt.s32.totalorder %v3676, 2500
        %vm3805 = vcmp.lt.s32.totalorder %v3677, 2500
        %vm3806 = vcmp.lt.s32.totalorder %v3678, 2500
        %vm3807 = vcmp.lt.s32.totalorder %v3679, 2500
        %vm3808 = vcmp.lt.s32.totalorder %v3680, 2500
        %vm3809 = vcmp.lt.s32.totalorder %v3681, 2500
        %vm3810 = vcmp.lt.s32.totalorder %v3682, 2500
        %vm3811 = vcmp.lt.s32.totalorder %v3683, 2500
        %vm3812 = vcmp.lt.s32.totalorder %v3684, 2500
        %vm3813 = vcmp.lt.s32.totalorder %v3685, 2500
        %vm3814 = vcmp.lt.s32.totalorder %v3686, 2500
        %vm3815 = vcmp.lt.s32.totalorder %v3687, 2500
        %vm3816 = vcmp.lt.s32.totalorder %v3688, 2500
        %vm3817 = vcmp.lt.s32.totalorder %v3689, 2500
        %vm3818 = vcmp.lt.s32.totalorder %v3690, 2500
        %vm3819 = vcmp.lt.s32.totalorder %v3691, 2500
        %vm3820 = vcmp.lt.s32.totalorder %v3692, 2500
        %vm3821 = vcmp.lt.s32.totalorder %v3693, 2500
        %vm3822 = vcmp.lt.s32.totalorder %v3694, 2500
        %vm3823 = vcmp.lt.s32.totalorder %v3695, 2500
        %vm3824 = vcmp.lt.s32.totalorder %v3696, 2500
        %vm3825 = vcmp.lt.s32.totalorder %v3697, 2500
        %vm3826 = vcmp.lt.s32.totalorder %v3698, 2500
        %vm3827 = vcmp.lt.s32.totalorder %v3699, 2500
        %vm3828 = vcmp.lt.s32.totalorder %v3700, 2500
        %vm3829 = vcmp.lt.s32.totalorder %v3701, 2500
        %vm3830 = vcmp.lt.s32.totalorder %v3702, 2500
        %vm3831 = vcmp.lt.s32.totalorder %v3703, 2500
        %vm3832 = vcmp.lt.s32.totalorder %v3704, 2500
        %vm3833 = vcmp.lt.s32.totalorder %v3705, 2500
        %vm3834 = vcmp.lt.s32.totalorder %v3706, 2500
        %vm3835 = vcmp.lt.s32.totalorder %v3707, 2500
        %vm3836 = vcmp.lt.s32.totalorder %v3708, 2500
        %vm3837 = vcmp.lt.s32.totalorder %v3709, 2500
        %vm3838 = vcmp.lt.s32.totalorder %v3710, 2500
        %vm3839 = vcmp.lt.s32.totalorder %v3711, 2500
        %vm3840 = vcmp.lt.s32.totalorder %v3712, 2500
        %vm3841 = vcmp.lt.s32.totalorder %v3713, 2500
        %vm3842 = vcmp.lt.s32.totalorder %v3714, 2500
        %vm3843 = vcmp.lt.s32.totalorder %v3715, 2500
        %vm3844 = vcmp.lt.s32.totalorder %v3716, 2500
        %vm3845 = vcmp.lt.s32.totalorder %v3717, 2500
        %vm3846 = vcmp.lt.s32.totalorder %v3718, 2500
        %vm3847 = vcmp.lt.s32.totalorder %v3719, 2500
        %vm3848 = vcmp.lt.s32.totalorder %v3720, 2500
        %vm3849 = vcmp.lt.s32.totalorder %v3721, 2500
        %vm3850 = vcmp.lt.s32.totalorder %v3722, 2500
        %vm3851 = vcmp.lt.s32.totalorder %v3723, 2500
        %vm3852 = vcmp.lt.s32.totalorder %v3724, 2500
        %vm3853 = vcmp.lt.s32.totalorder %v3725, 2500
        %vm3854 = vcmp.lt.s32.totalorder %v3726, 2500
        %vm3855 = vcmp.lt.s32.totalorder %v3727, 2500
        %vm3856 = vcmp.lt.s32.totalorder %v3728, 2500
        %vm3857 = vcmp.lt.s32.totalorder %v3729, 2500
        %vm3858 = vcmp.lt.s32.totalorder %v3730, 2500
        %vm3859 = vcmp.lt.s32.totalorder %v3731, 2500
        %vm3860 = vcmp.lt.s32.totalorder %v3732, 2500
        %vm3861 = vcmp.lt.s32.totalorder %v3733, 2500
        %vm3862 = vcmp.lt.s32.totalorder %v3734, 2500
        %vm3863 = vcmp.lt.s32.totalorder %v3735, 2500
        %vm3864 = vcmp.lt.s32.totalorder %v3736, 2500
        %vm3865 = vcmp.lt.s32.totalorder %v3737, 2500
        %vm3866 = vcmp.lt.s32.totalorder %v3738, 2500
        %vm3867 = vcmp.lt.s32.totalorder %v3739, 2500
        %vm3868 = vcmp.lt.s32.totalorder %v3740, 2500
        %vm3869 = vcmp.lt.s32.totalorder %v3741, 2500
        %v3870 = vsel %vm3742, %v3353, 0.0
        %v3871 = vsel %vm3743, %v3354, 0.0
        %v3872 = vsel %vm3744, %v3355, 0.0
        %v3873 = vsel %vm3745, %v3356, 0.0
        %v3874 = vsel %vm3746, %v3357, 0.0
        %v3875 = vsel %vm3747, %v3358, 0.0
        %v3876 = vsel %vm3748, %v3359, 0.0
        %v3877 = vsel %vm3749, %v3360, 0.0
        %v3878 = vsel %vm3750, %v3361, 0.0
        %v3879 = vsel %vm3751, %v3362, 0.0
        %v3880 = vsel %vm3752, %v3363, 0.0
        %v3881 = vsel %vm3753, %v3364, 0.0
        %v3882 = vsel %vm3754, %v3365, 0.0
        %v3883 = vsel %vm3755, %v3366, 0.0
        %v3884 = vsel %vm3756, %v3367, 0.0
        %v3885 = vsel %vm3757, %v3368, 0.0
        %v3886 = vsel %vm3758, %v3369, 0.0
        %v3887 = vsel %vm3759, %v3370, 0.0
        %v3888 = vsel %vm3760, %v3371, 0.0
        %v3889 = vsel %vm3761, %v3372, 0.0
        %v3890 = vsel %vm3762, %v3373, 0.0
        %v3891 = vsel %vm3763, %v3374, 0.0
        %v3892 = vsel %vm3764, %v3375, 0.0
        %v3893 = vsel %vm3765, %v3376, 0.0
        %v3894 = vsel %vm3766, %v3377, 0.0
        %v3895 = vsel %vm3767, %v3378, 0.0
        %v3896 = vsel %vm3768, %v3379, 0.0
        %v3897 = vsel %vm3769, %v3380, 0.0
        %v3898 = vsel %vm3770, %v3381, 0.0
        %v3899 = vsel %vm3771, %v3382, 0.0
        %v3900 = vsel %vm3772, %v3383, 0.0
        %v3901 = vsel %vm3773, %v3384, 0.0
        %v3902 = vsel %vm3774, %v3385, 0.0
        %v3903 = vsel %vm3775, %v3386, 0.0
        %v3904 = vsel %vm3776, %v3387, 0.0
        %v3905 = vsel %vm3777, %v3388, 0.0
        %v3906 = vsel %vm3778, %v3389, 0.0
        %v3907 = vsel %vm3779, %v3390, 0.0
        %v3908 = vsel %vm3780, %v3391, 0.0
        %v3909 = vsel %vm3781, %v3392, 0.0
        %v3910 = vsel %vm3782, %v3393, 0.0
        %v3911 = vsel %vm3783, %v3394, 0.0
        %v3912 = vsel %vm3784, %v3395, 0.0
        %v3913 = vsel %vm3785, %v3396, 0.0
        %v3914 = vsel %vm3786, %v3397, 0.0
        %v3915 = vsel %vm3787, %v3398, 0.0
        %v3916 = vsel %vm3788, %v3399, 0.0
        %v3917 = vsel %vm3789, %v3400, 0.0
        %v3918 = vsel %vm3790, %v3401, 0.0
        %v3919 = vsel %vm3791, %v3402, 0.0
        %v3920 = vsel %vm3792, %v3403, 0.0
        %v3921 = vsel %vm3793, %v3404, 0.0
        %v3922 = vsel %vm3794, %v3405, 0.0
        %v3923 = vsel %vm3795, %v3406, 0.0
        %v3924 = vsel %vm3796, %v3407, 0.0
        %v3925 = vsel %vm3797, %v3408, 0.0
        %v3926 = vsel %vm3798, %v3409, 0.0
        %v3927 = vsel %vm3799, %v3410, 0.0
        %v3928 = vsel %vm3800, %v3411, 0.0
        %v3929 = vsel %vm3801, %v3412, 0.0
        %v3930 = vsel %vm3802, %v3413, 0.0
        %v3931 = vsel %vm3803, %v3414, 0.0
        %v3932 = vsel %vm3804, %v3415, 0.0
        %v3933 = vsel %vm3805, %v3416, 0.0
        %v3934 = vsel %vm3806, %v3417, 0.0
        %v3935 = vsel %vm3807, %v3418, 0.0
        %v3936 = vsel %vm3808, %v3419, 0.0
        %v3937 = vsel %vm3809, %v3420, 0.0
        %v3938 = vsel %vm3810, %v3421, 0.0
        %v3939 = vsel %vm3811, %v3422, 0.0
        %v3940 = vsel %vm3812, %v3423, 0.0
        %v3941 = vsel %vm3813, %v3424, 0.0
        %v3942 = vsel %vm3814, %v3425, 0.0
        %v3943 = vsel %vm3815, %v3426, 0.0
        %v3944 = vsel %vm3816, %v3427, 0.0
        %v3945 = vsel %vm3817, %v3428, 0.0
        %v3946 = vsel %vm3818, %v3429, 0.0
        %v3947 = vsel %vm3819, %v3430, 0.0
        %v3948 = vsel %vm3820, %v3431, 0.0
        %v3949 = vsel %vm3821, %v3432, 0.0
        %v3950 = vsel %vm3822, %v3433, 0.0
        %v3951 = vsel %vm3823, %v3434, 0.0
        %v3952 = vsel %vm3824, %v3435, 0.0
        %v3953 = vsel %vm3825, %v3436, 0.0
        %v3954 = vsel %vm3826, %v3437, 0.0
        %v3955 = vsel %vm3827, %v3438, 0.0
        %v3956 = vsel %vm3828, %v3439, 0.0
        %v3957 = vsel %vm3829, %v3440, 0.0
        %v3958 = vsel %vm3830, %v3441, 0.0
        %v3959 = vsel %vm3831, %v3442, 0.0
        %v3960 = vsel %vm3832, %v3443, 0.0
        %v3961 = vsel %vm3833, %v3444, 0.0
        %v3962 = vsel %vm3834, %v3445, 0.0
        %v3963 = vsel %vm3835, %v3446, 0.0
        %v3964 = vsel %vm3836, %v3447, 0.0
        %v3965 = vsel %vm3837, %v3448, 0.0
        %v3966 = vsel %vm3838, %v3449, 0.0
        %v3967 = vsel %vm3839, %v3450, 0.0
        %v3968 = vsel %vm3840, %v3451, 0.0
        %v3969 = vsel %vm3841, %v3452, 0.0
        %v3970 = vsel %vm3842, %v3453, 0.0
        %v3971 = vsel %vm3843, %v3454, 0.0
        %v3972 = vsel %vm3844, %v3455, 0.0
        %v3973 = vsel %vm3845, %v3456, 0.0
        %v3974 = vsel %vm3846, %v3457, 0.0
        %v3975 = vsel %vm3847, %v3458, 0.0
        %v3976 = vsel %vm3848, %v3459, 0.0
        %v3977 = vsel %vm3849, %v3460, 0.0
        %v3978 = vsel %vm3850, %v3461, 0.0
        %v3979 = vsel %vm3851, %v3462, 0.0
        %v3980 = vsel %vm3852, %v3463, 0.0
        %v3981 = vsel %vm3853, %v3464, 0.0
        %v3982 = vsel %vm3854, %v3465, 0.0
        %v3983 = vsel %vm3855, %v3466, 0.0
        %v3984 = vsel %vm3856, %v3467, 0.0
        %v3985 = vsel %vm3857, %v3468, 0.0
        %v3986 = vsel %vm3858, %v3469, 0.0
        %v3987 = vsel %vm3859, %v3470, 0.0
        %v3988 = vsel %vm3860, %v3471, 0.0
        %v3989 = vsel %vm3861, %v3472, 0.0
        %v3990 = vsel %vm3862, %v3473, 0.0
        %v3991 = vsel %vm3863, %v3474, 0.0
        %v3992 = vsel %vm3864, %v3475, 0.0
        %v3993 = vsel %vm3865, %v3476, 0.0
        %v3994 = vsel %vm3866, %v3477, 0.0
        %v3995 = vsel %vm3867, %v3478, 0.0
        %v3996 = vsel %vm3868, %v3479, 0.0
        %v3997 = vsel %vm3869, %v3480, 0.0
        %v3998 = vld [vmem:[#allocation2] sm:$0xff]
        %v3999 = vld [vmem:[#allocation2 + $0x8] sm:$0xff]
        %v4000 = vld [vmem:[#allocation2 + $0x10] sm:$0xff]
        %v4001 = vld [vmem:[#allocation2 + $0x18] sm:$0xff]
        %v4002 = vld [vmem:[#allocation2 + $0x20] sm:$0xff]
        %v4003 = vld [vmem:[#allocation2 + $0x28] sm:$0xff]
        %v4004 = vld [vmem:[#allocation2 + $0x30] sm:$0xff]
        %v4005 = vld [vmem:[#allocation2 + $0x38] sm:$0xff]
        %v4006 = vld [vmem:[#allocation2 + $0x40] sm:$0xff]
        %v4007 = vld [vmem:[#allocation2 + $0x48] sm:$0xff]
        %v4008 = vld [vmem:[#allocation2 + $0x50] sm:$0xff]
        %v4009 = vld [vmem:[#allocation2 + $0x58] sm:$0xff]
        %v4010 = vld [vmem:[#allocation2 + $0x60] sm:$0xff]
        %v4011 = vld [vmem:[#allocation2 + $0x68] sm:$0xff]
        %v4012 = vld [vmem:[#allocation2 + $0x70] sm:$0xff]
        %v4013 = vld [vmem:[#allocation2 + $0x78] sm:$0xff]
        %v4014 = vld [vmem:[#allocation2 + $0x80] sm:$0xff]
        %v4015 = vld [vmem:[#allocation2 + $0x88] sm:$0xff]
        %v4016 = vld [vmem:[#allocation2 + $0x90] sm:$0xff]
        %v4017 = vld [vmem:[#allocation2 + $0x98] sm:$0xff]
        %v4018 = vld [vmem:[#allocation2 + $0xa0] sm:$0xff]
        %v4019 = vld [vmem:[#allocation2 + $0xa8] sm:$0xff]
        %v4020 = vld [vmem:[#allocation2 + $0xb0] sm:$0xff]
        %v4021 = vld [vmem:[#allocation2 + $0xb8] sm:$0xff]
        %v4022 = vld [vmem:[#allocation2 + $0xc0] sm:$0xff]
        %v4023 = vld [vmem:[#allocation2 + $0xc8] sm:$0xff]
        %v4024 = vld [vmem:[#allocation2 + $0xd0] sm:$0xff]
        %v4025 = vld [vmem:[#allocation2 + $0xd8] sm:$0xff]
        %v4026 = vld [vmem:[#allocation2 + $0xe0] sm:$0xff]
        %v4027 = vld [vmem:[#allocation2 + $0xe8] sm:$0xff]
        %v4028 = vld [vmem:[#allocation2 + $0xf0] sm:$0xff]
        %v4029 = vld [vmem:[#allocation2 + $0xf8] sm:$0xff]
        %v4030 = vld [vmem:[#allocation2 + $0x100] sm:$0xff]
        %v4031 = vld [vmem:[#allocation2 + $0x108] sm:$0xff]
        %v4032 = vld [vmem:[#allocation2 + $0x110] sm:$0xff]
        %v4033 = vld [vmem:[#allocation2 + $0x118] sm:$0xff]
        %v4034 = vld [vmem:[#allocation2 + $0x120] sm:$0xff]
        %v4035 = vld [vmem:[#allocation2 + $0x128] sm:$0xff]
        %v4036 = vld [vmem:[#allocation2 + $0x130] sm:$0xff]
        %v4037 = vld [vmem:[#allocation2 + $0x138] sm:$0xff]
        %v4038 = vld [vmem:[#allocation2 + $0x140] sm:$0xff]
        %v4039 = vld [vmem:[#allocation2 + $0x148] sm:$0xff]
        %v4040 = vld [vmem:[#allocation2 + $0x150] sm:$0xff]
        %v4041 = vld [vmem:[#allocation2 + $0x158] sm:$0xff]
        %v4042 = vld [vmem:[#allocation2 + $0x160] sm:$0xff]
        %v4043 = vld [vmem:[#allocation2 + $0x168] sm:$0xff]
        %v4044 = vld [vmem:[#allocation2 + $0x170] sm:$0xff]
        %v4045 = vld [vmem:[#allocation2 + $0x178] sm:$0xff]
        %v4046 = vld [vmem:[#allocation2 + $0x180] sm:$0xff]
        %v4047 = vld [vmem:[#allocation2 + $0x188] sm:$0xff]
        %v4048 = vld [vmem:[#allocation2 + $0x190] sm:$0xff]
        %v4049 = vld [vmem:[#allocation2 + $0x198] sm:$0xff]
        %v4050 = vld [vmem:[#allocation2 + $0x1a0] sm:$0xff]
        %v4051 = vld [vmem:[#allocation2 + $0x1a8] sm:$0xff]
        %v4052 = vld [vmem:[#allocation2 + $0x1b0] sm:$0xff]
        %v4053 = vld [vmem:[#allocation2 + $0x1b8] sm:$0xff]
        %v4054 = vld [vmem:[#allocation2 + $0x1c0] sm:$0xff]
        %v4055 = vld [vmem:[#allocation2 + $0x1c8] sm:$0xff]
        %v4056 = vld [vmem:[#allocation2 + $0x1d0] sm:$0xff]
        %v4057 = vld [vmem:[#allocation2 + $0x1d8] sm:$0xff]
        %v4058 = vld [vmem:[#allocation2 + $0x1e0] sm:$0xff]
        %v4059 = vld [vmem:[#allocation2 + $0x1e8] sm:$0xff]
        %v4060 = vld [vmem:[#allocation2 + $0x1f0] sm:$0xff]
        %v4061 = vld [vmem:[#allocation2 + $0x1f8] sm:$0xff]
        %v4062 = vld [vmem:[#allocation2 + $0x200] sm:$0xff]
        %v4063 = vld [vmem:[#allocation2 + $0x208] sm:$0xff]
        %v4064 = vld [vmem:[#allocation2 + $0x210] sm:$0xff]
        %v4065 = vld [vmem:[#allocation2 + $0x218] sm:$0xff]
        %v4066 = vld [vmem:[#allocation2 + $0x220] sm:$0xff]
        %v4067 = vld [vmem:[#allocation2 + $0x228] sm:$0xff]
        %v4068 = vld [vmem:[#allocation2 + $0x230] sm:$0xff]
        %v4069 = vld [vmem:[#allocation2 + $0x238] sm:$0xff]
        %v4070 = vld [vmem:[#allocation2 + $0x240] sm:$0xff]
        %v4071 = vld [vmem:[#allocation2 + $0x248] sm:$0xff]
        %v4072 = vld [vmem:[#allocation2 + $0x250] sm:$0xff]
        %v4073 = vld [vmem:[#allocation2 + $0x258] sm:$0xff]
        %v4074 = vld [vmem:[#allocation2 + $0x260] sm:$0xff]
        %v4075 = vld [vmem:[#allocation2 + $0x268] sm:$0xff]
        %v4076 = vld [vmem:[#allocation2 + $0x270] sm:$0xff]
        %v4077 = vld [vmem:[#allocation2 + $0x278] sm:$0xff]
        %v4078 = vld [vmem:[#allocation2 + $0x280] sm:$0xff]
        %v4079 = vld [vmem:[#allocation2 + $0x288] sm:$0xff]
        %v4080 = vld [vmem:[#allocation2 + $0x290] sm:$0xff]
        %v4081 = vld [vmem:[#allocation2 + $0x298] sm:$0xff]
        %v4082 = vld [vmem:[#allocation2 + $0x2a0] sm:$0xff]
        %v4083 = vld [vmem:[#allocation2 + $0x2a8] sm:$0xff]
        %v4084 = vld [vmem:[#allocation2 + $0x2b0] sm:$0xff]
        %v4085 = vld [vmem:[#allocation2 + $0x2b8] sm:$0xff]
        %v4086 = vld [vmem:[#allocation2 + $0x2c0] sm:$0xff]
        %v4087 = vld [vmem:[#allocation2 + $0x2c8] sm:$0xff]
        %v4088 = vld [vmem:[#allocation2 + $0x2d0] sm:$0xff]
        %v4089 = vld [vmem:[#allocation2 + $0x2d8] sm:$0xff]
        %v4090 = vld [vmem:[#allocation2 + $0x2e0] sm:$0xff]
        %v4091 = vld [vmem:[#allocation2 + $0x2e8] sm:$0xff]
        %v4092 = vld [vmem:[#allocation2 + $0x2f0] sm:$0xff]
        %v4093 = vld [vmem:[#allocation2 + $0x2f8] sm:$0xff]
        %v4094 = vld [vmem:[#allocation2 + $0x300] sm:$0xff]
        %v4095 = vld [vmem:[#allocation2 + $0x308] sm:$0xff]
        %v4096 = vld [vmem:[#allocation2 + $0x310] sm:$0xff]
        %v4097 = vld [vmem:[#allocation2 + $0x318] sm:$0xff]
        %v4098 = vld [vmem:[#allocation2 + $0x320] sm:$0xff]
        %v4099 = vld [vmem:[#allocation2 + $0x328] sm:$0xff]
        %v4100 = vld [vmem:[#allocation2 + $0x330] sm:$0xff]
        %v4101 = vld [vmem:[#allocation2 + $0x338] sm:$0xff]
        %v4102 = vld [vmem:[#allocation2 + $0x340] sm:$0xff]
        %v4103 = vld [vmem:[#allocation2 + $0x348] sm:$0xff]
        %v4104 = vld [vmem:[#allocation2 + $0x350] sm:$0xff]
        %v4105 = vld [vmem:[#allocation2 + $0x358] sm:$0xff]
        %v4106 = vld [vmem:[#allocation2 + $0x360] sm:$0xff]
        %v4107 = vld [vmem:[#allocation2 + $0x368] sm:$0xff]
        %v4108 = vld [vmem:[#allocation2 + $0x370] sm:$0xff]
        %v4109 = vld [vmem:[#allocation2 + $0x378] sm:$0xff]
        %v4110 = vld [vmem:[#allocation2 + $0x380] sm:$0xff]
        %v4111 = vld [vmem:[#allocation2 + $0x388] sm:$0xff]
        %v4112 = vld [vmem:[#allocation2 + $0x390] sm:$0xff]
        %v4113 = vld [vmem:[#allocation2 + $0x398] sm:$0xff]
        %v4114 = vld [vmem:[#allocation2 + $0x3a0] sm:$0xff]
        %v4115 = vld [vmem:[#allocation2 + $0x3a8] sm:$0xff]
        %v4116 = vld [vmem:[#allocation2 + $0x3b0] sm:$0xff]
        %v4117 = vld [vmem:[#allocation2 + $0x3b8] sm:$0xff]
        %v4118 = vld [vmem:[#allocation2 + $0x3c0] sm:$0xff]
        %v4119 = vld [vmem:[#allocation2 + $0x3c8] sm:$0xff]
        %v4120 = vld [vmem:[#allocation2 + $0x3d0] sm:$0xff]
        %v4121 = vld [vmem:[#allocation2 + $0x3d8] sm:$0xff]
        %v4122 = vld [vmem:[#allocation2 + $0x3e0] sm:$0xff]
        %v4123 = vld [vmem:[#allocation2 + $0x3e8] sm:$0xff]
        %v4124 = vld [vmem:[#allocation2 + $0x3f0] sm:$0xff]
        %v4125 = vld [vmem:[#allocation2 + $0x3f8] sm:$0xff]
        %v4126 = vadd.f32 %v3998, %v3870
        %v4127 = vadd.f32 %v3999, %v3871
        %v4128 = vadd.f32 %v4000, %v3872
        %v4129 = vadd.f32 %v4001, %v3873
        %v4130 = vadd.f32 %v4002, %v3874
        %v4131 = vadd.f32 %v4003, %v3875
        %v4132 = vadd.f32 %v4004, %v3876
        %v4133 = vadd.f32 %v4005, %v3877
        %v4134 = vadd.f32 %v4006, %v3878
        %v4135 = vadd.f32 %v4007, %v3879
        %v4136 = vadd.f32 %v4008, %v3880
        %v4137 = vadd.f32 %v4009, %v3881
        %v4138 = vadd.f32 %v4010, %v3882
        %v4139 = vadd.f32 %v4011, %v3883
        %v4140 = vadd.f32 %v4012, %v3884
        %v4141 = vadd.f32 %v4013, %v3885
        %v4142 = vadd.f32 %v4014, %v3886
        %v4143 = vadd.f32 %v4015, %v3887
        %v4144 = vadd.f32 %v4016, %v3888
        %v4145 = vadd.f32 %v4017, %v3889
        %v4146 = vadd.f32 %v4018, %v3890
        %v4147 = vadd.f32 %v4019, %v3891
        %v4148 = vadd.f32 %v4020, %v3892
        %v4149 = vadd.f32 %v4021, %v3893
        %v4150 = vadd.f32 %v4022, %v3894
        %v4151 = vadd.f32 %v4023, %v3895
        %v4152 = vadd.f32 %v4024, %v3896
        %v4153 = vadd.f32 %v4025, %v3897
        %v4154 = vadd.f32 %v4026, %v3898
        %v4155 = vadd.f32 %v4027, %v3899
        %v4156 = vadd.f32 %v4028, %v3900
        %v4157 = vadd.f32 %v4029, %v3901
        %v4158 = vadd.f32 %v4030, %v3902
        %v4159 = vadd.f32 %v4031, %v3903
        %v4160 = vadd.f32 %v4032, %v3904
        %v4161 = vadd.f32 %v4033, %v3905
        %v4162 = vadd.f32 %v4034, %v3906
        %v4163 = vadd.f32 %v4035, %v3907
        %v4164 = vadd.f32 %v4036, %v3908
        %v4165 = vadd.f32 %v4037, %v3909
        %v4166 = vadd.f32 %v4038, %v3910
        %v4167 = vadd.f32 %v4039, %v3911
        %v4168 = vadd.f32 %v4040, %v3912
        %v4169 = vadd.f32 %v4041, %v3913
        %v4170 = vadd.f32 %v4042, %v3914
        %v4171 = vadd.f32 %v4043, %v3915
        %v4172 = vadd.f32 %v4044, %v3916
        %v4173 = vadd.f32 %v4045, %v3917
        %v4174 = vadd.f32 %v4046, %v3918
        %v4175 = vadd.f32 %v4047, %v3919
        %v4176 = vadd.f32 %v4048, %v3920
        %v4177 = vadd.f32 %v4049, %v3921
        %v4178 = vadd.f32 %v4050, %v3922
        %v4179 = vadd.f32 %v4051, %v3923
        %v4180 = vadd.f32 %v4052, %v3924
        %v4181 = vadd.f32 %v4053, %v3925
        %v4182 = vadd.f32 %v4054, %v3926
        %v4183 = vadd.f32 %v4055, %v3927
        %v4184 = vadd.f32 %v4056, %v3928
        %v4185 = vadd.f32 %v4057, %v3929
        %v4186 = vadd.f32 %v4058, %v3930
        %v4187 = vadd.f32 %v4059, %v3931
        %v4188 = vadd.f32 %v4060, %v3932
        %v4189 = vadd.f32 %v4061, %v3933
        %v4190 = vadd.f32 %v4062, %v3934
        %v4191 = vadd.f32 %v4063, %v3935
        %v4192 = vadd.f32 %v4064, %v3936
        %v4193 = vadd.f32 %v4065, %v3937
        %v4194 = vadd.f32 %v4066, %v3938
        %v4195 = vadd.f32 %v4067, %v3939
        %v4196 = vadd.f32 %v4068, %v3940
        %v4197 = vadd.f32 %v4069, %v3941
        %v4198 = vadd.f32 %v4070, %v3942
        %v4199 = vadd.f32 %v4071, %v3943
        %v4200 = vadd.f32 %v4072, %v3944
        %v4201 = vadd.f32 %v4073, %v3945
        %v4202 = vadd.f32 %v4074, %v3946
        %v4203 = vadd.f32 %v4075, %v3947
        %v4204 = vadd.f32 %v4076, %v3948
        %v4205 = vadd.f32 %v4077, %v3949
        %v4206 = vadd.f32 %v4078, %v3950
        %v4207 = vadd.f32 %v4079, %v3951
        %v4208 = vadd.f32 %v4080, %v3952
        %v4209 = vadd.f32 %v4081, %v3953
        %v4210 = vadd.f32 %v4082, %v3954
        %v4211 = vadd.f32 %v4083, %v3955
        %v4212 = vadd.f32 %v4084, %v3956
        %v4213 = vadd.f32 %v4085, %v3957
        %v4214 = vadd.f32 %v4086, %v3958
        %v4215 = vadd.f32 %v4087, %v3959
        %v4216 = vadd.f32 %v4088, %v3960
        %v4217 = vadd.f32 %v4089, %v3961
        %v4218 = vadd.f32 %v4090, %v3962
        %v4219 = vadd.f32 %v4091, %v3963
        %v4220 = vadd.f32 %v4092, %v3964
        %v4221 = vadd.f32 %v4093, %v3965
        %v4222 = vadd.f32 %v4094, %v3966
        %v4223 = vadd.f32 %v4095, %v3967
        %v4224 = vadd.f32 %v4096, %v3968
        %v4225 = vadd.f32 %v4097, %v3969
        %v4226 = vadd.f32 %v4098, %v3970
        %v4227 = vadd.f32 %v4099, %v3971
        %v4228 = vadd.f32 %v4100, %v3972
        %v4229 = vadd.f32 %v4101, %v3973
        %v4230 = vadd.f32 %v4102, %v3974
        %v4231 = vadd.f32 %v4103, %v3975
        %v4232 = vadd.f32 %v4104, %v3976
        %v4233 = vadd.f32 %v4105, %v3977
        %v4234 = vadd.f32 %v4106, %v3978
        %v4235 = vadd.f32 %v4107, %v3979
        %v4236 = vadd.f32 %v4108, %v3980
        %v4237 = vadd.f32 %v4109, %v3981
        %v4238 = vadd.f32 %v4110, %v3982
        %v4239 = vadd.f32 %v4111, %v3983
        %v4240 = vadd.f32 %v4112, %v3984
        %v4241 = vadd.f32 %v4113, %v3985
        %v4242 = vadd.f32 %v4114, %v3986
        %v4243 = vadd.f32 %v4115, %v3987
        %v4244 = vadd.f32 %v4116, %v3988
        %v4245 = vadd.f32 %v4117, %v3989
        %v4246 = vadd.f32 %v4118, %v3990
        %v4247 = vadd.f32 %v4119, %v3991
        %v4248 = vadd.f32 %v4120, %v3992
        %v4249 = vadd.f32 %v4121, %v3993
        %v4250 = vadd.f32 %v4122, %v3994
        %v4251 = vadd.f32 %v4123, %v3995
        %v4252 = vadd.f32 %v4124, %v3996
        %v4253 = vadd.f32 %v4125, %v3997
        %vm4254 = vcmask 7168
        %4255 = vst.msk [vmem:[#allocation2] sm:$0xff] %vm4254, %v4126
        %4256 = vst.msk [vmem:[#allocation2 + $0x8] sm:$0xff] %vm4254, %v4127
        %4257 = vst.msk [vmem:[#allocation2 + $0x10] sm:$0xff] %vm4254, %v4128
        %4258 = vst.msk [vmem:[#allocation2 + $0x18] sm:$0xff] %vm4254, %v4129
        %4259 = vst.msk [vmem:[#allocation2 + $0x20] sm:$0xff] %vm4254, %v4130
        %4260 = vst.msk [vmem:[#allocation2 + $0x28] sm:$0xff] %vm4254, %v4131
        %4261 = vst.msk [vmem:[#allocation2 + $0x30] sm:$0xff] %vm4254, %v4132
        %4262 = vst.msk [vmem:[#allocation2 + $0x38] sm:$0xff] %vm4254, %v4133
        %4263 = vst.msk [vmem:[#allocation2 + $0x40] sm:$0xff] %vm4254, %v4134
        %4264 = vst.msk [vmem:[#allocation2 + $0x48] sm:$0xff] %vm4254, %v4135
        %4265 = vst.msk [vmem:[#allocation2 + $0x50] sm:$0xff] %vm4254, %v4136
        %4266 = vst.msk [vmem:[#allocation2 + $0x58] sm:$0xff] %vm4254, %v4137
        %4267 = vst.msk [vmem:[#allocation2 + $0x60] sm:$0xff] %vm4254, %v4138
        %4268 = vst.msk [vmem:[#allocation2 + $0x68] sm:$0xff] %vm4254, %v4139
        %4269 = vst.msk [vmem:[#allocation2 + $0x70] sm:$0xff] %vm4254, %v4140
        %4270 = vst.msk [vmem:[#allocation2 + $0x78] sm:$0xff] %vm4254, %v4141
        %4271 = vst.msk [vmem:[#allocation2 + $0x80] sm:$0xff] %vm4254, %v4142
        %4272 = vst.msk [vmem:[#allocation2 + $0x88] sm:$0xff] %vm4254, %v4143
        %4273 = vst.msk [vmem:[#allocation2 + $0x90] sm:$0xff] %vm4254, %v4144
        %4274 = vst.msk [vmem:[#allocation2 + $0x98] sm:$0xff] %vm4254, %v4145
        %4275 = vst.msk [vmem:[#allocation2 + $0xa0] sm:$0xff] %vm4254, %v4146
        %4276 = vst.msk [vmem:[#allocation2 + $0xa8] sm:$0xff] %vm4254, %v4147
        %4277 = vst.msk [vmem:[#allocation2 + $0xb0] sm:$0xff] %vm4254, %v4148
        %4278 = vst.msk [vmem:[#allocation2 + $0xb8] sm:$0xff] %vm4254, %v4149
        %4279 = vst.msk [vmem:[#allocation2 + $0xc0] sm:$0xff] %vm4254, %v4150
        %4280 = vst.msk [vmem:[#allocation2 + $0xc8] sm:$0xff] %vm4254, %v4151
        %4281 = vst.msk [vmem:[#allocation2 + $0xd0] sm:$0xff] %vm4254, %v4152
        %4282 = vst.msk [vmem:[#allocation2 + $0xd8] sm:$0xff] %vm4254, %v4153
        %4283 = vst.msk [vmem:[#allocation2 + $0xe0] sm:$0xff] %vm4254, %v4154
        %4284 = vst.msk [vmem:[#allocation2 + $0xe8] sm:$0xff] %vm4254, %v4155
        %4285 = vst.msk [vmem:[#allocation2 + $0xf0] sm:$0xff] %vm4254, %v4156
        %4286 = vst.msk [vmem:[#allocation2 + $0xf8] sm:$0xff] %vm4254, %v4157
        %4287 = vst.msk [vmem:[#allocation2 + $0x100] sm:$0xff] %vm4254, %v4158
        %4288 = vst.msk [vmem:[#allocation2 + $0x108] sm:$0xff] %vm4254, %v4159
        %4289 = vst.msk [vmem:[#allocation2 + $0x110] sm:$0xff] %vm4254, %v4160
        %4290 = vst.msk [vmem:[#allocation2 + $0x118] sm:$0xff] %vm4254, %v4161
        %4291 = vst.msk [vmem:[#allocation2 + $0x120] sm:$0xff] %vm4254, %v4162
        %4292 = vst.msk [vmem:[#allocation2 + $0x128] sm:$0xff] %vm4254, %v4163
        %4293 = vst.msk [vmem:[#allocation2 + $0x130] sm:$0xff] %vm4254, %v4164
        %4294 = vst.msk [vmem:[#allocation2 + $0x138] sm:$0xff] %vm4254, %v4165
        %4295 = vst.msk [vmem:[#allocation2 + $0x140] sm:$0xff] %vm4254, %v4166
        %4296 = vst.msk [vmem:[#allocation2 + $0x148] sm:$0xff] %vm4254, %v4167
        %4297 = vst.msk [vmem:[#allocation2 + $0x150] sm:$0xff] %vm4254, %v4168
        %4298 = vst.msk [vmem:[#allocation2 + $0x158] sm:$0xff] %vm4254, %v4169
        %4299 = vst.msk [vmem:[#allocation2 + $0x160] sm:$0xff] %vm4254, %v4170
        %4300 = vst.msk [vmem:[#allocation2 + $0x168] sm:$0xff] %vm4254, %v4171
        %4301 = vst.msk [vmem:[#allocation2 + $0x170] sm:$0xff] %vm4254, %v4172
        %4302 = vst.msk [vmem:[#allocation2 + $0x178] sm:$0xff] %vm4254, %v4173
        %4303 = vst.msk [vmem:[#allocation2 + $0x180] sm:$0xff] %vm4254, %v4174
        %4304 = vst.msk [vmem:[#allocation2 + $0x188] sm:$0xff] %vm4254, %v4175
        %4305 = vst.msk [vmem:[#allocation2 + $0x190] sm:$0xff] %vm4254, %v4176
        %4306 = vst.msk [vmem:[#allocation2 + $0x198] sm:$0xff] %vm4254, %v4177
        %4307 = vst.msk [vmem:[#allocation2 + $0x1a0] sm:$0xff] %vm4254, %v4178
        %4308 = vst.msk [vmem:[#allocation2 + $0x1a8] sm:$0xff] %vm4254, %v4179
        %4309 = vst.msk [vmem:[#allocation2 + $0x1b0] sm:$0xff] %vm4254, %v4180
        %4310 = vst.msk [vmem:[#allocation2 + $0x1b8] sm:$0xff] %vm4254, %v4181
        %4311 = vst.msk [vmem:[#allocation2 + $0x1c0] sm:$0xff] %vm4254, %v4182
        %4312 = vst.msk [vmem:[#allocation2 + $0x1c8] sm:$0xff] %vm4254, %v4183
        %4313 = vst.msk [vmem:[#allocation2 + $0x1d0] sm:$0xff] %vm4254, %v4184
        %4314 = vst.msk [vmem:[#allocation2 + $0x1d8] sm:$0xff] %vm4254, %v4185
        %4315 = vst.msk [vmem:[#allocation2 + $0x1e0] sm:$0xff] %vm4254, %v4186
        %4316 = vst.msk [vmem:[#allocation2 + $0x1e8] sm:$0xff] %vm4254, %v4187
        %4317 = vst.msk [vmem:[#allocation2 + $0x1f0] sm:$0xff] %vm4254, %v4188
        %4318 = vst.msk [vmem:[#allocation2 + $0x1f8] sm:$0xff] %vm4254, %v4189
        %4319 = vst.msk [vmem:[#allocation2 + $0x200] sm:$0xff] %vm4254, %v4190
        %4320 = vst.msk [vmem:[#allocation2 + $0x208] sm:$0xff] %vm4254, %v4191
        %4321 = vst.msk [vmem:[#allocation2 + $0x210] sm:$0xff] %vm4254, %v4192
        %4322 = vst.msk [vmem:[#allocation2 + $0x218] sm:$0xff] %vm4254, %v4193
        %4323 = vst.msk [vmem:[#allocation2 + $0x220] sm:$0xff] %vm4254, %v4194
        %4324 = vst.msk [vmem:[#allocation2 + $0x228] sm:$0xff] %vm4254, %v4195
        %4325 = vst.msk [vmem:[#allocation2 + $0x230] sm:$0xff] %vm4254, %v4196
        %4326 = vst.msk [vmem:[#allocation2 + $0x238] sm:$0xff] %vm4254, %v4197
        %4327 = vst.msk [vmem:[#allocation2 + $0x240] sm:$0xff] %vm4254, %v4198
        %4328 = vst.msk [vmem:[#allocation2 + $0x248] sm:$0xff] %vm4254, %v4199
        %4329 = vst.msk [vmem:[#allocation2 + $0x250] sm:$0xff] %vm4254, %v4200
        %4330 = vst.msk [vmem:[#allocation2 + $0x258] sm:$0xff] %vm4254, %v4201
        %4331 = vst.msk [vmem:[#allocation2 + $0x260] sm:$0xff] %vm4254, %v4202
        %4332 = vst.msk [vmem:[#allocation2 + $0x268] sm:$0xff] %vm4254, %v4203
        %4333 = vst.msk [vmem:[#allocation2 + $0x270] sm:$0xff] %vm4254, %v4204
        %4334 = vst.msk [vmem:[#allocation2 + $0x278] sm:$0xff] %vm4254, %v4205
        %4335 = vst.msk [vmem:[#allocation2 + $0x280] sm:$0xff] %vm4254, %v4206
        %4336 = vst.msk [vmem:[#allocation2 + $0x288] sm:$0xff] %vm4254, %v4207
        %4337 = vst.msk [vmem:[#allocation2 + $0x290] sm:$0xff] %vm4254, %v4208
        %4338 = vst.msk [vmem:[#allocation2 + $0x298] sm:$0xff] %vm4254, %v4209
        %4339 = vst.msk [vmem:[#allocation2 + $0x2a0] sm:$0xff] %vm4254, %v4210
        %4340 = vst.msk [vmem:[#allocation2 + $0x2a8] sm:$0xff] %vm4254, %v4211
        %4341 = vst.msk [vmem:[#allocation2 + $0x2b0] sm:$0xff] %vm4254, %v4212
        %4342 = vst.msk [vmem:[#allocation2 + $0x2b8] sm:$0xff] %vm4254, %v4213
        %4343 = vst.msk [vmem:[#allocation2 + $0x2c0] sm:$0xff] %vm4254, %v4214
        %4344 = vst.msk [vmem:[#allocation2 + $0x2c8] sm:$0xff] %vm4254, %v4215
        %4345 = vst.msk [vmem:[#allocation2 + $0x2d0] sm:$0xff] %vm4254, %v4216
        %4346 = vst.msk [vmem:[#allocation2 + $0x2d8] sm:$0xff] %vm4254, %v4217
        %4347 = vst.msk [vmem:[#allocation2 + $0x2e0] sm:$0xff] %vm4254, %v4218
        %4348 = vst.msk [vmem:[#allocation2 + $0x2e8] sm:$0xff] %vm4254, %v4219
        %4349 = vst.msk [vmem:[#allocation2 + $0x2f0] sm:$0xff] %vm4254, %v4220
        %4350 = vst.msk [vmem:[#allocation2 + $0x2f8] sm:$0xff] %vm4254, %v4221
        %4351 = vst.msk [vmem:[#allocation2 + $0x300] sm:$0xff] %vm4254, %v4222
        %4352 = vst.msk [vmem:[#allocation2 + $0x308] sm:$0xff] %vm4254, %v4223
        %4353 = vst.msk [vmem:[#allocation2 + $0x310] sm:$0xff] %vm4254, %v4224
        %4354 = vst.msk [vmem:[#allocation2 + $0x318] sm:$0xff] %vm4254, %v4225
        %4355 = vst.msk [vmem:[#allocation2 + $0x320] sm:$0xff] %vm4254, %v4226
        %4356 = vst.msk [vmem:[#allocation2 + $0x328] sm:$0xff] %vm4254, %v4227
        %4357 = vst.msk [vmem:[#allocation2 + $0x330] sm:$0xff] %vm4254, %v4228
        %4358 = vst.msk [vmem:[#allocation2 + $0x338] sm:$0xff] %vm4254, %v4229
        %4359 = vst.msk [vmem:[#allocation2 + $0x340] sm:$0xff] %vm4254, %v4230
        %4360 = vst.msk [vmem:[#allocation2 + $0x348] sm:$0xff] %vm4254, %v4231
        %4361 = vst.msk [vmem:[#allocation2 + $0x350] sm:$0xff] %vm4254, %v4232
        %4362 = vst.msk [vmem:[#allocation2 + $0x358] sm:$0xff] %vm4254, %v4233
        %4363 = vst.msk [vmem:[#allocation2 + $0x360] sm:$0xff] %vm4254, %v4234
        %4364 = vst.msk [vmem:[#allocation2 + $0x368] sm:$0xff] %vm4254, %v4235
        %4365 = vst.msk [vmem:[#allocation2 + $0x370] sm:$0xff] %vm4254, %v4236
        %4366 = vst.msk [vmem:[#allocation2 + $0x378] sm:$0xff] %vm4254, %v4237
        %4367 = vst.msk [vmem:[#allocation2 + $0x380] sm:$0xff] %vm4254, %v4238
        %4368 = vst.msk [vmem:[#allocation2 + $0x388] sm:$0xff] %vm4254, %v4239
        %4369 = vst.msk [vmem:[#allocation2 + $0x390] sm:$0xff] %vm4254, %v4240
        %4370 = vst.msk [vmem:[#allocation2 + $0x398] sm:$0xff] %vm4254, %v4241
        %4371 = vst.msk [vmem:[#allocation2 + $0x3a0] sm:$0xff] %vm4254, %v4242
        %4372 = vst.msk [vmem:[#allocation2 + $0x3a8] sm:$0xff] %vm4254, %v4243
        %4373 = vst.msk [vmem:[#allocation2 + $0x3b0] sm:$0xff] %vm4254, %v4244
        %4374 = vst.msk [vmem:[#allocation2 + $0x3b8] sm:$0xff] %vm4254, %v4245
        %4375 = vst.msk [vmem:[#allocation2 + $0x3c0] sm:$0xff] %vm4254, %v4246
        %4376 = vst.msk [vmem:[#allocation2 + $0x3c8] sm:$0xff] %vm4254, %v4247
        %4377 = vst.msk [vmem:[#allocation2 + $0x3d0] sm:$0xff] %vm4254, %v4248
        %4378 = vst.msk [vmem:[#allocation2 + $0x3d8] sm:$0xff] %vm4254, %v4249
        %4379 = vst.msk [vmem:[#allocation2 + $0x3e0] sm:$0xff] %vm4254, %v4250
        %4380 = vst.msk [vmem:[#allocation2 + $0x3e8] sm:$0xff] %vm4254, %v4251
        %4381 = vst.msk [vmem:[#allocation2 + $0x3f0] sm:$0xff] %vm4254, %v4252
        %4382 = vst.msk [vmem:[#allocation2 + $0x3f8] sm:$0xff] %vm4254, %v4253
        %p4383 = scmp.eq.s32.totalorder %s21, 1
        // Predicated region
        $region33: #{tpu_custom_call.1} parent=27 // pred_check
          %p4384 = pneg %p4383
        $region34: #{tpu_custom_call.1} parent=27 // pred_check_branch
          %4386 = sbr.rel (%p4384) target = $region36
        $region35: #{tpu_custom_call.1} parent=27 // pred_region
          %v4387 = vld [vmem:[#allocation2] sm:$0xff]
          %v4388 = vld [vmem:[#allocation2 + $0x8] sm:$0xff]
          %v4389 = vld [vmem:[#allocation2 + $0x10] sm:$0xff]
          %v4390 = vld [vmem:[#allocation2 + $0x18] sm:$0xff]
          %v4391 = vld [vmem:[#allocation2 + $0x20] sm:$0xff]
          %v4392 = vld [vmem:[#allocation2 + $0x28] sm:$0xff]
          %v4393 = vld [vmem:[#allocation2 + $0x30] sm:$0xff]
          %v4394 = vld [vmem:[#allocation2 + $0x38] sm:$0xff]
          %v4395 = vld [vmem:[#allocation2 + $0x40] sm:$0xff]
          %v4396 = vld [vmem:[#allocation2 + $0x48] sm:$0xff]
          %v4397 = vld [vmem:[#allocation2 + $0x50] sm:$0xff]
          %v4398 = vld [vmem:[#allocation2 + $0x58] sm:$0xff]
          %v4399 = vld [vmem:[#allocation2 + $0x60] sm:$0xff]
          %v4400 = vld [vmem:[#allocation2 + $0x68] sm:$0xff]
          %v4401 = vld [vmem:[#allocation2 + $0x70] sm:$0xff]
          %v4402 = vld [vmem:[#allocation2 + $0x78] sm:$0xff]
          %v4403 = vld [vmem:[#allocation2 + $0x80] sm:$0xff]
          %v4404 = vld [vmem:[#allocation2 + $0x88] sm:$0xff]
          %v4405 = vld [vmem:[#allocation2 + $0x90] sm:$0xff]
          %v4406 = vld [vmem:[#allocation2 + $0x98] sm:$0xff]
          %v4407 = vld [vmem:[#allocation2 + $0xa0] sm:$0xff]
          %v4408 = vld [vmem:[#allocation2 + $0xa8] sm:$0xff]
          %v4409 = vld [vmem:[#allocation2 + $0xb0] sm:$0xff]
          %v4410 = vld [vmem:[#allocation2 + $0xb8] sm:$0xff]
          %v4411 = vld [vmem:[#allocation2 + $0xc0] sm:$0xff]
          %v4412 = vld [vmem:[#allocation2 + $0xc8] sm:$0xff]
          %v4413 = vld [vmem:[#allocation2 + $0xd0] sm:$0xff]
          %v4414 = vld [vmem:[#allocation2 + $0xd8] sm:$0xff]
          %v4415 = vld [vmem:[#allocation2 + $0xe0] sm:$0xff]
          %v4416 = vld [vmem:[#allocation2 + $0xe8] sm:$0xff]
          %v4417 = vld [vmem:[#allocation2 + $0xf0] sm:$0xff]
          %v4418 = vld [vmem:[#allocation2 + $0xf8] sm:$0xff]
          %v4419 = vld [vmem:[#allocation2 + $0x100] sm:$0xff]
          %v4420 = vld [vmem:[#allocation2 + $0x108] sm:$0xff]
          %v4421 = vld [vmem:[#allocation2 + $0x110] sm:$0xff]
          %v4422 = vld [vmem:[#allocation2 + $0x118] sm:$0xff]
          %v4423 = vld [vmem:[#allocation2 + $0x120] sm:$0xff]
          %v4424 = vld [vmem:[#allocation2 + $0x128] sm:$0xff]
          %v4425 = vld [vmem:[#allocation2 + $0x130] sm:$0xff]
          %v4426 = vld [vmem:[#allocation2 + $0x138] sm:$0xff]
          %v4427 = vld [vmem:[#allocation2 + $0x140] sm:$0xff]
          %v4428 = vld [vmem:[#allocation2 + $0x148] sm:$0xff]
          %v4429 = vld [vmem:[#allocation2 + $0x150] sm:$0xff]
          %v4430 = vld [vmem:[#allocation2 + $0x158] sm:$0xff]
          %v4431 = vld [vmem:[#allocation2 + $0x160] sm:$0xff]
          %v4432 = vld [vmem:[#allocation2 + $0x168] sm:$0xff]
          %v4433 = vld [vmem:[#allocation2 + $0x170] sm:$0xff]
          %v4434 = vld [vmem:[#allocation2 + $0x178] sm:$0xff]
          %v4435 = vld [vmem:[#allocation2 + $0x180] sm:$0xff]
          %v4436 = vld [vmem:[#allocation2 + $0x188] sm:$0xff]
          %v4437 = vld [vmem:[#allocation2 + $0x190] sm:$0xff]
          %v4438 = vld [vmem:[#allocation2 + $0x198] sm:$0xff]
          %v4439 = vld [vmem:[#allocation2 + $0x1a0] sm:$0xff]
          %v4440 = vld [vmem:[#allocation2 + $0x1a8] sm:$0xff]
          %v4441 = vld [vmem:[#allocation2 + $0x1b0] sm:$0xff]
          %v4442 = vld [vmem:[#allocation2 + $0x1b8] sm:$0xff]
          %v4443 = vld [vmem:[#allocation2 + $0x1c0] sm:$0xff]
          %v4444 = vld [vmem:[#allocation2 + $0x1c8] sm:$0xff]
          %v4445 = vld [vmem:[#allocation2 + $0x1d0] sm:$0xff]
          %v4446 = vld [vmem:[#allocation2 + $0x1d8] sm:$0xff]
          %v4447 = vld [vmem:[#allocation2 + $0x1e0] sm:$0xff]
          %v4448 = vld [vmem:[#allocation2 + $0x1e8] sm:$0xff]
          %v4449 = vld [vmem:[#allocation2 + $0x1f0] sm:$0xff]
          %v4450 = vld [vmem:[#allocation2 + $0x1f8] sm:$0xff]
          %v4451 = vld [vmem:[#allocation2 + $0x200] sm:$0xff]
          %v4452 = vld [vmem:[#allocation2 + $0x208] sm:$0xff]
          %v4453 = vld [vmem:[#allocation2 + $0x210] sm:$0xff]
          %v4454 = vld [vmem:[#allocation2 + $0x218] sm:$0xff]
          %v4455 = vld [vmem:[#allocation2 + $0x220] sm:$0xff]
          %v4456 = vld [vmem:[#allocation2 + $0x228] sm:$0xff]
          %v4457 = vld [vmem:[#allocation2 + $0x230] sm:$0xff]
          %v4458 = vld [vmem:[#allocation2 + $0x238] sm:$0xff]
          %v4459 = vld [vmem:[#allocation2 + $0x240] sm:$0xff]
          %v4460 = vld [vmem:[#allocation2 + $0x248] sm:$0xff]
          %v4461 = vld [vmem:[#allocation2 + $0x250] sm:$0xff]
          %v4462 = vld [vmem:[#allocation2 + $0x258] sm:$0xff]
          %v4463 = vld [vmem:[#allocation2 + $0x260] sm:$0xff]
          %v4464 = vld [vmem:[#allocation2 + $0x268] sm:$0xff]
          %v4465 = vld [vmem:[#allocation2 + $0x270] sm:$0xff]
          %v4466 = vld [vmem:[#allocation2 + $0x278] sm:$0xff]
          %v4467 = vld [vmem:[#allocation2 + $0x280] sm:$0xff]
          %v4468 = vld [vmem:[#allocation2 + $0x288] sm:$0xff]
          %v4469 = vld [vmem:[#allocation2 + $0x290] sm:$0xff]
          %v4470 = vld [vmem:[#allocation2 + $0x298] sm:$0xff]
          %v4471 = vld [vmem:[#allocation2 + $0x2a0] sm:$0xff]
          %v4472 = vld [vmem:[#allocation2 + $0x2a8] sm:$0xff]
          %v4473 = vld [vmem:[#allocation2 + $0x2b0] sm:$0xff]
          %v4474 = vld [vmem:[#allocation2 + $0x2b8] sm:$0xff]
          %v4475 = vld [vmem:[#allocation2 + $0x2c0] sm:$0xff]
          %v4476 = vld [vmem:[#allocation2 + $0x2c8] sm:$0xff]
          %v4477 = vld [vmem:[#allocation2 + $0x2d0] sm:$0xff]
          %v4478 = vld [vmem:[#allocation2 + $0x2d8] sm:$0xff]
          %v4479 = vld [vmem:[#allocation2 + $0x2e0] sm:$0xff]
          %v4480 = vld [vmem:[#allocation2 + $0x2e8] sm:$0xff]
          %v4481 = vld [vmem:[#allocation2 + $0x2f0] sm:$0xff]
          %v4482 = vld [vmem:[#allocation2 + $0x2f8] sm:$0xff]
          %v4483 = vld [vmem:[#allocation2 + $0x300] sm:$0xff]
          %v4484 = vld [vmem:[#allocation2 + $0x308] sm:$0xff]
          %v4485 = vld [vmem:[#allocation2 + $0x310] sm:$0xff]
          %v4486 = vld [vmem:[#allocation2 + $0x318] sm:$0xff]
          %v4487 = vld [vmem:[#allocation2 + $0x320] sm:$0xff]
          %v4488 = vld [vmem:[#allocation2 + $0x328] sm:$0xff]
          %v4489 = vld [vmem:[#allocation2 + $0x330] sm:$0xff]
          %v4490 = vld [vmem:[#allocation2 + $0x338] sm:$0xff]
          %v4491 = vld [vmem:[#allocation2 + $0x340] sm:$0xff]
          %v4492 = vld [vmem:[#allocation2 + $0x348] sm:$0xff]
          %v4493 = vld [vmem:[#allocation2 + $0x350] sm:$0xff]
          %v4494 = vld [vmem:[#allocation2 + $0x358] sm:$0xff]
          %v4495 = vld [vmem:[#allocation2 + $0x360] sm:$0xff]
          %v4496 = vld [vmem:[#allocation2 + $0x368] sm:$0xff]
          %v4497 = vld [vmem:[#allocation2 + $0x370] sm:$0xff]
          %v4498 = vld [vmem:[#allocation2 + $0x378] sm:$0xff]
          %v4499 = vld [vmem:[#allocation2 + $0x380] sm:$0xff]
          %v4500 = vld [vmem:[#allocation2 + $0x388] sm:$0xff]
          %v4501 = vld [vmem:[#allocation2 + $0x390] sm:$0xff]
          %v4502 = vld [vmem:[#allocation2 + $0x398] sm:$0xff]
          %v4503 = vld [vmem:[#allocation2 + $0x3a0] sm:$0xff]
          %v4504 = vld [vmem:[#allocation2 + $0x3a8] sm:$0xff]
          %v4505 = vld [vmem:[#allocation2 + $0x3b0] sm:$0xff]
          %v4506 = vld [vmem:[#allocation2 + $0x3b8] sm:$0xff]
          %v4507 = vld [vmem:[#allocation2 + $0x3c0] sm:$0xff]
          %v4508 = vld [vmem:[#allocation2 + $0x3c8] sm:$0xff]
          %v4509 = vld [vmem:[#allocation2 + $0x3d0] sm:$0xff]
          %v4510 = vld [vmem:[#allocation2 + $0x3d8] sm:$0xff]
          %v4511 = vld [vmem:[#allocation2 + $0x3e0] sm:$0xff]
          %v4512 = vld [vmem:[#allocation2 + $0x3e8] sm:$0xff]
          %v4513 = vld [vmem:[#allocation2 + $0x3f0] sm:$0xff]
          %v4514 = vld [vmem:[#allocation2 + $0x3f8] sm:$0xff]
          %v4515 = vsel %vm4254, %v4387, 0.0
          %v4516 = vsel %vm4254, %v4388, 0.0
          %v4517 = vadd.f32 %v4515, %v4516
          %v4518 = vsel %vm4254, %v4389, 0.0
          %v4519 = vadd.f32 %v4517, %v4518
          %v4520 = vsel %vm4254, %v4390, 0.0
          %v4521 = vadd.f32 %v4519, %v4520
          %v4522 = vsel %vm4254, %v4391, 0.0
          %v4523 = vadd.f32 %v4521, %v4522
          %v4524 = vsel %vm4254, %v4392, 0.0
          %v4525 = vadd.f32 %v4523, %v4524
          %v4526 = vsel %vm4254, %v4393, 0.0
          %v4527 = vadd.f32 %v4525, %v4526
          %v4528 = vsel %vm4254, %v4394, 0.0
          %v4529 = vadd.f32 %v4527, %v4528
          %v4530 = vsel %vm4254, %v4395, 0.0
          %v4531 = vadd.f32 %v4529, %v4530
          %v4532 = vsel %vm4254, %v4396, 0.0
          %v4533 = vadd.f32 %v4531, %v4532
          %v4534 = vsel %vm4254, %v4397, 0.0
          %v4535 = vadd.f32 %v4533, %v4534
          %v4536 = vsel %vm4254, %v4398, 0.0
          %v4537 = vadd.f32 %v4535, %v4536
          %v4538 = vsel %vm4254, %v4399, 0.0
          %v4539 = vadd.f32 %v4537, %v4538
          %v4540 = vsel %vm4254, %v4400, 0.0
          %v4541 = vadd.f32 %v4539, %v4540
          %v4542 = vsel %vm4254, %v4401, 0.0
          %v4543 = vadd.f32 %v4541, %v4542
          %v4544 = vsel %vm4254, %v4402, 0.0
          %v4545 = vadd.f32 %v4543, %v4544
          %v4546 = vsel %vm4254, %v4403, 0.0
          %v4547 = vadd.f32 %v4545, %v4546
          %v4548 = vsel %vm4254, %v4404, 0.0
          %v4549 = vadd.f32 %v4547, %v4548
          %v4550 = vsel %vm4254, %v4405, 0.0
          %v4551 = vadd.f32 %v4549, %v4550
          %v4552 = vsel %vm4254, %v4406, 0.0
          %v4553 = vadd.f32 %v4551, %v4552
          %v4554 = vsel %vm4254, %v4407, 0.0
          %v4555 = vadd.f32 %v4553, %v4554
          %v4556 = vsel %vm4254, %v4408, 0.0
          %v4557 = vadd.f32 %v4555, %v4556
          %v4558 = vsel %vm4254, %v4409, 0.0
          %v4559 = vadd.f32 %v4557, %v4558
          %v4560 = vsel %vm4254, %v4410, 0.0
          %v4561 = vadd.f32 %v4559, %v4560
          %v4562 = vsel %vm4254, %v4411, 0.0
          %v4563 = vadd.f32 %v4561, %v4562
          %v4564 = vsel %vm4254, %v4412, 0.0
          %v4565 = vadd.f32 %v4563, %v4564
          %v4566 = vsel %vm4254, %v4413, 0.0
          %v4567 = vadd.f32 %v4565, %v4566
          %v4568 = vsel %vm4254, %v4414, 0.0
          %v4569 = vadd.f32 %v4567, %v4568
          %v4570 = vsel %vm4254, %v4415, 0.0
          %v4571 = vadd.f32 %v4569, %v4570
          %v4572 = vsel %vm4254, %v4416, 0.0
          %v4573 = vadd.f32 %v4571, %v4572
          %v4574 = vsel %vm4254, %v4417, 0.0
          %v4575 = vadd.f32 %v4573, %v4574
          %v4576 = vsel %vm4254, %v4418, 0.0
          %v4577 = vadd.f32 %v4575, %v4576
          %v4578 = vsel %vm4254, %v4419, 0.0
          %v4579 = vadd.f32 %v4577, %v4578
          %v4580 = vsel %vm4254, %v4420, 0.0
          %v4581 = vadd.f32 %v4579, %v4580
          %v4582 = vsel %vm4254, %v4421, 0.0
          %v4583 = vadd.f32 %v4581, %v4582
          %v4584 = vsel %vm4254, %v4422, 0.0
          %v4585 = vadd.f32 %v4583, %v4584
          %v4586 = vsel %vm4254, %v4423, 0.0
          %v4587 = vadd.f32 %v4585, %v4586
          %v4588 = vsel %vm4254, %v4424, 0.0
          %v4589 = vadd.f32 %v4587, %v4588
          %v4590 = vsel %vm4254, %v4425, 0.0
          %v4591 = vadd.f32 %v4589, %v4590
          %v4592 = vsel %vm4254, %v4426, 0.0
          %v4593 = vadd.f32 %v4591, %v4592
          %v4594 = vsel %vm4254, %v4427, 0.0
          %v4595 = vadd.f32 %v4593, %v4594
          %v4596 = vsel %vm4254, %v4428, 0.0
          %v4597 = vadd.f32 %v4595, %v4596
          %v4598 = vsel %vm4254, %v4429, 0.0
          %v4599 = vadd.f32 %v4597, %v4598
          %v4600 = vsel %vm4254, %v4430, 0.0
          %v4601 = vadd.f32 %v4599, %v4600
          %v4602 = vsel %vm4254, %v4431, 0.0
          %v4603 = vadd.f32 %v4601, %v4602
          %v4604 = vsel %vm4254, %v4432, 0.0
          %v4605 = vadd.f32 %v4603, %v4604
          %v4606 = vsel %vm4254, %v4433, 0.0
          %v4607 = vadd.f32 %v4605, %v4606
          %v4608 = vsel %vm4254, %v4434, 0.0
          %v4609 = vadd.f32 %v4607, %v4608
          %v4610 = vsel %vm4254, %v4435, 0.0
          %v4611 = vadd.f32 %v4609, %v4610
          %v4612 = vsel %vm4254, %v4436, 0.0
          %v4613 = vadd.f32 %v4611, %v4612
          %v4614 = vsel %vm4254, %v4437, 0.0
          %v4615 = vadd.f32 %v4613, %v4614
          %v4616 = vsel %vm4254, %v4438, 0.0
          %v4617 = vadd.f32 %v4615, %v4616
          %v4618 = vsel %vm4254, %v4439, 0.0
          %v4619 = vadd.f32 %v4617, %v4618
          %v4620 = vsel %vm4254, %v4440, 0.0
          %v4621 = vadd.f32 %v4619, %v4620
          %v4622 = vsel %vm4254, %v4441, 0.0
          %v4623 = vadd.f32 %v4621, %v4622
          %v4624 = vsel %vm4254, %v4442, 0.0
          %v4625 = vadd.f32 %v4623, %v4624
          %v4626 = vsel %vm4254, %v4443, 0.0
          %v4627 = vadd.f32 %v4625, %v4626
          %v4628 = vsel %vm4254, %v4444, 0.0
          %v4629 = vadd.f32 %v4627, %v4628
          %v4630 = vsel %vm4254, %v4445, 0.0
          %v4631 = vadd.f32 %v4629, %v4630
          %v4632 = vsel %vm4254, %v4446, 0.0
          %v4633 = vadd.f32 %v4631, %v4632
          %v4634 = vsel %vm4254, %v4447, 0.0
          %v4635 = vadd.f32 %v4633, %v4634
          %v4636 = vsel %vm4254, %v4448, 0.0
          %v4637 = vadd.f32 %v4635, %v4636
          %v4638 = vsel %vm4254, %v4449, 0.0
          %v4639 = vadd.f32 %v4637, %v4638
          %v4640 = vsel %vm4254, %v4450, 0.0
          %v4641 = vadd.f32 %v4639, %v4640
          %v4642 = vsel %vm4254, %v4451, 0.0
          %v4643 = vadd.f32 %v4641, %v4642
          %v4644 = vsel %vm4254, %v4452, 0.0
          %v4645 = vadd.f32 %v4643, %v4644
          %v4646 = vsel %vm4254, %v4453, 0.0
          %v4647 = vadd.f32 %v4645, %v4646
          %v4648 = vsel %vm4254, %v4454, 0.0
          %v4649 = vadd.f32 %v4647, %v4648
          %v4650 = vsel %vm4254, %v4455, 0.0
          %v4651 = vadd.f32 %v4649, %v4650
          %v4652 = vsel %vm4254, %v4456, 0.0
          %v4653 = vadd.f32 %v4651, %v4652
          %v4654 = vsel %vm4254, %v4457, 0.0
          %v4655 = vadd.f32 %v4653, %v4654
          %v4656 = vsel %vm4254, %v4458, 0.0
          %v4657 = vadd.f32 %v4655, %v4656
          %v4658 = vsel %vm4254, %v4459, 0.0
          %v4659 = vadd.f32 %v4657, %v4658
          %v4660 = vsel %vm4254, %v4460, 0.0
          %v4661 = vadd.f32 %v4659, %v4660
          %v4662 = vsel %vm4254, %v4461, 0.0
          %v4663 = vadd.f32 %v4661, %v4662
          %v4664 = vsel %vm4254, %v4462, 0.0
          %v4665 = vadd.f32 %v4663, %v4664
          %v4666 = vsel %vm4254, %v4463, 0.0
          %v4667 = vadd.f32 %v4665, %v4666
          %v4668 = vsel %vm4254, %v4464, 0.0
          %v4669 = vadd.f32 %v4667, %v4668
          %v4670 = vsel %vm4254, %v4465, 0.0
          %v4671 = vadd.f32 %v4669, %v4670
          %v4672 = vsel %vm4254, %v4466, 0.0
          %v4673 = vadd.f32 %v4671, %v4672
          %v4674 = vsel %vm4254, %v4467, 0.0
          %v4675 = vadd.f32 %v4673, %v4674
          %v4676 = vsel %vm4254, %v4468, 0.0
          %v4677 = vadd.f32 %v4675, %v4676
          %v4678 = vsel %vm4254, %v4469, 0.0
          %v4679 = vadd.f32 %v4677, %v4678
          %v4680 = vsel %vm4254, %v4470, 0.0
          %v4681 = vadd.f32 %v4679, %v4680
          %v4682 = vsel %vm4254, %v4471, 0.0
          %v4683 = vadd.f32 %v4681, %v4682
          %v4684 = vsel %vm4254, %v4472, 0.0
          %v4685 = vadd.f32 %v4683, %v4684
          %v4686 = vsel %vm4254, %v4473, 0.0
          %v4687 = vadd.f32 %v4685, %v4686
          %v4688 = vsel %vm4254, %v4474, 0.0
          %v4689 = vadd.f32 %v4687, %v4688
          %v4690 = vsel %vm4254, %v4475, 0.0
          %v4691 = vadd.f32 %v4689, %v4690
          %v4692 = vsel %vm4254, %v4476, 0.0
          %v4693 = vadd.f32 %v4691, %v4692
          %v4694 = vsel %vm4254, %v4477, 0.0
          %v4695 = vadd.f32 %v4693, %v4694
          %v4696 = vsel %vm4254, %v4478, 0.0
          %v4697 = vadd.f32 %v4695, %v4696
          %v4698 = vsel %vm4254, %v4479, 0.0
          %v4699 = vadd.f32 %v4697, %v4698
          %v4700 = vsel %vm4254, %v4480, 0.0
          %v4701 = vadd.f32 %v4699, %v4700
          %v4702 = vsel %vm4254, %v4481, 0.0
          %v4703 = vadd.f32 %v4701, %v4702
          %v4704 = vsel %vm4254, %v4482, 0.0
          %v4705 = vadd.f32 %v4703, %v4704
          %v4706 = vsel %vm4254, %v4483, 0.0
          %v4707 = vadd.f32 %v4705, %v4706
          %v4708 = vsel %vm4254, %v4484, 0.0
          %v4709 = vadd.f32 %v4707, %v4708
          %v4710 = vsel %vm4254, %v4485, 0.0
          %v4711 = vadd.f32 %v4709, %v4710
          %v4712 = vsel %vm4254, %v4486, 0.0
          %v4713 = vadd.f32 %v4711, %v4712
          %v4714 = vsel %vm4254, %v4487, 0.0
          %v4715 = vadd.f32 %v4713, %v4714
          %v4716 = vsel %vm4254, %v4488, 0.0
          %v4717 = vadd.f32 %v4715, %v4716
          %v4718 = vsel %vm4254, %v4489, 0.0
          %v4719 = vadd.f32 %v4717, %v4718
          %v4720 = vsel %vm4254, %v4490, 0.0
          %v4721 = vadd.f32 %v4719, %v4720
          %v4722 = vsel %vm4254, %v4491, 0.0
          %v4723 = vadd.f32 %v4721, %v4722
          %v4724 = vsel %vm4254, %v4492, 0.0
          %v4725 = vadd.f32 %v4723, %v4724
          %v4726 = vsel %vm4254, %v4493, 0.0
          %v4727 = vadd.f32 %v4725, %v4726
          %v4728 = vsel %vm4254, %v4494, 0.0
          %v4729 = vadd.f32 %v4727, %v4728
          %v4730 = vsel %vm4254, %v4495, 0.0
          %v4731 = vadd.f32 %v4729, %v4730
          %v4732 = vsel %vm4254, %v4496, 0.0
          %v4733 = vadd.f32 %v4731, %v4732
          %v4734 = vsel %vm4254, %v4497, 0.0
          %v4735 = vadd.f32 %v4733, %v4734
          %v4736 = vsel %vm4254, %v4498, 0.0
          %v4737 = vadd.f32 %v4735, %v4736
          %v4738 = vsel %vm4254, %v4499, 0.0
          %v4739 = vadd.f32 %v4737, %v4738
          %v4740 = vsel %vm4254, %v4500, 0.0
          %v4741 = vadd.f32 %v4739, %v4740
          %v4742 = vsel %vm4254, %v4501, 0.0
          %v4743 = vadd.f32 %v4741, %v4742
          %v4744 = vsel %vm4254, %v4502, 0.0
          %v4745 = vadd.f32 %v4743, %v4744
          %v4746 = vsel %vm4254, %v4503, 0.0
          %v4747 = vadd.f32 %v4745, %v4746
          %v4748 = vsel %vm4254, %v4504, 0.0
          %v4749 = vadd.f32 %v4747, %v4748
          %v4750 = vsel %vm4254, %v4505, 0.0
          %v4751 = vadd.f32 %v4749, %v4750
          %v4752 = vsel %vm4254, %v4506, 0.0
          %v4753 = vadd.f32 %v4751, %v4752
          %v4754 = vsel %vm4254, %v4507, 0.0
          %v4755 = vadd.f32 %v4753, %v4754
          %v4756 = vsel %vm4254, %v4508, 0.0
          %v4757 = vadd.f32 %v4755, %v4756
          %v4758 = vsel %vm4254, %v4509, 0.0
          %v4759 = vadd.f32 %v4757, %v4758
          %v4760 = vsel %vm4254, %v4510, 0.0
          %v4761 = vadd.f32 %v4759, %v4760
          %v4762 = vsel %vm4254, %v4511, 0.0
          %v4763 = vadd.f32 %v4761, %v4762
          %v4764 = vsel %vm4254, %v4512, 0.0
          %v4765 = vadd.f32 %v4763, %v4764
          %v4766 = vsel %vm4254, %v4513, 0.0
          %v4767 = vadd.f32 %v4765, %v4766
          %v4768 = vsel %vm4254, %v4514, 0.0
          %v4769 = vadd.f32 %v4767, %v4768
          %4770 = vadd.xlane.f32.xlu0 %v4769
          %v4771 = vpop.xlane.xlu0 %4770
          %v4772 = vrot.slane %v4771, 4
          %v4773 = vadd.f32 %v4771, %v4772
          %v4774 = vrot.slane %v4773, 2
          %v4775 = vadd.f32 %v4773, %v4774
          %v4776 = vrot.slane %v4775, 1
          %v4777 = vadd.f32 %v4775, %v4776
          %s4778 = vtos %v4777
          %v4779 = vstv %s4778
          %v4780 = vadd.f32 %v4779, 0.0
          %4781 = vst [vmem:[%s229] sm:$0xff] %v4780
        $region36: #{tpu_custom_call.1} parent=27 // pred_fallthru
          _
        %s4782 = sand.u32 %s104, 1
        %s4783 = scalar_lea.sflag [#allocation4], %s4782
        %s4784 = sand.u32 %s104, 1
        %s4785 = smul.addr %s4784, 8
        %s4786 = scalar_lea.vmem [#allocation3], %s4785
        // Predicated region
        $region37: #{tpu_custom_call.1} parent=27 // pred_check
          %p4787 = pneg %p114
        $region38: #{tpu_custom_call.1} parent=27 // pred_check_branch
          %4789 = sbr.rel (%p4787) target = $region40
        $region39: #{tpu_custom_call.1} parent=27 // pred_region
          %s4791 = ssub.s32 128, 128
          %4792 = vsyncadd %s4783, %s4791
          %s4793 = smul.addr %s20, 128
          %s4794 = scalar_lea.hbm %s2, %s4793
          %s4796 = sshll.u32 %s4786, 4
          %s4797 = int_to_ptr.vmem [resolvable:$true] %s4796
          %4799 = dma.vmem_to_hbm [thread:$0]  %s4797, 128, %s4794, %s4783
        $region40: #{tpu_custom_call.1} parent=27 // pred_fallthru
          _
      $region28: #{tpu_custom_call.1} parent=5 // pred_fallthru
        _
      %p4800 = scmp.le.s32.totalorder 2, %s11
      // Predicated region
      $region41: #{tpu_custom_call.1} parent=5 // pred_check
        %p4801 = pneg %p4800
      $region42: #{tpu_custom_call.1} parent=5 // pred_check_branch
        %4803 = sbr.rel (%p4801) target = $region44
      $region43: #{tpu_custom_call.1} parent=5 // pred_region
        %s4804 = ssub.s32 %s11, 2
        // Predicated region
        $region45: #{tpu_custom_call.1} parent=43 // pred_check
          %p4805 = pneg %p120
        $region46: #{tpu_custom_call.1} parent=43 // pred_check_branch
          %4807 = sbr.rel (%p4805) target = $region48
        $region47: #{tpu_custom_call.1} parent=43 // pred_region
          %s4808 = sand.u32 %s105, 1
          %s4809 = scalar_lea.sflag [#allocation4], %s4808
          %s4810 = sand.u32 %s105, 1
          %s4811 = smul.addr %s4810, 8
          %s4812 = scalar_lea.vmem [#allocation3], %s4811
          %4813 = dma.done %s4809, 128
        $region48: #{tpu_custom_call.1} parent=43 // pred_fallthru
          _
      $region44: #{tpu_custom_call.1} parent=5 // pred_fallthru
        _
    $region6: #{tpu_custom_call.1} parent=1 // loop_footer
      %s15 = sadd.s32 1, %s11
    $region7: #{tpu_custom_call.1} parent=1 // loop_footer_branch
      %10 = sbr.rel target = $region3
    $region8: #{tpu_custom_call.1} parent=1 // loop_exit
      _
    %4814 = vsyncpa [#allocation4], 1
    %s4815 = scalar_lea.sflag [#allocation4], 1
    %4816 = vsyncpa %s4815, 1

</llo_original>
